<compile_context>
chip_gen: v5e
topology: v5e:2x2
jax: 0.10.0
libtpu: 0.0.40
codegen_flags: <defaults>
</compile_context>

<pallas_src>
import functools

import jax
import jax.numpy as jnp
from jax.experimental import pallas as pl
from jax.experimental.pallas import tpu as pltpu

BN_EPS = 1e-5
VMEM_LIMIT = 64 * 1024 * 1024


# ----------------------------------------------------------------------------
# small helpers
# ----------------------------------------------------------------------------
def _round_up(x, m):
    return ((x + m - 1) // m) * m


def _pick_tm(m):
    """Row-tile size: as big as possible while exposing >=2 grid steps."""
    for tm in (512, 256, 128, 64, 32, 16, 8):
        if m >= 2 * tm and m % tm == 0:
            return tm
    return 8


# ----------------------------------------------------------------------------
# Pallas kernels
# ----------------------------------------------------------------------------
def _matmul_bn_act_kernel(x_ref, w_ref, s_ref, b_ref, o_ref, *, relu):
    """out = (x @ w) * scale + bias ; optional ReLU.  bf16 MXU, f32 accum."""
    acc = jnp.dot(x_ref[...], w_ref[...], preferred_element_type=jnp.float32)
    y = acc * s_ref[...] + b_ref[...]
    if relu:
        y = jnp.maximum(y, 0.0)
    o_ref[...] = y.astype(o_ref.dtype)


def _maxpool_kernel(x_ref, o_ref, *, ho, wc):
    """MaxPool 3x3 window on a zero spatially-padded (post-ReLU) image.

    x_ref: (1, Hc+2, Wc+2, C) bf16.  Writes (1, ho, wc, C): the H direction is
    already stride-2 subsampled (major-dim reshape trick); the W stride-2
    subsample is done cheaply outside on the bf16 result.
    """
    v = x_ref[0]                                    # (Hc+2, Wc+2, C)
    c = v.shape[-1]
    wp = v.shape[1]
    top = v[0:2 * ho]                               # rows 0 .. 2*ho-1
    bot = v[2:2 * ho + 2]                           # rows 2 .. 2*ho+1
    a = top.reshape(ho, 2, wp, c)                   # a[:,0]=P[2y], a[:,1]=P[2y+1]
    b = bot.reshape(ho, 2, wp, c)                   # b[:,0]=P[2y+2]
    vert = jnp.maximum(jnp.maximum(a[:, 0], a[:, 1]), b[:, 0])   # (ho, Wc+2, C)
    h = jnp.maximum(jnp.maximum(vert[:, 0:wc, :], vert[:, 1:wc + 1, :]),
                    vert[:, 2:wc + 2, :])           # (ho, wc, C)
    o_ref[0] = h.astype(o_ref.dtype)


def _bottleneck_kernel(x_ref, w1_ref, s1_ref, b1_ref,
                       w2_ref, s2_ref, b2_ref,
                       w3_ref, s3_ref, b3_ref,
                       *rest, H, W, has_ds):
    """Fused ResNet bottleneck for one image (grid step).

    x_ref : (1, H*W, Cin_p) bf16 (channel lane-dense).
    w1    : (Cin_p, 64)  bf16      s1/b1: (1, 64)  f32
    w2    : (9*64, 64)   bf16      s2/b2: (1, 64)  f32   (taps dy-major, dx inner)
    w3    : (64, 256)    bf16      s3/b3: (1, 256) f32
    wds   : (Cin_p, 256) bf16      sds/bds: (1, 256) f32 (block 0 only)

    The 3x3 conv is ONE matmul: an in-VMEM im2col at the true 64-channel mid
    width, (hw, 576) @ (576, 64).  Vertical out-of-range taps read aligned
    zero row-blocks; horizontal out-of-range taps are masked on the bf16 lhs
    slabs before the concat (dx folded into K -> no per-tap matmuls).
    """
    if has_ds:
        wds_ref, sds_ref, bds_ref, o_ref = rest
    else:
        (o_ref,) = rest

    hw = H * W
    x = x_ref[0]                                              # (hw, cin_p) bf16

    # --- 1x1 conv + BN + ReLU (true 64-wide output) ---------------------------
    t1 = jnp.dot(x, w1_ref[...], preferred_element_type=jnp.float32)
    t1 = jnp.maximum(t1 * s1_ref[...] + b1_ref[...], 0.0)
    t1 = t1.astype(jnp.bfloat16)                              # single bf16 cast

    # --- 3x3 conv + BN + ReLU: merged-K im2col matmul -------------------------
    cmid = t1.shape[1]                                        # 64 (true width)
    zpad = jnp.zeros((2 * W, cmid), jnp.bfloat16)
    t1p = jnp.concatenate([zpad, t1, zpad], axis=0)           # (hw + 4W, 64) bf16
    col = jax.lax.broadcasted_iota(jnp.int32, (hw, 1), 0) % W
    not_first = col != 0                                      # x-1 tap valid
    not_last = col != (W - 1)                                 # x+1 tap valid
    slabs = []
    for dy in range(3):
        base = (dy + 1) * W                                   # aligned (W % 8 == 0)
        left = t1p[base - 1:base - 1 + hw]                    # tap (dy, dx=0)
        mid = t1p[base:base + hw]                             # tap (dy, dx=1)
        right = t1p[base + 1:base + 1 + hw]                   # tap (dy, dx=2)
        left = jnp.where(not_first, left, jnp.zeros_like(left))
        right = jnp.where(not_last, right, jnp.zeros_like(right))
        slabs += [left, mid, right]
    lhs = jnp.concatenate(slabs, axis=1)                      # (hw, 576) bf16
    t2 = jnp.dot(lhs, w2_ref[...], preferred_element_type=jnp.float32)
    t2 = jnp.maximum(t2 * s2_ref[...] + b2_ref[...], 0.0)
    t2 = t2.astype(jnp.bfloat16)                              # (hw, 64)

    # --- 1x1 conv + BN ---------------------------------------------------------
    t3 = (jnp.dot(t2, w3_ref[...], preferred_element_type=jnp.float32)
          * s3_ref[...] + b3_ref[...])                        # (hw, 256) f32

    # --- residual (downsample matmul deferred: minimal live range) ------------
    if has_ds:
        idn = (jnp.dot(x, wds_ref[...], preferred_element_type=jnp.float32)
               * sds_ref[...] + bds_ref[...])
    else:
        idn = x.astype(jnp.float32)
    o_ref[0] = jnp.maximum(t3 + idn, 0.0).astype(o_ref.dtype)


# ----------------------------------------------------------------------------
# pallas_call wrappers
# ----------------------------------------------------------------------------
def _matmul_bn_act(x, w, s, b, *, relu, out_dtype):
    """x:(M,K) bf16, w:(K,Cp) bf16, s/b:(1,Cp) f32 -> (M,Cp) out_dtype."""
    m, k = x.shape
    cout = w.shape[1]
    tm = _pick_tm(m)
    mp = _round_up(m, tm)
    if mp != m:
        x = jnp.pad(x, ((0, mp - m), (0, 0)))
    out = pl.pallas_call(
        functools.partial(_matmul_bn_act_kernel, relu=relu),
        out_shape=jax.ShapeDtypeStruct((mp, cout), out_dtype),
        grid=(mp // tm,),
        in_specs=[
            pl.BlockSpec((tm, k), lambda i: (i, 0)),
            pl.BlockSpec((k, cout), lambda i: (0, 0)),
            pl.BlockSpec((1, cout), lambda i: (0, 0)),
            pl.BlockSpec((1, cout), lambda i: (0, 0)),
        ],
        out_specs=pl.BlockSpec((tm, cout), lambda i: (i, 0)),
        compiler_params=pltpu.CompilerParams(
            dimension_semantics=("parallel",),
            vmem_limit_bytes=VMEM_LIMIT),
    )(x, w, s, b)
    return out if mp == m else out[:m]


def maxpool_3x3_s2_p1(x_nhwc):
    """MaxPool2d(kernel=3, stride=2, padding=1) on bf16 post-ReLU input."""
    n, hc, wc, c = x_nhwc.shape
    ho, wo = hc // 2, wc // 2
    # Post-ReLU values are >= 0, so zero padding is exact (no -inf needed).
    xp = jnp.pad(x_nhwc, ((0, 0), (1, 1), (1, 1), (0, 0)))   # (N, Hc+2, Wc+2, C)
    full = pl.pallas_call(
        functools.partial(_maxpool_kernel, ho=ho, wc=wc),
        out_shape=jax.ShapeDtypeStruct((n, ho, wc, c), jnp.bfloat16),
        grid=(n,),
        in_specs=[pl.BlockSpec((1, hc + 2, wc + 2, c),
                               lambda i: (i, 0, 0, 0))],
        out_specs=pl.BlockSpec((1, ho, wc, c), lambda i: (i, 0, 0, 0)),
        compiler_params=pltpu.CompilerParams(
            dimension_semantics=("parallel",),
            vmem_limit_bytes=VMEM_LIMIT),
    )(xp)
    # TODO(synk): move this W stride-2 subsample in-kernel to halve writeback.
    return full[:, :, ::2, :]                                 # (N, ho, wo, C)


def _bottleneck(x, blk, *, H, W):
    """x: (N, H*W, Cin_p) bf16 -> (N, H*W, 256) bf16, one fused pallas_call."""
    n, hw, cin_p = x.shape
    cout = blk["w3"].shape[-1]
    has_ds = "wds" in blk

    inputs = [x,
              blk["w1"], blk["s1"], blk["b1"],
              blk["w2"], blk["s2"], blk["b2"],
              blk["w3"], blk["s3"], blk["b3"]]
    in_specs = [
        pl.BlockSpec((1, hw, cin_p), lambda i: (i, 0, 0)),
        pl.BlockSpec(blk["w1"].shape, lambda i: (0, 0)),
        pl.BlockSpec(blk["s1"].shape, lambda i: (0, 0)),
        pl.BlockSpec(blk["b1"].shape, lambda i: (0, 0)),
        pl.BlockSpec(blk["w2"].shape, lambda i: (0, 0)),
        pl.BlockSpec(blk["s2"].shape, lambda i: (0, 0)),
        pl.BlockSpec(blk["b2"].shape, lambda i: (0, 0)),
        pl.BlockSpec(blk["w3"].shape, lambda i: (0, 0)),
        pl.BlockSpec(blk["s3"].shape, lambda i: (0, 0)),
        pl.BlockSpec(blk["b3"].shape, lambda i: (0, 0)),
    ]
    if has_ds:
        inputs += [blk["wds"], blk["sds"], blk["bds"]]
        in_specs += [
            pl.BlockSpec(blk["wds"].shape, lambda i: (0, 0)),
            pl.BlockSpec(blk["sds"].shape, lambda i: (0, 0)),
            pl.BlockSpec(blk["bds"].shape, lambda i: (0, 0)),
        ]

    return pl.pallas_call(
        functools.partial(_bottleneck_kernel, H=H, W=W, has_ds=has_ds),
        out_shape=jax.ShapeDtypeStruct((n, hw, cout), jnp.bfloat16),
        grid=(n,),
        in_specs=in_specs,
        out_specs=pl.BlockSpec((1, hw, cout), lambda i: (i, 0, 0)),
        compiler_params=pltpu.CompilerParams(
            dimension_semantics=("parallel",),
            vmem_limit_bytes=VMEM_LIMIT),
    )(*inputs)


# ----------------------------------------------------------------------------
# conv1 im2col (XLA side; bf16, K padded to 160 inside the same concat)
# ----------------------------------------------------------------------------
def _extract_patches_conv1(x_nhwc, kh, kw, stride, pad, k_total):
    n, h, w, c = x_nhwc.shape
    ho = (h + 2 * pad - kh) // stride + 1
    wo = (w + 2 * pad - kw) // stride + 1
    xp = jnp.pad(x_nhwc, ((0, 0), (pad, pad), (pad, pad), (0, 0)))
    cols = []
    for i in range(kh):
        for j in range(kw):
            cols.append(
                xp[:, i:i + stride * ho:stride, j:j + stride * wo:stride, :])
    k = kh * kw * c
    if k_total > k:
        cols.append(jnp.zeros((n, ho, wo, k_total - k), x_nhwc.dtype))
    patches = jnp.concatenate(cols, axis=-1)                  # (N, ho, wo, k_total)
    return patches.reshape(n * ho * wo, k_total), (n, ho, wo)


# ----------------------------------------------------------------------------
# ResNet-50 stem + layer1 forward (matches visible_module.forward)
# ----------------------------------------------------------------------------
def visible_module_forward(x_nchw, prep):
    # NCHW in -> NHWC internal (bf16) -> NCHW f32 out
    x = jnp.transpose(x_nchw, (0, 2, 3, 1)).astype(jnp.bfloat16)

    # conv1 7x7/2 pad3 + BN + ReLU   (K padded 147->160, cout padded 64->128)
    kp = prep["conv1"]["w"].shape[0]
    patches, (n, ho, wo) = _extract_patches_conv1(x, 7, 7, 2, 3, kp)
    c1 = _matmul_bn_act(patches, prep["conv1"]["w"], prep["conv1"]["s"],
                        prep["conv1"]["b"], relu=True, out_dtype=jnp.bfloat16)
    c1 = c1.reshape(n, ho, wo, c1.shape[-1])                  # bf16, lane-dense

    # maxpool 3x3/2 pad1 (bf16, zero-padded)
    p = maxpool_3x3_s2_p1(c1)                                 # (N, ho/2, wo/2, 128)
    h2, w2 = p.shape[1], p.shape[2]
    y = p.reshape(n, h2 * w2, p.shape[3])

    # layer1: three fused bottlenecks
    for blk in prep["layer1"]:
        y = _bottleneck(y, blk, H=h2, W=w2)

    out = y.reshape(n, h2, w2, y.shape[-1]).astype(jnp.float32)
    return jnp.transpose(out, (0, 3, 1, 2))


# ----------------------------------------------------------------------------
# one-time parameter preparation (BN folding, packing, bf16 weights)
# ----------------------------------------------------------------------------
def prepare_params(params):
    def fold_bn(bn, cout_p=None):
        gamma, beta, mean, var = bn
        scale = gamma / jnp.sqrt(var + BN_EPS)
        bias = beta - mean * scale
        c = gamma.shape[0]
        cp = c if cout_p is None else cout_p
        s = jnp.zeros((1, cp), jnp.float32).at[0, :c].set(scale)
        b = jnp.zeros((1, cp), jnp.float32).at[0, :c].set(bias)
        return s, b

    def pack_w(w_hwio, cin_p=None, cout_p=None):
        """(kh,kw,cin,cout) -> (kh*kw*cin_p, cout_p) bf16, taps row-major."""
        kh, kw, cin, cout = w_hwio.shape
        cip = cin if cin_p is None else cin_p
        cop = cout if cout_p is None else cout_p
        wz = jnp.zeros((kh * kw, cip, cop), jnp.float32)
        wz = wz.at[:, :cin, :cout].set(w_hwio.reshape(kh * kw, cin, cout))
        return wz.reshape(kh * kw * cip, cop).astype(jnp.bfloat16)

    prep = {}

    # conv1: im2col weight (K=147 padded to 160, cout 64 -> 128 lane-dense)
    w1 = params["conv1_w"]                                    # (7,7,3,64)
    k = 7 * 7 * 3
    kp = _round_up(k, 32)                                     # 160
    w1m = (jnp.zeros((kp, 128), jnp.float32)
           .at[:k, :64].set(w1.reshape(k, 64)).astype(jnp.bfloat16))
    s, b = fold_bn(params["bn1"], 128)
    prep["conv1"] = {"w": w1m, "s": s, "b": b}

    prep["layer1"] = []
    for blk in params["layer1"]:
        cin = blk["w1"].shape[2]
        cin_p = _round_up(cin, 128)
        p = {
            "w1": pack_w(blk["w1"], cin_p=cin_p),             # (cin_p, 64)
            "w2": pack_w(blk["w2"]),                          # (576, 64) true width
            "w3": pack_w(blk["w3"]),                          # (64, 256)
        }
        p["s1"], p["b1"] = fold_bn(blk["bn1"])                # (1, 64)
        p["s2"], p["b2"] = fold_bn(blk["bn2"])                # (1, 64)
        p["s3"], p["b3"] = fold_bn(blk["bn3"])                # (1, 256)
        if "w_ds" in blk:
            p["wds"] = pack_w(blk["w_ds"], cin_p=cin_p)       # (cin_p, 256)
            p["sds"], p["bds"] = fold_bn(blk["bn_ds"])        # (1, 256)
        prep["layer1"].append(p)
    return prep


# ----------------------------------------------------------------------------
# deterministic synthetic parameter init (stand-in for pretrained weights)
# ----------------------------------------------------------------------------
def _init_bn(key, c):
    k1, k2, k3, k4 = jax.random.split(key, 4)
    gamma = (1.0 + 0.1 * jax.random.normal(k1, (c,))).astype(jnp.float32)
    beta = (0.1 * jax.random.normal(k2, (c,))).astype(jnp.float32)
    mean = (0.1 * jax.random.normal(k3, (c,))).astype(jnp.float32)
    var = (0.5 + 0.1 * jnp.abs(jax.random.normal(k4, (c,)))).astype(jnp.float32)
    return (gamma, beta, mean, var)


def _init_w(key, kh, kw, cin, cout):
    return (0.05 * jax.random.normal(key, (kh, kw, cin, cout))).astype(jnp.float32)


def init_params(seed=0):
    key = jax.random.PRNGKey(seed)
    keys = iter(jax.random.split(key, 64))
    params = {
        "conv1_w": _init_w(next(keys), 7, 7, 3, 64),
        "bn1": _init_bn(next(keys), 64),
        "layer1": [],
    }
    inplanes, planes, expansion = 64, 64, 4
    for blk_idx in range(3):
        cin = inplanes if blk_idx == 0 else planes * expansion
        blk = {
            "w1": _init_w(next(keys), 1, 1, cin, planes),
            "bn1": _init_bn(next(keys), planes),
            "w2": _init_w(next(keys), 3, 3, planes, planes),
            "bn2": _init_bn(next(keys), planes),
            "w3": _init_w(next(keys), 1, 1, planes, planes * expansion),
            "bn3": _init_bn(next(keys), planes * expansion),
        }
        if blk_idx == 0:
            blk["w_ds"] = _init_w(next(keys), 1, 1, cin, planes * expansion)
            blk["bn_ds"] = _init_bn(next(keys), planes * expansion)
        params["layer1"].append(blk)
    return params


if __name__ == "__main__":
    params = init_params(seed=0)
    prep = prepare_params(params)      # hoisted: runs once, not per forward
    x = jax.random.normal(jax.random.PRNGKey(0), (2, 3, 32, 32),
                          dtype=jnp.float32)
    fwd = jax.jit(visible_module_forward)
    out = jax.block_until_ready(fwd(x, prep))
    assert out.shape == (2, 256, 8, 8), out.shape
    assert bool(jnp.all(jnp.isfinite(out)))
    print("KERNEL_OK")
</pallas_src>

<mosaic_0001>
module attributes {stable_mosaic.version = 11 : i64} {
  func.func @_matmul_bn_act_kernel(%arg0: i32, %arg1: memref<256x160xbf16, #tpu.memory_space<vmem>>, %arg2: memref<160x128xbf16, #tpu.memory_space<vmem>>, %arg3: memref<1x128xf32, #tpu.memory_space<vmem>>, %arg4: memref<1x128xf32, #tpu.memory_space<vmem>>, %arg5: memref<256x128xbf16, #tpu.memory_space<vmem>>) attributes {dimension_semantics = [#tpu.dimension_semantics<parallel>], iteration_bounds = array<i64: 2>, scalar_prefetch = 0 : i64, scratch_operands = 0 : i64, tpu.core_type = #tpu.core_type<tc>, window_params = [{transform_indices = @transform_0, window_bounds = array<i64: 256, 160>}, {pipeline_mode = #tpu.pipeline_mode<synchronous>, transform_indices = @transform_1, window_bounds = array<i64: 160, 128>}, {pipeline_mode = #tpu.pipeline_mode<synchronous>, transform_indices = @transform_2, window_bounds = array<i64: 1, 128>}, {pipeline_mode = #tpu.pipeline_mode<synchronous>, transform_indices = @transform_3, window_bounds = array<i64: 1, 128>}, {transform_indices = @transform_4, window_bounds = array<i64: 256, 128>}]} {
    %c0 = arith.constant 0 : index
    %c0_0 = arith.constant 0 : index
    %0 = vector.load %arg1[%c0, %c0_0] : memref<256x160xbf16, #tpu.memory_space<vmem>>, vector<256x160xbf16>
    %c0_1 = arith.constant 0 : index
    %c0_2 = arith.constant 0 : index
    %1 = vector.load %arg2[%c0_1, %c0_2] : memref<160x128xbf16, #tpu.memory_space<vmem>>, vector<160x128xbf16>
    %cst = arith.constant dense<0.000000e+00> : vector<256x128xf32>
    %2 = tpu.matmul %0, %1, %cst {dimension_numbers = #tpu.dot_dimension_numbers<[1], [0], [0], [1], [0, 0, 1, 1], [], []>} : vector<256x160xbf16>, vector<160x128xbf16>, vector<256x128xf32> -> vector<256x128xf32>
    %c0_3 = arith.constant 0 : index
    %c0_4 = arith.constant 0 : index
    %3 = vector.load %arg3[%c0_3, %c0_4] : memref<1x128xf32, #tpu.memory_space<vmem>>, vector<1x128xf32>
    %4 = vector.broadcast %3 : vector<1x128xf32> to vector<256x128xf32>
    %5 = arith.mulf %2, %4 : vector<256x128xf32>
    %c0_5 = arith.constant 0 : index
    %c0_6 = arith.constant 0 : index
    %6 = vector.load %arg4[%c0_5, %c0_6] : memref<1x128xf32, #tpu.memory_space<vmem>>, vector<1x128xf32>
    %7 = vector.broadcast %6 : vector<1x128xf32> to vector<256x128xf32>
    %8 = arith.addf %5, %7 : vector<256x128xf32>
    %cst_7 = arith.constant 0.000000e+00 : f32
    %9 = vector.broadcast %cst_7 : f32 to vector<256x128xf32>
    %10 = arith.maximumf %8, %9 : vector<256x128xf32>
    %11 = arith.truncf %10 : vector<256x128xf32> to vector<256x128xbf16>
    %c0_8 = arith.constant 0 : index
    %c0_9 = arith.constant 0 : index
    %12 = vector.load %arg5[%c0_8, %c0_9] : memref<256x128xbf16, #tpu.memory_space<vmem>>, vector<256x128xbf16>
    tpu.vector_store %arg5[%c0_8, %c0_9], %11 {strides = array<i32>} : memref<256x128xbf16, #tpu.memory_space<vmem>>, vector<256x128xbf16>,
    return
  }
  func.func @transform_0(%arg0: i32) -> (i32, i32) {
    %c0_i32 = arith.constant 0 : i32
    %c0_i32_0 = arith.constant 0 : i32
    return %arg0, %c0_i32 : i32, i32
  }
  func.func @transform_1(%arg0: i32) -> (i32, i32) {
    %c0_i32 = arith.constant 0 : i32
    %c0_i32_0 = arith.constant 0 : i32
    %c0_i32_1 = arith.constant 0 : i32
    return %c0_i32, %c0_i32_0 : i32, i32
  }
  func.func @transform_2(%arg0: i32) -> (i32, i32) {
    %c0_i32 = arith.constant 0 : i32
    %c0_i32_0 = arith.constant 0 : i32
    %c0_i32_1 = arith.constant 0 : i32
    return %c0_i32, %c0_i32_0 : i32, i32
  }
  func.func @transform_3(%arg0: i32) -> (i32, i32) {
    %c0_i32 = arith.constant 0 : i32
    %c0_i32_0 = arith.constant 0 : i32
    %c0_i32_1 = arith.constant 0 : i32
    return %c0_i32, %c0_i32_0 : i32, i32
  }
  func.func @transform_4(%arg0: i32) -> (i32, i32) {
    %c0_i32 = arith.constant 0 : i32
    %c0_i32_0 = arith.constant 0 : i32
    return %arg0, %c0_i32 : i32, i32
  }
}

module attributes {stable_mosaic.version = 11 : i64} {
  func.func @_maxpool_kernel(%arg0: i32, %arg1: memref<1x18x18x128xbf16, #tpu.memory_space<vmem>>, %arg2: memref<1x8x16x128xbf16, #tpu.memory_space<vmem>>) attributes {dimension_semantics = [#tpu.dimension_semantics<parallel>], iteration_bounds = array<i64: 2>, scalar_prefetch = 0 : i64, scratch_operands = 0 : i64, tpu.core_type = #tpu.core_type<tc>, window_params = [{transform_indices = @transform_0, window_bounds = array<i64: 1, 18, 18, 128>}, {transform_indices = @transform_1, window_bounds = array<i64: 1, 8, 16, 128>}]} {
    %c0 = arith.constant 0 : index
    %c0_0 = arith.constant 0 : index
    %c0_1 = arith.constant 0 : index
    %c0_2 = arith.constant 0 : index
    %0 = vector.load %arg1[%c0, %c0_0, %c0_1, %c0_2] : memref<1x18x18x128xbf16, #tpu.memory_space<vmem>>, vector<1x18x18x128xbf16>
    %1 = vector.shape_cast %0 : vector<1x18x18x128xbf16> to vector<18x18x128xbf16>
    %2 = vector.extract_strided_slice %1 {offsets = [0, 0, 0], sizes = [16, 18, 128], strides = [1, 1, 1]} : vector<18x18x128xbf16> to vector<16x18x128xbf16>
    %3 = vector.extract_strided_slice %1 {offsets = [2, 0, 0], sizes = [16, 18, 128], strides = [1, 1, 1]} : vector<18x18x128xbf16> to vector<16x18x128xbf16>
    %4 = vector.shape_cast %2 : vector<16x18x128xbf16> to vector<8x2x18x128xbf16>
    %5 = vector.shape_cast %3 : vector<16x18x128xbf16> to vector<8x2x18x128xbf16>
    %6 = vector.extract_strided_slice %4 {offsets = [0, 0, 0, 0], sizes = [8, 1, 18, 128], strides = [1, 1, 1, 1]} : vector<8x2x18x128xbf16> to vector<8x1x18x128xbf16>
    %7 = vector.shape_cast %6 : vector<8x1x18x128xbf16> to vector<8x18x128xbf16>
    %8 = vector.extract_strided_slice %4 {offsets = [0, 1, 0, 0], sizes = [8, 1, 18, 128], strides = [1, 1, 1, 1]} : vector<8x2x18x128xbf16> to vector<8x1x18x128xbf16>
    %9 = vector.shape_cast %8 : vector<8x1x18x128xbf16> to vector<8x18x128xbf16>
    %10 = arith.maximumf %7, %9 : vector<8x18x128xbf16>
    %11 = vector.extract_strided_slice %5 {offsets = [0, 0, 0, 0], sizes = [8, 1, 18, 128], strides = [1, 1, 1, 1]} : vector<8x2x18x128xbf16> to vector<8x1x18x128xbf16>
    %12 = vector.shape_cast %11 : vector<8x1x18x128xbf16> to vector<8x18x128xbf16>
    %13 = arith.maximumf %10, %12 : vector<8x18x128xbf16>
    %14 = vector.extract_strided_slice %13 {offsets = [0, 0, 0], sizes = [8, 16, 128], strides = [1, 1, 1]} : vector<8x18x128xbf16> to vector<8x16x128xbf16>
    %15 = vector.extract_strided_slice %13 {offsets = [0, 1, 0], sizes = [8, 16, 128], strides = [1, 1, 1]} : vector<8x18x128xbf16> to vector<8x16x128xbf16>
    %16 = arith.maximumf %14, %15 : vector<8x16x128xbf16>
    %17 = vector.extract_strided_slice %13 {offsets = [0, 2, 0], sizes = [8, 16, 128], strides = [1, 1, 1]} : vector<8x18x128xbf16> to vector<8x16x128xbf16>
    %18 = arith.maximumf %16, %17 : vector<8x16x128xbf16>
    %c0_3 = arith.constant 0 : index
    %c0_4 = arith.constant 0 : index
    %c0_5 = arith.constant 0 : index
    %c0_6 = arith.constant 0 : index
    %19 = vector.load %arg2[%c0_3, %c0_4, %c0_5, %c0_6] : memref<1x8x16x128xbf16, #tpu.memory_space<vmem>>, vector<1x8x16x128xbf16>
    %20 = vector.shape_cast %19 : vector<1x8x16x128xbf16> to vector<8x16x128xbf16>
    %21 = vector.shape_cast %18 : vector<8x16x128xbf16> to vector<1x8x16x128xbf16>
    tpu.vector_store %arg2[%c0_3, %c0_4, %c0_5, %c0_6], %21 {strides = array<i32>} : memref<1x8x16x128xbf16, #tpu.memory_space<vmem>>, vector<1x8x16x128xbf16>,
    return
  }
  func.func @transform_0(%arg0: i32) -> (i32, i32, i32, i32) {
    %c0_i32 = arith.constant 0 : i32
    %c0_i32_0 = arith.constant 0 : i32
    %c0_i32_1 = arith.constant 0 : i32
    %c0_i32_2 = arith.constant 0 : i32
    return %arg0, %c0_i32, %c0_i32_0, %c0_i32_1 : i32, i32, i32, i32
  }
  func.func @transform_1(%arg0: i32) -> (i32, i32, i32, i32) {
    %c0_i32 = arith.constant 0 : i32
    %c0_i32_0 = arith.constant 0 : i32
    %c0_i32_1 = arith.constant 0 : i32
    %c0_i32_2 = arith.constant 0 : i32
    return %arg0, %c0_i32, %c0_i32_0, %c0_i32_1 : i32, i32, i32, i32
  }
}

module attributes {stable_mosaic.version = 11 : i64} {
  func.func @_bottleneck_kernel(%arg0: i32, %arg1: memref<1x64x128xbf16, #tpu.memory_space<vmem>>, %arg2: memref<128x64xbf16, #tpu.memory_space<vmem>>, %arg3: memref<1x64xf32, #tpu.memory_space<vmem>>, %arg4: memref<1x64xf32, #tpu.memory_space<vmem>>, %arg5: memref<576x64xbf16, #tpu.memory_space<vmem>>, %arg6: memref<1x64xf32, #tpu.memory_space<vmem>>, %arg7: memref<1x64xf32, #tpu.memory_space<vmem>>, %arg8: memref<64x256xbf16, #tpu.memory_space<vmem>>, %arg9: memref<1x256xf32, #tpu.memory_space<vmem>>, %arg10: memref<1x256xf32, #tpu.memory_space<vmem>>, %arg11: memref<128x256xbf16, #tpu.memory_space<vmem>>, %arg12: memref<1x256xf32, #tpu.memory_space<vmem>>, %arg13: memref<1x256xf32, #tpu.memory_space<vmem>>, %arg14: memref<1x64x256xbf16, #tpu.memory_space<vmem>>) attributes {dimension_semantics = [#tpu.dimension_semantics<parallel>], iteration_bounds = array<i64: 2>, scalar_prefetch = 0 : i64, scratch_operands = 0 : i64, tpu.core_type = #tpu.core_type<tc>, window_params = [{transform_indices = @transform_0, window_bounds = array<i64: 1, 64, 128>}, {pipeline_mode = #tpu.pipeline_mode<synchronous>, transform_indices = @transform_1, window_bounds = array<i64: 128, 64>}, {pipeline_mode = #tpu.pipeline_mode<synchronous>, transform_indices = @transform_2, window_bounds = array<i64: 1, 64>}, {pipeline_mode = #tpu.pipeline_mode<synchronous>, transform_indices = @transform_3, window_bounds = array<i64: 1, 64>}, {pipeline_mode = #tpu.pipeline_mode<synchronous>, transform_indices = @transform_4, window_bounds = array<i64: 576, 64>}, {pipeline_mode = #tpu.pipeline_mode<synchronous>, transform_indices = @transform_5, window_bounds = array<i64: 1, 64>}, {pipeline_mode = #tpu.pipeline_mode<synchronous>, transform_indices = @transform_6, window_bounds = array<i64: 1, 64>}, {pipeline_mode = #tpu.pipeline_mode<synchronous>, transform_indices = @transform_7, window_bounds = array<i64: 64, 256>}, {pipeline_mode = #tpu.pipeline_mode<synchronous>, transform_indices = @transform_8, window_bounds = array<i64: 1, 256>}, {pipeline_mode = #tpu.pipeline_mode<synchronous>, transform_indices = @transform_9, window_bounds = array<i64: 1, 256>}, {pipeline_mode = #tpu.pipeline_mode<synchronous>, transform_indices = @transform_10, window_bounds = array<i64: 128, 256>}, {pipeline_mode = #tpu.pipeline_mode<synchronous>, transform_indices = @transform_11, window_bounds = array<i64: 1, 256>}, {pipeline_mode = #tpu.pipeline_mode<synchronous>, transform_indices = @transform_12, window_bounds = array<i64: 1, 256>}, {transform_indices = @transform_13, window_bounds = array<i64: 1, 64, 256>}]} {
    %c0 = arith.constant 0 : index
    %c0_0 = arith.constant 0 : index
    %c0_1 = arith.constant 0 : index
    %0 = vector.load %arg1[%c0, %c0_0, %c0_1] : memref<1x64x128xbf16, #tpu.memory_space<vmem>>, vector<1x64x128xbf16>
    %1 = vector.shape_cast %0 : vector<1x64x128xbf16> to vector<64x128xbf16>
    %c0_2 = arith.constant 0 : index
    %c0_3 = arith.constant 0 : index
    %2 = vector.load %arg2[%c0_2, %c0_3] : memref<128x64xbf16, #tpu.memory_space<vmem>>, vector<128x64xbf16>
    %cst = arith.constant dense<0.000000e+00> : vector<64x64xf32>
    %3 = tpu.matmul %1, %2, %cst {dimension_numbers = #tpu.dot_dimension_numbers<[1], [0], [0], [1], [0, 0, 1, 1], [], []>} : vector<64x128xbf16>, vector<128x64xbf16>, vector<64x64xf32> -> vector<64x64xf32>
    %c0_4 = arith.constant 0 : index
    %c0_5 = arith.constant 0 : index
    %4 = vector.load %arg3[%c0_4, %c0_5] : memref<1x64xf32, #tpu.memory_space<vmem>>, vector<1x64xf32>
    %5 = vector.broadcast %4 : vector<1x64xf32> to vector<64x64xf32>
    %6 = arith.mulf %3, %5 : vector<64x64xf32>
    %c0_6 = arith.constant 0 : index
    %c0_7 = arith.constant 0 : index
    %7 = vector.load %arg4[%c0_6, %c0_7] : memref<1x64xf32, #tpu.memory_space<vmem>>, vector<1x64xf32>
    %8 = vector.broadcast %7 : vector<1x64xf32> to vector<64x64xf32>
    %9 = arith.addf %6, %8 : vector<64x64xf32>
    %cst_8 = arith.constant 0.000000e+00 : f32
    %10 = vector.broadcast %cst_8 : f32 to vector<64x64xf32>
    %11 = arith.maximumf %9, %10 : vector<64x64xf32>
    %12 = arith.truncf %11 : vector<64x64xf32> to vector<64x64xbf16>
    %cst_9 = arith.constant 0.000000e+00 : bf16
    %13 = vector.broadcast %cst_9 : bf16 to vector<16x64xbf16>
    %14 = tpu.concatenate %13, %12, %13 in 0 : vector<16x64xbf16>, vector<64x64xbf16>, vector<16x64xbf16> -> vector<96x64xbf16>
    %15 = tpu.iota {dimensions = array<i32: 0>} : vector<64x1xi32>
    %c8_i32 = arith.constant 8 : i32
    %c0_i32 = arith.constant 0 : i32
    %16 = arith.cmpi eq, %c8_i32, %c0_i32 : i32
    %c1_i32 = arith.constant 1 : i32
    %17 = arith.select %16, %c1_i32, %c8_i32 : i32
    %18 = vector.broadcast %17 : i32 to vector<64x1xi32>
    %19 = arith.remsi %15, %18 : vector<64x1xi32>
    %c0_i32_10 = arith.constant 0 : i32
    %20 = vector.broadcast %c0_i32_10 : i32 to vector<64x1xi32>
    %21 = arith.cmpi ne, %19, %20 : vector<64x1xi32>
    %c0_i32_11 = arith.constant 0 : i32
    %22 = vector.broadcast %c0_i32_11 : i32 to vector<64x1xi32>
    %23 = arith.cmpi slt, %19, %22 : vector<64x1xi32>
    %c0_i32_12 = arith.constant 0 : i32
    %24 = arith.cmpi slt, %17, %c0_i32_12 : i32
    %25 = vector.broadcast %24 : i1 to vector<64x1xi1>
    %26 = vector.broadcast %25 : vector<64x1xi1> to vector<64x1xi1>
    %27 = arith.xori %23, %26 : vector<64x1xi1>
    %28 = arith.andi %27, %21 : vector<64x1xi1>
    %29 = vector.broadcast %17 : i32 to vector<64x1xi32>
    %30 = arith.addi %19, %29 : vector<64x1xi32>
    %31 = arith.select %28, %30, %19 : vector<64x1xi1>, vector<64x1xi32>
    %c0_i32_13 = arith.constant 0 : i32
    %32 = vector.broadcast %c0_i32_13 : i32 to vector<64x1xi32>
    %33 = arith.cmpi ne, %31, %32 : vector<64x1xi32>
    %c7_i32 = arith.constant 7 : i32
    %34 = vector.broadcast %c7_i32 : i32 to vector<64x1xi32>
    %35 = arith.cmpi ne, %31, %34 : vector<64x1xi32>
    %36 = vector.extract_strided_slice %14 {offsets = [7, 0], sizes = [64, 64], strides = [1, 1]} : vector<96x64xbf16> to vector<64x64xbf16>
    %37 = vector.extract_strided_slice %14 {offsets = [8, 0], sizes = [64, 64], strides = [1, 1]} : vector<96x64xbf16> to vector<64x64xbf16>
    %38 = vector.extract_strided_slice %14 {offsets = [9, 0], sizes = [64, 64], strides = [1, 1]} : vector<96x64xbf16> to vector<64x64xbf16>
    %cst_14 = arith.constant 0.000000e+00 : bf16
    %39 = vector.broadcast %cst_14 : bf16 to vector<64x64xbf16>
    %40 = vector.shape_cast %33 : vector<64x1xi1> to vector<64x1xi1>
    %41 = vector.broadcast %40 : vector<64x1xi1> to vector<64x64xi1>
    %42 = arith.select %41, %36, %39 : vector<64x64xi1>, vector<64x64xbf16>
    %cst_15 = arith.constant 0.000000e+00 : bf16
    %43 = vector.broadcast %cst_15 : bf16 to vector<64x64xbf16>
    %44 = vector.shape_cast %35 : vector<64x1xi1> to vector<64x1xi1>
    %45 = vector.broadcast %44 : vector<64x1xi1> to vector<64x64xi1>
    %46 = arith.select %45, %38, %43 : vector<64x64xi1>, vector<64x64xbf16>
    %47 = vector.extract_strided_slice %14 {offsets = [15, 0], sizes = [64, 64], strides = [1, 1]} : vector<96x64xbf16> to vector<64x64xbf16>
    %48 = vector.extract_strided_slice %14 {offsets = [16, 0], sizes = [64, 64], strides = [1, 1]} : vector<96x64xbf16> to vector<64x64xbf16>
    %49 = vector.extract_strided_slice %14 {offsets = [17, 0], sizes = [64, 64], strides = [1, 1]} : vector<96x64xbf16> to vector<64x64xbf16>
    %cst_16 = arith.constant 0.000000e+00 : bf16
    %50 = vector.broadcast %cst_16 : bf16 to vector<64x64xbf16>
    %51 = vector.shape_cast %33 : vector<64x1xi1> to vector<64x1xi1>
    %52 = vector.broadcast %51 : vector<64x1xi1> to vector<64x64xi1>
    %53 = arith.select %52, %47, %50 : vector<64x64xi1>, vector<64x64xbf16>
    %cst_17 = arith.constant 0.000000e+00 : bf16
    %54 = vector.broadcast %cst_17 : bf16 to vector<64x64xbf16>
    %55 = vector.shape_cast %35 : vector<64x1xi1> to vector<64x1xi1>
    %56 = vector.broadcast %55 : vector<64x1xi1> to vector<64x64xi1>
    %57 = arith.select %56, %49, %54 : vector<64x64xi1>, vector<64x64xbf16>
    %58 = vector.extract_strided_slice %14 {offsets = [23, 0], sizes = [64, 64], strides = [1, 1]} : vector<96x64xbf16> to vector<64x64xbf16>
    %59 = vector.extract_strided_slice %14 {offsets = [24, 0], sizes = [64, 64], strides = [1, 1]} : vector<96x64xbf16> to vector<64x64xbf16>
    %60 = vector.extract_strided_slice %14 {offsets = [25, 0], sizes = [64, 64], strides = [1, 1]} : vector<96x64xbf16> to vector<64x64xbf16>
    %cst_18 = arith.constant 0.000000e+00 : bf16
    %61 = vector.broadcast %cst_18 : bf16 to vector<64x64xbf16>
    %62 = vector.shape_cast %33 : vector<64x1xi1> to vector<64x1xi1>
    %63 = vector.broadcast %62 : vector<64x1xi1> to vector<64x64xi1>
    %64 = arith.select %63, %58, %61 : vector<64x64xi1>, vector<64x64xbf16>
    %cst_19 = arith.constant 0.000000e+00 : bf16
    %65 = vector.broadcast %cst_19 : bf16 to vector<64x64xbf16>
    %66 = vector.shape_cast %35 : vector<64x1xi1> to vector<64x1xi1>
    %67 = vector.broadcast %66 : vector<64x1xi1> to vector<64x64xi1>
    %68 = arith.select %67, %60, %65 : vector<64x64xi1>, vector<64x64xbf16>
    %69 = tpu.concatenate %42, %37, %46, %53, %48, %57, %64, %59, %68 in 1 : vector<64x64xbf16>, vector<64x64xbf16>, vector<64x64xbf16>, vector<64x64xbf16>, vector<64x64xbf16>, vector<64x64xbf16>, vector<64x64xbf16>, vector<64x64xbf16>, vector<64x64xbf16> -> vector<64x576xbf16>
    %c0_20 = arith.constant 0 : index
    %c0_21 = arith.constant 0 : index
    %70 = vector.load %arg5[%c0_20, %c0_21] : memref<576x64xbf16, #tpu.memory_space<vmem>>, vector<576x64xbf16>
    %cst_22 = arith.constant dense<0.000000e+00> : vector<64x64xf32>
    %71 = tpu.matmul %69, %70, %cst_22 {dimension_numbers = #tpu.dot_dimension_numbers<[1], [0], [0], [1], [0, 0, 1, 1], [], []>} : vector<64x576xbf16>, vector<576x64xbf16>, vector<64x64xf32> -> vector<64x64xf32>
    %c0_23 = arith.constant 0 : index
    %c0_24 = arith.constant 0 : index
    %72 = vector.load %arg6[%c0_23, %c0_24] : memref<1x64xf32, #tpu.memory_space<vmem>>, vector<1x64xf32>
    %73 = vector.broadcast %72 : vector<1x64xf32> to vector<64x64xf32>
    %74 = arith.mulf %71, %73 : vector<64x64xf32>
    %c0_25 = arith.constant 0 : index
    %c0_26 = arith.constant 0 : index
    %75 = vector.load %arg7[%c0_25, %c0_26] : memref<1x64xf32, #tpu.memory_space<vmem>>, vector<1x64xf32>
    %76 = vector.broadcast %75 : vector<1x64xf32> to vector<64x64xf32>
    %77 = arith.addf %74, %76 : vector<64x64xf32>
    %cst_27 = arith.constant 0.000000e+00 : f32
    %78 = vector.broadcast %cst_27 : f32 to vector<64x64xf32>
    %79 = arith.maximumf %77, %78 : vector<64x64xf32>
    %80 = arith.truncf %79 : vector<64x64xf32> to vector<64x64xbf16>
    %c0_28 = arith.constant 0 : index
    %c0_29 = arith.constant 0 : index
    %81 = vector.load %arg8[%c0_28, %c0_29] : memref<64x256xbf16, #tpu.memory_space<vmem>>, vector<64x256xbf16>
    %cst_30 = arith.constant dense<0.000000e+00> : vector<64x256xf32>
    %82 = tpu.matmul %80, %81, %cst_30 {dimension_numbers = #tpu.dot_dimension_numbers<[1], [0], [0], [1], [0, 0, 1, 1], [], []>} : vector<64x64xbf16>, vector<64x256xbf16>, vector<64x256xf32> -> vector<64x256xf32>
    %c0_31 = arith.constant 0 : index
    %c0_32 = arith.constant 0 : index
    %83 = vector.load %arg9[%c0_31, %c0_32] : memref<1x256xf32, #tpu.memory_space<vmem>>, vector<1x256xf32>
    %84 = vector.broadcast %83 : vector<1x256xf32> to vector<64x256xf32>
    %85 = arith.mulf %82, %84 : vector<64x256xf32>
    %c0_33 = arith.constant 0 : index
    %c0_34 = arith.constant 0 : index
    %86 = vector.load %arg10[%c0_33, %c0_34] : memref<1x256xf32, #tpu.memory_space<vmem>>, vector<1x256xf32>
    %87 = vector.broadcast %86 : vector<1x256xf32> to vector<64x256xf32>
    %88 = arith.addf %85, %87 : vector<64x256xf32>
    %c0_35 = arith.constant 0 : index
    %c0_36 = arith.constant 0 : index
    %89 = vector.load %arg11[%c0_35, %c0_36] : memref<128x256xbf16, #tpu.memory_space<vmem>>, vector<128x256xbf16>
    %cst_37 = arith.constant dense<0.000000e+00> : vector<64x256xf32>
    %90 = tpu.matmul %1, %89, %cst_37 {dimension_numbers = #tpu.dot_dimension_numbers<[1], [0], [0], [1], [0, 0, 1, 1], [], []>} : vector<64x128xbf16>, vector<128x256xbf16>, vector<64x256xf32> -> vector<64x256xf32>
    %c0_38 = arith.constant 0 : index
    %c0_39 = arith.constant 0 : index
    %91 = vector.load %arg12[%c0_38, %c0_39] : memref<1x256xf32, #tpu.memory_space<vmem>>, vector<1x256xf32>
    %92 = vector.broadcast %91 : vector<1x256xf32> to vector<64x256xf32>
    %93 = arith.mulf %90, %92 : vector<64x256xf32>
    %c0_40 = arith.constant 0 : index
    %c0_41 = arith.constant 0 : index
    %94 = vector.load %arg13[%c0_40, %c0_41] : memref<1x256xf32, #tpu.memory_space<vmem>>, vector<1x256xf32>
    %95 = vector.broadcast %94 : vector<1x256xf32> to vector<64x256xf32>
    %96 = arith.addf %93, %95 : vector<64x256xf32>
    %97 = arith.addf %88, %96 : vector<64x256xf32>
    %cst_42 = arith.constant 0.000000e+00 : f32
    %98 = vector.broadcast %cst_42 : f32 to vector<64x256xf32>
    %99 = arith.maximumf %97, %98 : vector<64x256xf32>
    %100 = arith.truncf %99 : vector<64x256xf32> to vector<64x256xbf16>
    %c0_43 = arith.constant 0 : index
    %c0_44 = arith.constant 0 : index
    %c0_45 = arith.constant 0 : index
    %101 = vector.load %arg14[%c0_43, %c0_44, %c0_45] : memref<1x64x256xbf16, #tpu.memory_space<vmem>>, vector<1x64x256xbf16>
    %102 = vector.shape_cast %101 : vector<1x64x256xbf16> to vector<64x256xbf16>
    %103 = vector.shape_cast %100 : vector<64x256xbf16> to vector<1x64x256xbf16>
    tpu.vector_store %arg14[%c0_43, %c0_44, %c0_45], %103 {strides = array<i32>} : memref<1x64x256xbf16, #tpu.memory_space<vmem>>, vector<1x64x256xbf16>,
    return
  }
  func.func @transform_0(%arg0: i32) -> (i32, i32, i32) {
    %c0_i32 = arith.constant 0 : i32
    %c0_i32_0 = arith.constant 0 : i32
    %c0_i32_1 = arith.constant 0 : i32
    return %arg0, %c0_i32, %c0_i32_0 : i32, i32, i32
  }
  func.func @transform_1(%arg0: i32) -> (i32, i32) {
    %c0_i32 = arith.constant 0 : i32
    %c0_i32_0 = arith.constant 0 : i32
    %c0_i32_1 = arith.constant 0 : i32
    return %c0_i32, %c0_i32_0 : i32, i32
  }
  func.func @transform_2(%arg0: i32) -> (i32, i32) {
    %c0_i32 = arith.constant 0 : i32
    %c0_i32_0 = arith.constant 0 : i32
    %c0_i32_1 = arith.constant 0 : i32
    return %c0_i32, %c0_i32_0 : i32, i32
  }
  func.func @transform_3(%arg0: i32) -> (i32, i32) {
    %c0_i32 = arith.constant 0 : i32
    %c0_i32_0 = arith.constant 0 : i32
    %c0_i32_1 = arith.constant 0 : i32
    return %c0_i32, %c0_i32_0 : i32, i32
  }
  func.func @transform_4(%arg0: i32) -> (i32, i32) {
    %c0_i32 = arith.constant 0 : i32
    %c0_i32_0 = arith.constant 0 : i32
    %c0_i32_1 = arith.constant 0 : i32
    return %c0_i32, %c0_i32_0 : i32, i32
  }
  func.func @transform_5(%arg0: i32) -> (i32, i32) {
    %c0_i32 = arith.constant 0 : i32
    %c0_i32_0 = arith.constant 0 : i32
    %c0_i32_1 = arith.constant 0 : i32
    return %c0_i32, %c0_i32_0 : i32, i32
  }
  func.func @transform_6(%arg0: i32) -> (i32, i32) {
    %c0_i32 = arith.constant 0 : i32
    %c0_i32_0 = arith.constant 0 : i32
    %c0_i32_1 = arith.constant 0 : i32
    return %c0_i32, %c0_i32_0 : i32, i32
  }
  func.func @transform_7(%arg0: i32) -> (i32, i32) {
    %c0_i32 = arith.constant 0 : i32
    %c0_i32_0 = arith.constant 0 : i32
    %c0_i32_1 = arith.constant 0 : i32
    return %c0_i32, %c0_i32_0 : i32, i32
  }
  func.func @transform_8(%arg0: i32) -> (i32, i32) {
    %c0_i32 = arith.constant 0 : i32
    %c0_i32_0 = arith.constant 0 : i32
    %c0_i32_1 = arith.constant 0 : i32
    return %c0_i32, %c0_i32_0 : i32, i32
  }
  func.func @transform_9(%arg0: i32) -> (i32, i32) {
    %c0_i32 = arith.constant 0 : i32
    %c0_i32_0 = arith.constant 0 : i32
    %c0_i32_1 = arith.constant 0 : i32
    return %c0_i32, %c0_i32_0 : i32, i32
  }
  func.func @transform_10(%arg0: i32) -> (i32, i32) {
    %c0_i32 = arith.constant 0 : i32
    %c0_i32_0 = arith.constant 0 : i32
    %c0_i32_1 = arith.constant 0 : i32
    return %c0_i32, %c0_i32_0 : i32, i32
  }
  func.func @transform_11(%arg0: i32) -> (i32, i32) {
    %c0_i32 = arith.constant 0 : i32
    %c0_i32_0 = arith.constant 0 : i32
    %c0_i32_1 = arith.constant 0 : i32
    return %c0_i32, %c0_i32_0 : i32, i32
  }
  func.func @transform_12(%arg0: i32) -> (i32, i32) {
    %c0_i32 = arith.constant 0 : i32
    %c0_i32_0 = arith.constant 0 : i32
    %c0_i32_1 = arith.constant 0 : i32
    return %c0_i32, %c0_i32_0 : i32, i32
  }
  func.func @transform_13(%arg0: i32) -> (i32, i32, i32) {
    %c0_i32 = arith.constant 0 : i32
    %c0_i32_0 = arith.constant 0 : i32
    %c0_i32_1 = arith.constant 0 : i32
    return %arg0, %c0_i32, %c0_i32_0 : i32, i32, i32
  }
}

module attributes {stable_mosaic.version = 11 : i64} {
  func.func @_bottleneck_kernel(%arg0: i32, %arg1: memref<1x64x256xbf16, #tpu.memory_space<vmem>>, %arg2: memref<256x64xbf16, #tpu.memory_space<vmem>>, %arg3: memref<1x64xf32, #tpu.memory_space<vmem>>, %arg4: memref<1x64xf32, #tpu.memory_space<vmem>>, %arg5: memref<576x64xbf16, #tpu.memory_space<vmem>>, %arg6: memref<1x64xf32, #tpu.memory_space<vmem>>, %arg7: memref<1x64xf32, #tpu.memory_space<vmem>>, %arg8: memref<64x256xbf16, #tpu.memory_space<vmem>>, %arg9: memref<1x256xf32, #tpu.memory_space<vmem>>, %arg10: memref<1x256xf32, #tpu.memory_space<vmem>>, %arg11: memref<1x64x256xbf16, #tpu.memory_space<vmem>>) attributes {dimension_semantics = [#tpu.dimension_semantics<parallel>], iteration_bounds = array<i64: 2>, scalar_prefetch = 0 : i64, scratch_operands = 0 : i64, tpu.core_type = #tpu.core_type<tc>, window_params = [{transform_indices = @transform_0, window_bounds = array<i64: 1, 64, 256>}, {pipeline_mode = #tpu.pipeline_mode<synchronous>, transform_indices = @transform_1, window_bounds = array<i64: 256, 64>}, {pipeline_mode = #tpu.pipeline_mode<synchronous>, transform_indices = @transform_2, window_bounds = array<i64: 1, 64>}, {pipeline_mode = #tpu.pipeline_mode<synchronous>, transform_indices = @transform_3, window_bounds = array<i64: 1, 64>}, {pipeline_mode = #tpu.pipeline_mode<synchronous>, transform_indices = @transform_4, window_bounds = array<i64: 576, 64>}, {pipeline_mode = #tpu.pipeline_mode<synchronous>, transform_indices = @transform_5, window_bounds = array<i64: 1, 64>}, {pipeline_mode = #tpu.pipeline_mode<synchronous>, transform_indices = @transform_6, window_bounds = array<i64: 1, 64>}, {pipeline_mode = #tpu.pipeline_mode<synchronous>, transform_indices = @transform_7, window_bounds = array<i64: 64, 256>}, {pipeline_mode = #tpu.pipeline_mode<synchronous>, transform_indices = @transform_8, window_bounds = array<i64: 1, 256>}, {pipeline_mode = #tpu.pipeline_mode<synchronous>, transform_indices = @transform_9, window_bounds = array<i64: 1, 256>}, {transform_indices = @transform_10, window_bounds = array<i64: 1, 64, 256>}]} {
    %c0 = arith.constant 0 : index
    %c0_0 = arith.constant 0 : index
    %c0_1 = arith.constant 0 : index
    %0 = vector.load %arg1[%c0, %c0_0, %c0_1] : memref<1x64x256xbf16, #tpu.memory_space<vmem>>, vector<1x64x256xbf16>
    %1 = vector.shape_cast %0 : vector<1x64x256xbf16> to vector<64x256xbf16>
    %c0_2 = arith.constant 0 : index
    %c0_3 = arith.constant 0 : index
    %2 = vector.load %arg2[%c0_2, %c0_3] : memref<256x64xbf16, #tpu.memory_space<vmem>>, vector<256x64xbf16>
    %cst = arith.constant dense<0.000000e+00> : vector<64x64xf32>
    %3 = tpu.matmul %1, %2, %cst {dimension_numbers = #tpu.dot_dimension_numbers<[1], [0], [0], [1], [0, 0, 1, 1], [], []>} : vector<64x256xbf16>, vector<256x64xbf16>, vector<64x64xf32> -> vector<64x64xf32>
    %c0_4 = arith.constant 0 : index
    %c0_5 = arith.constant 0 : index
    %4 = vector.load %arg3[%c0_4, %c0_5] : memref<1x64xf32, #tpu.memory_space<vmem>>, vector<1x64xf32>
    %5 = vector.broadcast %4 : vector<1x64xf32> to vector<64x64xf32>
    %6 = arith.mulf %3, %5 : vector<64x64xf32>
    %c0_6 = arith.constant 0 : index
    %c0_7 = arith.constant 0 : index
    %7 = vector.load %arg4[%c0_6, %c0_7] : memref<1x64xf32, #tpu.memory_space<vmem>>, vector<1x64xf32>
    %8 = vector.broadcast %7 : vector<1x64xf32> to vector<64x64xf32>
    %9 = arith.addf %6, %8 : vector<64x64xf32>
    %cst_8 = arith.constant 0.000000e+00 : f32
    %10 = vector.broadcast %cst_8 : f32 to vector<64x64xf32>
    %11 = arith.maximumf %9, %10 : vector<64x64xf32>
    %12 = arith.truncf %11 : vector<64x64xf32> to vector<64x64xbf16>
    %cst_9 = arith.constant 0.000000e+00 : bf16
    %13 = vector.broadcast %cst_9 : bf16 to vector<16x64xbf16>
    %14 = tpu.concatenate %13, %12, %13 in 0 : vector<16x64xbf16>, vector<64x64xbf16>, vector<16x64xbf16> -> vector<96x64xbf16>
    %15 = tpu.iota {dimensions = array<i32: 0>} : vector<64x1xi32>
    %c8_i32 = arith.constant 8 : i32
    %c0_i32 = arith.constant 0 : i32
    %16 = arith.cmpi eq, %c8_i32, %c0_i32 : i32
    %c1_i32 = arith.constant 1 : i32
    %17 = arith.select %16, %c1_i32, %c8_i32 : i32
    %18 = vector.broadcast %17 : i32 to vector<64x1xi32>
    %19 = arith.remsi %15, %18 : vector<64x1xi32>
    %c0_i32_10 = arith.constant 0 : i32
    %20 = vector.broadcast %c0_i32_10 : i32 to vector<64x1xi32>
    %21 = arith.cmpi ne, %19, %20 : vector<64x1xi32>
    %c0_i32_11 = arith.constant 0 : i32
    %22 = vector.broadcast %c0_i32_11 : i32 to vector<64x1xi32>
    %23 = arith.cmpi slt, %19, %22 : vector<64x1xi32>
    %c0_i32_12 = arith.constant 0 : i32
    %24 = arith.cmpi slt, %17, %c0_i32_12 : i32
    %25 = vector.broadcast %24 : i1 to vector<64x1xi1>
    %26 = vector.broadcast %25 : vector<64x1xi1> to vector<64x1xi1>
    %27 = arith.xori %23, %26 : vector<64x1xi1>
    %28 = arith.andi %27, %21 : vector<64x1xi1>
    %29 = vector.broadcast %17 : i32 to vector<64x1xi32>
    %30 = arith.addi %19, %29 : vector<64x1xi32>
    %31 = arith.select %28, %30, %19 : vector<64x1xi1>, vector<64x1xi32>
    %c0_i32_13 = arith.constant 0 : i32
    %32 = vector.broadcast %c0_i32_13 : i32 to vector<64x1xi32>
    %33 = arith.cmpi ne, %31, %32 : vector<64x1xi32>
    %c7_i32 = arith.constant 7 : i32
    %34 = vector.broadcast %c7_i32 : i32 to vector<64x1xi32>
    %35 = arith.cmpi ne, %31, %34 : vector<64x1xi32>
    %36 = vector.extract_strided_slice %14 {offsets = [7, 0], sizes = [64, 64], strides = [1, 1]} : vector<96x64xbf16> to vector<64x64xbf16>
    %37 = vector.extract_strided_slice %14 {offsets = [8, 0], sizes = [64, 64], strides = [1, 1]} : vector<96x64xbf16> to vector<64x64xbf16>
    %38 = vector.extract_strided_slice %14 {offsets = [9, 0], sizes = [64, 64], strides = [1, 1]} : vector<96x64xbf16> to vector<64x64xbf16>
    %cst_14 = arith.constant 0.000000e+00 : bf16
    %39 = vector.broadcast %cst_14 : bf16 to vector<64x64xbf16>
    %40 = vector.shape_cast %33 : vector<64x1xi1> to vector<64x1xi1>
    %41 = vector.broadcast %40 : vector<64x1xi1> to vector<64x64xi1>
    %42 = arith.select %41, %36, %39 : vector<64x64xi1>, vector<64x64xbf16>
    %cst_15 = arith.constant 0.000000e+00 : bf16
    %43 = vector.broadcast %cst_15 : bf16 to vector<64x64xbf16>
    %44 = vector.shape_cast %35 : vector<64x1xi1> to vector<64x1xi1>
    %45 = vector.broadcast %44 : vector<64x1xi1> to vector<64x64xi1>
    %46 = arith.select %45, %38, %43 : vector<64x64xi1>, vector<64x64xbf16>
    %47 = vector.extract_strided_slice %14 {offsets = [15, 0], sizes = [64, 64], strides = [1, 1]} : vector<96x64xbf16> to vector<64x64xbf16>
    %48 = vector.extract_strided_slice %14 {offsets = [16, 0], sizes = [64, 64], strides = [1, 1]} : vector<96x64xbf16> to vector<64x64xbf16>
    %49 = vector.extract_strided_slice %14 {offsets = [17, 0], sizes = [64, 64], strides = [1, 1]} : vector<96x64xbf16> to vector<64x64xbf16>
    %cst_16 = arith.constant 0.000000e+00 : bf16
    %50 = vector.broadcast %cst_16 : bf16 to vector<64x64xbf16>
    %51 = vector.shape_cast %33 : vector<64x1xi1> to vector<64x1xi1>
    %52 = vector.broadcast %51 : vector<64x1xi1> to vector<64x64xi1>
    %53 = arith.select %52, %47, %50 : vector<64x64xi1>, vector<64x64xbf16>
    %cst_17 = arith.constant 0.000000e+00 : bf16
    %54 = vector.broadcast %cst_17 : bf16 to vector<64x64xbf16>
    %55 = vector.shape_cast %35 : vector<64x1xi1> to vector<64x1xi1>
    %56 = vector.broadcast %55 : vector<64x1xi1> to vector<64x64xi1>
    %57 = arith.select %56, %49, %54 : vector<64x64xi1>, vector<64x64xbf16>
    %58 = vector.extract_strided_slice %14 {offsets = [23, 0], sizes = [64, 64], strides = [1, 1]} : vector<96x64xbf16> to vector<64x64xbf16>
    %59 = vector.extract_strided_slice %14 {offsets = [24, 0], sizes = [64, 64], strides = [1, 1]} : vector<96x64xbf16> to vector<64x64xbf16>
    %60 = vector.extract_strided_slice %14 {offsets = [25, 0], sizes = [64, 64], strides = [1, 1]} : vector<96x64xbf16> to vector<64x64xbf16>
    %cst_18 = arith.constant 0.000000e+00 : bf16
    %61 = vector.broadcast %cst_18 : bf16 to vector<64x64xbf16>
    %62 = vector.shape_cast %33 : vector<64x1xi1> to vector<64x1xi1>
    %63 = vector.broadcast %62 : vector<64x1xi1> to vector<64x64xi1>
    %64 = arith.select %63, %58, %61 : vector<64x64xi1>, vector<64x64xbf16>
    %cst_19 = arith.constant 0.000000e+00 : bf16
    %65 = vector.broadcast %cst_19 : bf16 to vector<64x64xbf16>
    %66 = vector.shape_cast %35 : vector<64x1xi1> to vector<64x1xi1>
    %67 = vector.broadcast %66 : vector<64x1xi1> to vector<64x64xi1>
    %68 = arith.select %67, %60, %65 : vector<64x64xi1>, vector<64x64xbf16>
    %69 = tpu.concatenate %42, %37, %46, %53, %48, %57, %64, %59, %68 in 1 : vector<64x64xbf16>, vector<64x64xbf16>, vector<64x64xbf16>, vector<64x64xbf16>, vector<64x64xbf16>, vector<64x64xbf16>, vector<64x64xbf16>, vector<64x64xbf16>, vector<64x64xbf16> -> vector<64x576xbf16>
    %c0_20 = arith.constant 0 : index
    %c0_21 = arith.constant 0 : index
    %70 = vector.load %arg5[%c0_20, %c0_21] : memref<576x64xbf16, #tpu.memory_space<vmem>>, vector<576x64xbf16>
    %cst_22 = arith.constant dense<0.000000e+00> : vector<64x64xf32>
    %71 = tpu.matmul %69, %70, %cst_22 {dimension_numbers = #tpu.dot_dimension_numbers<[1], [0], [0], [1], [0, 0, 1, 1], [], []>} : vector<64x576xbf16>, vector<576x64xbf16>, vector<64x64xf32> -> vector<64x64xf32>
    %c0_23 = arith.constant 0 : index
    %c0_24 = arith.constant 0 : index
    %72 = vector.load %arg6[%c0_23, %c0_24] : memref<1x64xf32, #tpu.memory_space<vmem>>, vector<1x64xf32>
    %73 = vector.broadcast %72 : vector<1x64xf32> to vector<64x64xf32>
    %74 = arith.mulf %71, %73 : vector<64x64xf32>
    %c0_25 = arith.constant 0 : index
    %c0_26 = arith.constant 0 : index
    %75 = vector.load %arg7[%c0_25, %c0_26] : memref<1x64xf32, #tpu.memory_space<vmem>>, vector<1x64xf32>
    %76 = vector.broadcast %75 : vector<1x64xf32> to vector<64x64xf32>
    %77 = arith.addf %74, %76 : vector<64x64xf32>
    %cst_27 = arith.constant 0.000000e+00 : f32
    %78 = vector.broadcast %cst_27 : f32 to vector<64x64xf32>
    %79 = arith.maximumf %77, %78 : vector<64x64xf32>
    %80 = arith.truncf %79 : vector<64x64xf32> to vector<64x64xbf16>
    %c0_28 = arith.constant 0 : index
    %c0_29 = arith.constant 0 : index
    %81 = vector.load %arg8[%c0_28, %c0_29] : memref<64x256xbf16, #tpu.memory_space<vmem>>, vector<64x256xbf16>
    %cst_30 = arith.constant dense<0.000000e+00> : vector<64x256xf32>
    %82 = tpu.matmul %80, %81, %cst_30 {dimension_numbers = #tpu.dot_dimension_numbers<[1], [0], [0], [1], [0, 0, 1, 1], [], []>} : vector<64x64xbf16>, vector<64x256xbf16>, vector<64x256xf32> -> vector<64x256xf32>
    %c0_31 = arith.constant 0 : index
    %c0_32 = arith.constant 0 : index
    %83 = vector.load %arg9[%c0_31, %c0_32] : memref<1x256xf32, #tpu.memory_space<vmem>>, vector<1x256xf32>
    %84 = vector.broadcast %83 : vector<1x256xf32> to vector<64x256xf32>
    %85 = arith.mulf %82, %84 : vector<64x256xf32>
    %c0_33 = arith.constant 0 : index
    %c0_34 = arith.constant 0 : index
    %86 = vector.load %arg10[%c0_33, %c0_34] : memref<1x256xf32, #tpu.memory_space<vmem>>, vector<1x256xf32>
    %87 = vector.broadcast %86 : vector<1x256xf32> to vector<64x256xf32>
    %88 = arith.addf %85, %87 : vector<64x256xf32>
    %89 = arith.extf %1 : vector<64x256xbf16> to vector<64x256xf32>
    %90 = arith.addf %88, %89 : vector<64x256xf32>
    %cst_35 = arith.constant 0.000000e+00 : f32
    %91 = vector.broadcast %cst_35 : f32 to vector<64x256xf32>
    %92 = arith.maximumf %90, %91 : vector<64x256xf32>
    %93 = arith.truncf %92 : vector<64x256xf32> to vector<64x256xbf16>
    %c0_36 = arith.constant 0 : index
    %c0_37 = arith.constant 0 : index
    %c0_38 = arith.constant 0 : index
    %94 = vector.load %arg11[%c0_36, %c0_37, %c0_38] : memref<1x64x256xbf16, #tpu.memory_space<vmem>>, vector<1x64x256xbf16>
    %95 = vector.shape_cast %94 : vector<1x64x256xbf16> to vector<64x256xbf16>
    %96 = vector.shape_cast %93 : vector<64x256xbf16> to vector<1x64x256xbf16>
    tpu.vector_store %arg11[%c0_36, %c0_37, %c0_38], %96 {strides = array<i32>} : memref<1x64x256xbf16, #tpu.memory_space<vmem>>, vector<1x64x256xbf16>,
    return
  }
  func.func @transform_0(%arg0: i32) -> (i32, i32, i32) {
    %c0_i32 = arith.constant 0 : i32
    %c0_i32_0 = arith.constant 0 : i32
    %c0_i32_1 = arith.constant 0 : i32
    return %arg0, %c0_i32, %c0_i32_0 : i32, i32, i32
  }
  func.func @transform_1(%arg0: i32) -> (i32, i32) {
    %c0_i32 = arith.constant 0 : i32
    %c0_i32_0 = arith.constant 0 : i32
    %c0_i32_1 = arith.constant 0 : i32
    return %c0_i32, %c0_i32_0 : i32, i32
  }
  func.func @transform_2(%arg0: i32) -> (i32, i32) {
    %c0_i32 = arith.constant 0 : i32
    %c0_i32_0 = arith.constant 0 : i32
    %c0_i32_1 = arith.constant 0 : i32
    return %c0_i32, %c0_i32_0 : i32, i32
  }
  func.func @transform_3(%arg0: i32) -> (i32, i32) {
    %c0_i32 = arith.constant 0 : i32
    %c0_i32_0 = arith.constant 0 : i32
    %c0_i32_1 = arith.constant 0 : i32
    return %c0_i32, %c0_i32_0 : i32, i32
  }
  func.func @transform_4(%arg0: i32) -> (i32, i32) {
    %c0_i32 = arith.constant 0 : i32
    %c0_i32_0 = arith.constant 0 : i32
    %c0_i32_1 = arith.constant 0 : i32
    return %c0_i32, %c0_i32_0 : i32, i32
  }
  func.func @transform_5(%arg0: i32) -> (i32, i32) {
    %c0_i32 = arith.constant 0 : i32
    %c0_i32_0 = arith.constant 0 : i32
    %c0_i32_1 = arith.constant 0 : i32
    return %c0_i32, %c0_i32_0 : i32, i32
  }
  func.func @transform_6(%arg0: i32) -> (i32, i32) {
    %c0_i32 = arith.constant 0 : i32
    %c0_i32_0 = arith.constant 0 : i32
    %c0_i32_1 = arith.constant 0 : i32
    return %c0_i32, %c0_i32_0 : i32, i32
  }
  func.func @transform_7(%arg0: i32) -> (i32, i32) {
    %c0_i32 = arith.constant 0 : i32
    %c0_i32_0 = arith.constant 0 : i32
    %c0_i32_1 = arith.constant 0 : i32
    return %c0_i32, %c0_i32_0 : i32, i32
  }
  func.func @transform_8(%arg0: i32) -> (i32, i32) {
    %c0_i32 = arith.constant 0 : i32
    %c0_i32_0 = arith.constant 0 : i32
    %c0_i32_1 = arith.constant 0 : i32
    return %c0_i32, %c0_i32_0 : i32, i32
  }
  func.func @transform_9(%arg0: i32) -> (i32, i32) {
    %c0_i32 = arith.constant 0 : i32
    %c0_i32_0 = arith.constant 0 : i32
    %c0_i32_1 = arith.constant 0 : i32
    return %c0_i32, %c0_i32_0 : i32, i32
  }
  func.func @transform_10(%arg0: i32) -> (i32, i32, i32) {
    %c0_i32 = arith.constant 0 : i32
    %c0_i32_0 = arith.constant 0 : i32
    %c0_i32_1 = arith.constant 0 : i32
    return %arg0, %c0_i32, %c0_i32_0 : i32, i32, i32
  }
}

</mosaic_0001>

<llo_original>
// kernel: visible_module_forward.5
$region0: #{visible_module_forward.5}
  #allocation0 [shape = 'u32[]', space=smem, size = 0x4, offset = 0x4, fixed_abs, tag = 'smem constant byte address 0x4 - core index']
  #allocation1 [shape = 'u32[72,128]{1,0:T(1,128)}', space=vmem, size = 0x9000, scoped, tag = 'internal scratch']
  %s0 = inlined_call_operand.vmem [shape: bf16[512,160], index: 0, kind: input, shape index: {}]
  %s1 = inlined_call_operand.vmem [shape: bf16[160,128], index: 1, kind: input, shape index: {}]
  %s2 = inlined_call_operand.vmem [shape: f32[1,128], index: 2, kind: input, shape index: {}]
  %s3 = inlined_call_operand.vmem [shape: f32[1,128], index: 3, kind: input, shape index: {}]
  %s4 = inlined_call_operand.vmem [shape: bf16[512,128], index: 4, kind: output, shape index: {}]
  %s5 = sld [smem:[#allocation0]]
  $region49: #{visible_module_forward.5} parent=0
    _
  %s7 = ssub.s32 1, %s5
  %s8 = scalar_select 0, %s7, %s5
  loop: start=0, step=1, limit=4
  $region2: #{visible_module_forward.5} parent=0 // loop_pre_header
    _
  $region3: #{visible_module_forward.5} parent=0 // loop_header
    %s10 = sphi 0, %s14
    %p11 = scmp.ge.s32.totalorder %s10, 4
    %s20 = sphi 0, %s22
    %s23 = sphi 0, %s20
    %s24 = sphi 0, %s23
    %s40 = sphi 0, %s24
    %s44 = sphi 0, %s44
    %s46 = sphi 0, %s44
    %s47 = sphi 0, %s46
    %s61 = sphi 0, %s47
    %s65 = sphi 0, %s65
    %s67 = sphi 0, %s65
    %s68 = sphi 0, %s67
    %s82 = sphi 0, %s68
    %s86 = sphi 0, %s86
    %s88 = sphi 0, %s86
    %s89 = sphi 0, %s88
    %s103 = sphi 0, %s89
    %s109 = sphi 0, %s111
    %s112 = sphi 0, %s109
    %s113 = sphi 0, %s112
    %s129 = sphi 0, %s113
  $region4: #{visible_module_forward.5} parent=0 // loop_header_branch
    %13 = sbr.rel (%p11) target = $region8
  $region5: #{visible_module_forward.5} parent=0 // loop_body
    %s15 = ssub.s32 %s10, 1
    %s16 = ssub.s32 %s10, 2
    %s17 = sadd.s32 %s10, 1
    %s18 = ssub.s32 %s10, %s17
    %p19 = scmp.eq.s32.totalorder %s18, 0
    %s21 = sadd.s32 %s20, 1
    %s22 = scalar_select %p19, %s20, %s21
    %p25 = pneg %p19
    %p26 = scmp.eq.s32.totalorder %s10, 1
    %p27 = por %p25, %p26
    %p28 = scmp.ne.s32.totalorder %s20, %s23
    %p29 = scmp.eq.s32.totalorder %s10, 0
    %p30 = por %p28, %p29
    %p31 = scmp.ne.s32.totalorder %s20, %s23
    %p32 = scmp.eq.s32.totalorder %s15, 1
    %p33 = por %p31, %p32
    %p34 = scmp.ne.s32.totalorder %s23, %s24
    %p35 = scmp.eq.s32.totalorder %s15, 0
    %p36 = por %p34, %p35
    %p37 = scmp.ne.s32.totalorder %s23, %s24
    %p38 = scmp.eq.s32.totalorder %s16, 1
    %p39 = por %p37, %p38
    %p41 = scmp.ne.s32.totalorder %s24, %s40
    %p42 = scmp.eq.s32.totalorder %s16, 0
    %p43 = por %p41, %p42
    %s45 = sadd.s32 %s44, 1
    %p48 = scmp.eq.s32.totalorder %s10, 1
    %p49 = scmp.ne.s32.totalorder %s44, %s46
    %p50 = scmp.eq.s32.totalorder %s10, 0
    %p51 = por %p49, %p50
    %p52 = scmp.ne.s32.totalorder %s44, %s46
    %p53 = scmp.eq.s32.totalorder %s15, 1
    %p54 = por %p52, %p53
    %p55 = scmp.ne.s32.totalorder %s46, %s47
    %p56 = scmp.eq.s32.totalorder %s15, 0
    %p57 = por %p55, %p56
    %p58 = scmp.ne.s32.totalorder %s46, %s47
    %p59 = scmp.eq.s32.totalorder %s16, 1
    %p60 = por %p58, %p59
    %p62 = scmp.ne.s32.totalorder %s47, %s61
    %p63 = scmp.eq.s32.totalorder %s16, 0
    %p64 = por %p62, %p63
    %s66 = sadd.s32 %s65, 1
    %p69 = scmp.eq.s32.totalorder %s10, 1
    %p70 = scmp.ne.s32.totalorder %s65, %s67
    %p71 = scmp.eq.s32.totalorder %s10, 0
    %p72 = por %p70, %p71
    %p73 = scmp.ne.s32.totalorder %s65, %s67
    %p74 = scmp.eq.s32.totalorder %s15, 1
    %p75 = por %p73, %p74
    %p76 = scmp.ne.s32.totalorder %s67, %s68
    %p77 = scmp.eq.s32.totalorder %s15, 0
    %p78 = por %p76, %p77
    %p79 = scmp.ne.s32.totalorder %s67, %s68
    %p80 = scmp.eq.s32.totalorder %s16, 1
    %p81 = por %p79, %p80
    %p83 = scmp.ne.s32.totalorder %s68, %s82
    %p84 = scmp.eq.s32.totalorder %s16, 0
    %p85 = por %p83, %p84
    %s87 = sadd.s32 %s86, 1
    %p90 = scmp.eq.s32.totalorder %s10, 1
    %p91 = scmp.ne.s32.totalorder %s86, %s88
    %p92 = scmp.eq.s32.totalorder %s10, 0
    %p93 = por %p91, %p92
    %p94 = scmp.ne.s32.totalorder %s86, %s88
    %p95 = scmp.eq.s32.totalorder %s15, 1
    %p96 = por %p94, %p95
    %p97 = scmp.ne.s32.totalorder %s88, %s89
    %p98 = scmp.eq.s32.totalorder %s15, 0
    %p99 = por %p97, %p98
    %p100 = scmp.ne.s32.totalorder %s88, %s89
    %p101 = scmp.eq.s32.totalorder %s16, 1
    %p102 = por %p100, %p101
    %p104 = scmp.ne.s32.totalorder %s89, %s103
    %p105 = scmp.eq.s32.totalorder %s16, 0
    %p106 = por %p104, %p105
    %s107 = ssub.s32 %s10, %s17
    %p108 = scmp.eq.s32.totalorder %s107, 0
    %s110 = sadd.s32 %s109, 1
    %s111 = scalar_select %p108, %s109, %s110
    %p114 = pneg %p108
    %p115 = scmp.eq.s32.totalorder %s10, 1
    %p116 = por %p114, %p115
    %p117 = scmp.ne.s32.totalorder %s109, %s112
    %p118 = scmp.eq.s32.totalorder %s10, 0
    %p119 = por %p117, %p118
    %p120 = scmp.ne.s32.totalorder %s109, %s112
    %p121 = scmp.eq.s32.totalorder %s15, 1
    %p122 = por %p120, %p121
    %p123 = scmp.ne.s32.totalorder %s112, %s113
    %p124 = scmp.eq.s32.totalorder %s15, 0
    %p125 = por %p123, %p124
    %p126 = scmp.ne.s32.totalorder %s112, %s113
    %p127 = scmp.eq.s32.totalorder %s16, 1
    %p128 = por %p126, %p127
    %p130 = scmp.ne.s32.totalorder %s113, %s129
    %p131 = scmp.eq.s32.totalorder %s16, 0
    %p132 = por %p130, %p131
    %p133 = scmp.le.s32.totalorder 1, %s10
    %p134 = scmp.lt.s32.totalorder %s10, 3
    %p135 = pnand %p133, %p134
    %p136 = pneg %p135
    // Predicated region
    $region9: #{visible_module_forward.5} parent=5 // pred_check
      _
    $region10: #{visible_module_forward.5} parent=5 // pred_check_branch
      %138 = sbr.rel (%p135) target = $region12
    $region11: #{visible_module_forward.5} parent=5 // pred_region
      %s139 = ssub.s32 %s10, 1
      // Predicated region
      $region13: #{visible_module_forward.5} parent=11 // pred_check
        %p140 = pneg %p57
      $region14: #{visible_module_forward.5} parent=11 // pred_check_branch
        %142 = sbr.rel (%p140) target = $region16
      $region15: #{visible_module_forward.5} parent=11 // pred_region
        _
      $region16: #{visible_module_forward.5} parent=11 // pred_fallthru
        _
      // Predicated region
      $region17: #{visible_module_forward.5} parent=11 // pred_check
        %p143 = pneg %p78
      $region18: #{visible_module_forward.5} parent=11 // pred_check_branch
        %145 = sbr.rel (%p143) target = $region20
      $region19: #{visible_module_forward.5} parent=11 // pred_region
        _
      $region20: #{visible_module_forward.5} parent=11 // pred_fallthru
        _
      // Predicated region
      $region21: #{visible_module_forward.5} parent=11 // pred_check
        %p146 = pneg %p99
      $region22: #{visible_module_forward.5} parent=11 // pred_check_branch
        %148 = sbr.rel (%p146) target = $region24
      $region23: #{visible_module_forward.5} parent=11 // pred_region
        _
      $region24: #{visible_module_forward.5} parent=11 // pred_fallthru
        _
    $region12: #{visible_module_forward.5} parent=5 // pred_fallthru
      _
    %p149 = scmp.lt.s32.totalorder %s10, 2
    // Predicated region
    $region25: #{visible_module_forward.5} parent=5 // pred_check
      %p150 = pneg %p149
    $region26: #{visible_module_forward.5} parent=5 // pred_check_branch
      %152 = sbr.rel (%p150) target = $region28
    $region27: #{visible_module_forward.5} parent=5 // pred_region
      // Predicated region
      $region29: #{visible_module_forward.5} parent=27 // pred_check
        %p153 = pneg %p30
      $region30: #{visible_module_forward.5} parent=27 // pred_check_branch
        %155 = sbr.rel (%p153) target = $region32
      $region31: #{visible_module_forward.5} parent=27 // pred_region
        %s156 = smul.u32 32, %s10
        %p157 = scmp.lt.s32.totalorder %s156, 63
        %s158 = scalar_select %p157, %s156, 63
        %s159 = smul.addr %s158, 2
        %s160 = smul.addr %s159, 4
        %s161 = scalar_lea.vmem %s0, %s160
        %s162 = smul.u32 32, %s10
      $region32: #{visible_module_forward.5} parent=27 // pred_fallthru
        _
    $region28: #{visible_module_forward.5} parent=5 // pred_fallthru
      _
    %p163 = scmp.le.s32.totalorder 1, %s10
    %p164 = scmp.lt.s32.totalorder %s10, 3
    %p165 = pnand %p163, %p164
    %p166 = pneg %p165
    // Predicated region
    $region33: #{visible_module_forward.5} parent=5 // pred_check
      _
    $region34: #{visible_module_forward.5} parent=5 // pred_check_branch
      %168 = sbr.rel (%p165) target = $region36
    $region35: #{visible_module_forward.5} parent=5 // pred_region
      %s169 = ssub.s32 %s10, 1
      %s170 = smul.u32 32, %s15
      %p171 = scmp.lt.s32.totalorder %s170, 63
      %s172 = scalar_select %p171, %s170, 63
      %s173 = smul.addr %s172, 2
      %s174 = smul.addr %s173, 4
      %s175 = scalar_lea.vmem %s0, %s174
      %p176 = pneg %p36
      %p177 = pneg %p33
      %p178 = pneg %p57
      %p179 = pneg %p54
      %p180 = pneg %p78
      %p181 = pneg %p75
      %p182 = pneg %p99
      %p183 = pneg %p96
      %p184 = pneg %p125
      %p185 = pneg %p122
      %s186 = smul.u32 32, %s15
      %p187 = scmp.lt.s32.totalorder %s186, 63
      %s188 = scalar_select %p187, %s186, 63
      %s189 = smul.addr %s188, 4
      %s190 = scalar_lea.vmem %s4, %s189
      %s191 = smul.u32 32, %s15
      %p192 = scmp.lt.s32.totalorder %s191, 63
      %s193 = scalar_select %p192, %s191, 63
      %s194 = smul.addr %s193, 2
      %s195 = smul.addr %s194, 4
      %s196 = scalar_lea.vmem %s0, %s195
      %s197 = smul.u32 32, %s15
      %s198 = smul.u32 32, %s15
      %p199 = scmp.lt.s32.totalorder %s198, 63
      %s200 = scalar_select %p199, %s198, 63
      %s201 = smul.addr %s200, 4
      %s202 = scalar_lea.vmem %s4, %s201
      %s203 = smul.u32 32, %s15
      %v205 = vld [vmem:[%s196] sm:$0xff]
      %v206 = vld [vmem:[%s196 + $0x8] sm:$0xff]
      %v207 = vld [vmem:[%s196 + $0x10] sm:$0xff]
      %v208 = vld [vmem:[%s196 + $0x18] sm:$0xff]
      %v209 = vld [vmem:[%s196 + $0x20] sm:$0xff]
      %v210 = vld [vmem:[%s196 + $0x28] sm:$0xff]
      %v211 = vld [vmem:[%s196 + $0x30] sm:$0xff]
      %v212 = vld [vmem:[%s196 + $0x38] sm:$0xff]
      %v213 = vld [vmem:[%s196 + $0x40] sm:$0xff]
      %v214 = vld [vmem:[%s196 + $0x48] sm:$0xff]
      %v215 = vld [vmem:[%s196 + $0x50] sm:$0xff]
      %v216 = vld [vmem:[%s196 + $0x58] sm:$0xff]
      %v217 = vld [vmem:[%s196 + $0x60] sm:$0xff]
      %v218 = vld [vmem:[%s196 + $0x68] sm:$0xff]
      %v219 = vld [vmem:[%s196 + $0x70] sm:$0xff]
      %v220 = vld [vmem:[%s196 + $0x78] sm:$0xff]
      %v221 = vld [vmem:[%s196 + $0x80] sm:$0xff]
      %v222 = vld [vmem:[%s196 + $0x88] sm:$0xff]
      %v223 = vld [vmem:[%s196 + $0x90] sm:$0xff]
      %v224 = vld [vmem:[%s196 + $0x98] sm:$0xff]
      %v225 = vld [vmem:[%s196 + $0xa0] sm:$0xff]
      %v226 = vld [vmem:[%s196 + $0xa8] sm:$0xff]
      %v227 = vld [vmem:[%s196 + $0xb0] sm:$0xff]
      %v228 = vld [vmem:[%s196 + $0xb8] sm:$0xff]
      %v229 = vld [vmem:[%s196 + $0xc0] sm:$0xff]
      %v230 = vld [vmem:[%s196 + $0xc8] sm:$0xff]
      %v231 = vld [vmem:[%s196 + $0xd0] sm:$0xff]
      %v232 = vld [vmem:[%s196 + $0xd8] sm:$0xff]
      %v233 = vld [vmem:[%s196 + $0xe0] sm:$0xff]
      %v234 = vld [vmem:[%s196 + $0xe8] sm:$0xff]
      %v235 = vld [vmem:[%s196 + $0xf0] sm:$0xff]
      %v236 = vld [vmem:[%s196 + $0xf8] sm:$0xff]
      %v237 = vld [vmem:[%s1] sm:$0xf]
      %v238 = vld [vmem:[%s1 + $0x4] sm:$0xf]
      %v239 = vld [vmem:[%s1 + $0x8] sm:$0xf]
      %v240 = vld [vmem:[%s1 + $0xc] sm:$0xf]
      %v241 = vld [vmem:[%s1 + $0x10] sm:$0xf]
      %v242 = vld [vmem:[%s1 + $0x14] sm:$0xf]
      %v243 = vld [vmem:[%s1 + $0x18] sm:$0xf]
      %v244 = vld [vmem:[%s1 + $0x1c] sm:$0xf]
      %v245 = vld [vmem:[%s1 + $0x20] sm:$0xf]
      %v246 = vld [vmem:[%s1 + $0x24] sm:$0xf]
      %v247 = vld [vmem:[%s1 + $0x28] sm:$0xf]
      %v248 = vld [vmem:[%s1 + $0x2c] sm:$0xf]
      %v249 = vld [vmem:[%s1 + $0x30] sm:$0xf]
      %v250 = vld [vmem:[%s1 + $0x34] sm:$0xf]
      %v251 = vld [vmem:[%s1 + $0x38] sm:$0xf]
      %v252 = vld [vmem:[%s1 + $0x3c] sm:$0xf]
      %v253 = vld [vmem:[%s1 + $0x40] sm:$0xf]
      %v254 = vld [vmem:[%s1 + $0x44] sm:$0xf]
      %v255 = vld [vmem:[%s1 + $0x48] sm:$0xf]
      %v256 = vld [vmem:[%s1 + $0x4c] sm:$0xf]
      %v289 = vunpack.c.l.b16 %v205
      %v290 = vunpack.c.h.b16 %v205
      %v291 = vunpack.c.l.b16 %v206
      %v292 = vunpack.c.h.b16 %v206
      %v293 = vunpack.c.l.b16 %v207
      %v294 = vunpack.c.h.b16 %v207
      %v295 = vunpack.c.l.b16 %v208
      %v296 = vunpack.c.h.b16 %v208
      %v297 = vunpack.c.l.b16 %v209
      %v298 = vunpack.c.h.b16 %v209
      %v299 = vunpack.c.l.b16 %v210
      %v300 = vunpack.c.h.b16 %v210
      %v301 = vunpack.c.l.b16 %v211
      %v302 = vunpack.c.h.b16 %v211
      %v303 = vunpack.c.l.b16 %v212
      %v304 = vunpack.c.h.b16 %v212
      %v305 = vunpack.c.l.b16 %v213
      %v306 = vunpack.c.h.b16 %v213
      %v307 = vunpack.c.l.b16 %v214
      %v308 = vunpack.c.h.b16 %v214
      %v309 = vunpack.c.l.b16 %v215
      %v310 = vunpack.c.h.b16 %v215
      %v311 = vunpack.c.l.b16 %v216
      %v312 = vunpack.c.h.b16 %v216
      %v313 = vunpack.c.l.b16 %v217
      %v314 = vunpack.c.h.b16 %v217
      %v315 = vunpack.c.l.b16 %v218
      %v316 = vunpack.c.h.b16 %v218
      %v317 = vunpack.c.l.b16 %v219
      %v318 = vunpack.c.h.b16 %v219
      %v319 = vunpack.c.l.b16 %v220
      %v320 = vunpack.c.h.b16 %v220
      %v321 = vunpack.c.l.b16 %v221
      %v322 = vunpack.c.h.b16 %v221
      %v323 = vunpack.c.l.b16 %v222
      %v324 = vunpack.c.h.b16 %v222
      %v325 = vunpack.c.l.b16 %v223
      %v326 = vunpack.c.h.b16 %v223
      %v327 = vunpack.c.l.b16 %v224
      %v328 = vunpack.c.h.b16 %v224
      %v329 = vunpack.c.l.b16 %v225
      %v330 = vunpack.c.h.b16 %v225
      %v331 = vunpack.c.l.b16 %v226
      %v332 = vunpack.c.h.b16 %v226
      %v333 = vunpack.c.l.b16 %v227
      %v334 = vunpack.c.h.b16 %v227
      %v335 = vunpack.c.l.b16 %v228
      %v336 = vunpack.c.h.b16 %v228
      %v337 = vunpack.c.l.b16 %v229
      %v338 = vunpack.c.h.b16 %v229
      %v339 = vunpack.c.l.b16 %v230
      %v340 = vunpack.c.h.b16 %v230
      %v341 = vunpack.c.l.b16 %v231
      %v342 = vunpack.c.h.b16 %v231
      %v343 = vunpack.c.l.b16 %v232
      %v344 = vunpack.c.h.b16 %v232
      %v345 = vunpack.c.l.b16 %v233
      %v346 = vunpack.c.h.b16 %v233
      %v347 = vunpack.c.l.b16 %v234
      %v348 = vunpack.c.h.b16 %v234
      %v349 = vunpack.c.l.b16 %v235
      %v350 = vunpack.c.h.b16 %v235
      %v351 = vunpack.c.l.b16 %v236
      %v352 = vunpack.c.h.b16 %v236
      %v353 = vpack.c.b16 %v291, %v289
      %v354 = vpack.c.b16 %v292, %v290
      %v355 = vpack.c.b16 %v295, %v293
      %v356 = vpack.c.b16 %v296, %v294
      %v357 = vpack.c.b16 %v299, %v297
      %v358 = vpack.c.b16 %v300, %v298
      %v359 = vpack.c.b16 %v303, %v301
      %v360 = vpack.c.b16 %v304, %v302
      %v361 = vpack.c.b16 %v307, %v305
      %v362 = vpack.c.b16 %v308, %v306
      %v363 = vpack.c.b16 %v311, %v309
      %v364 = vpack.c.b16 %v312, %v310
      %v365 = vpack.c.b16 %v315, %v313
      %v366 = vpack.c.b16 %v316, %v314
      %v367 = vpack.c.b16 %v319, %v317
      %v368 = vpack.c.b16 %v320, %v318
      %v369 = vpack.c.b16 %v323, %v321
      %v370 = vpack.c.b16 %v324, %v322
      %v371 = vpack.c.b16 %v327, %v325
      %v372 = vpack.c.b16 %v328, %v326
      %v373 = vpack.c.b16 %v331, %v329
      %v374 = vpack.c.b16 %v332, %v330
      %v375 = vpack.c.b16 %v335, %v333
      %v376 = vpack.c.b16 %v336, %v334
      %v377 = vpack.c.b16 %v339, %v337
      %v378 = vpack.c.b16 %v340, %v338
      %v379 = vpack.c.b16 %v343, %v341
      %v380 = vpack.c.b16 %v344, %v342
      %v381 = vpack.c.b16 %v347, %v345
      %v382 = vpack.c.b16 %v348, %v346
      %v383 = vpack.c.b16 %v351, %v349
      %v384 = vpack.c.b16 %v352, %v350
      %v421 = vunpack.c.l.b16 %v237
      %v422 = vunpack.c.l.b16 %v238
      %v423 = vunpack.c.l.b16 %v239
      %v424 = vunpack.c.l.b16 %v240
      %v425 = vunpack.c.l.b16 %v241
      %v426 = vunpack.c.l.b16 %v242
      %v427 = vunpack.c.l.b16 %v243
      %v428 = vunpack.c.l.b16 %v244
      %v429 = vunpack.c.l.b16 %v245
      %v430 = vunpack.c.l.b16 %v246
      %v431 = vunpack.c.l.b16 %v247
      %v432 = vunpack.c.l.b16 %v248
      %v433 = vunpack.c.l.b16 %v249
      %v434 = vunpack.c.l.b16 %v250
      %v435 = vunpack.c.l.b16 %v251
      %v436 = vunpack.c.l.b16 %v252
      %v437 = vunpack.c.l.b16 %v253
      %v438 = vunpack.c.l.b16 %v254
      %v439 = vunpack.c.l.b16 %v255
      %v440 = vunpack.c.l.b16 %v256
      %v441 = vpack.c.b16 %v422, %v421
      %v442 = vpack.c.b16 %v424, %v423
      %v443 = vpack.c.b16 %v426, %v425
      %v444 = vpack.c.b16 %v428, %v427
      %v445 = vpack.c.b16 %v430, %v429
      %v446 = vpack.c.b16 %v432, %v431
      %v447 = vpack.c.b16 %v434, %v433
      %v448 = vpack.c.b16 %v436, %v435
      %v449 = vpack.c.b16 %v438, %v437
      %v450 = vpack.c.b16 %v440, %v439
      %vm461 = vcmask 261120
      %v463 = vsel %vm461, %v354, 0
      %v466 = vsel %vm461, %v356, 0
      %v469 = vsel %vm461, %v358, 0
      %v472 = vsel %vm461, %v360, 0
      %v475 = vsel %vm461, %v362, 0
      %v478 = vsel %vm461, %v364, 0
      %v481 = vsel %vm461, %v366, 0
      %v484 = vsel %vm461, %v368, 0
      %v487 = vsel %vm461, %v370, 0
      %v490 = vsel %vm461, %v372, 0
      %v493 = vsel %vm461, %v374, 0
      %v496 = vsel %vm461, %v376, 0
      %v499 = vsel %vm461, %v378, 0
      %v502 = vsel %vm461, %v380, 0
      %v505 = vsel %vm461, %v382, 0
      %v508 = vsel %vm461, %v384, 0
      %510 = vmatpush.bf16.msra.mxu0 %v448
      %511 = vmatpush.bf16.msra.mxu0 %v447
      %512 = vmatpush.bf16.msra.mxu0 %v446
      %513 = vmatpush.bf16.msra.mxu0 %v445
      %514 = vmatpush.bf16.msra.mxu0 %v444
      %515 = vmatpush.bf16.msra.mxu0 %v443
      %516 = vmatpush.bf16.msra.mxu0 %v442
      %517 = vmatpush.bf16.msra.mxu0 %v441
      %518 = vmatmul.bf16.gmra.mxu0 %v353
      %v519 = vpop.f32.mrf.mxu0
      %v520 = vadd.f32 0.0, %v519
      %v521 = vpop.f32.mrf.mxu0
      %v522 = vadd.f32 0.0, %v521
      %523 = vmatmul.bf16.gmra.mxu0 %v355
      %v524 = vpop.f32.mrf.mxu0
      %v525 = vadd.f32 0.0, %v524
      %v526 = vpop.f32.mrf.mxu0
      %v527 = vadd.f32 0.0, %v526
      %528 = vmatmul.bf16.gmra.mxu0 %v357
      %v529 = vpop.f32.mrf.mxu0
      %v530 = vadd.f32 0.0, %v529
      %v531 = vpop.f32.mrf.mxu0
      %v532 = vadd.f32 0.0, %v531
      %533 = vmatmul.bf16.gmra.mxu0 %v359
      %v534 = vpop.f32.mrf.mxu0
      %v535 = vadd.f32 0.0, %v534
      %v536 = vpop.f32.mrf.mxu0
      %v537 = vadd.f32 0.0, %v536
      %538 = vmatmul.bf16.gmra.mxu0 %v361
      %v539 = vpop.f32.mrf.mxu0
      %v540 = vadd.f32 0.0, %v539
      %v541 = vpop.f32.mrf.mxu0
      %v542 = vadd.f32 0.0, %v541
      %543 = vmatmul.bf16.gmra.mxu0 %v363
      %v544 = vpop.f32.mrf.mxu0
      %v545 = vadd.f32 0.0, %v544
      %v546 = vpop.f32.mrf.mxu0
      %v547 = vadd.f32 0.0, %v546
      %548 = vmatmul.bf16.gmra.mxu0 %v365
      %v549 = vpop.f32.mrf.mxu0
      %v550 = vadd.f32 0.0, %v549
      %v551 = vpop.f32.mrf.mxu0
      %v552 = vadd.f32 0.0, %v551
      %553 = vmatmul.bf16.gmra.mxu0 %v367
      %v554 = vpop.f32.mrf.mxu0
      %v555 = vadd.f32 0.0, %v554
      %v556 = vpop.f32.mrf.mxu0
      %v557 = vadd.f32 0.0, %v556
      %558 = vmatmul.bf16.gmra.mxu0 %v369
      %v559 = vpop.f32.mrf.mxu0
      %v560 = vadd.f32 0.0, %v559
      %v561 = vpop.f32.mrf.mxu0
      %v562 = vadd.f32 0.0, %v561
      %563 = vmatmul.bf16.gmra.mxu0 %v371
      %v564 = vpop.f32.mrf.mxu0
      %v565 = vadd.f32 0.0, %v564
      %v566 = vpop.f32.mrf.mxu0
      %v567 = vadd.f32 0.0, %v566
      %568 = vmatmul.bf16.gmra.mxu0 %v373
      %v569 = vpop.f32.mrf.mxu0
      %v570 = vadd.f32 0.0, %v569
      %v571 = vpop.f32.mrf.mxu0
      %v572 = vadd.f32 0.0, %v571
      %573 = vmatmul.bf16.gmra.mxu0 %v375
      %v574 = vpop.f32.mrf.mxu0
      %v575 = vadd.f32 0.0, %v574
      %v576 = vpop.f32.mrf.mxu0
      %v577 = vadd.f32 0.0, %v576
      %578 = vmatmul.bf16.gmra.mxu0 %v377
      %v579 = vpop.f32.mrf.mxu0
      %v580 = vadd.f32 0.0, %v579
      %v581 = vpop.f32.mrf.mxu0
      %v582 = vadd.f32 0.0, %v581
      %583 = vmatmul.bf16.gmra.mxu0 %v379
      %v584 = vpop.f32.mrf.mxu0
      %v585 = vadd.f32 0.0, %v584
      %v586 = vpop.f32.mrf.mxu0
      %v587 = vadd.f32 0.0, %v586
      %588 = vmatmul.bf16.gmra.mxu0 %v381
      %v589 = vpop.f32.mrf.mxu0
      %v590 = vadd.f32 0.0, %v589
      %v591 = vpop.f32.mrf.mxu0
      %v592 = vadd.f32 0.0, %v591
      %593 = vmatmul.bf16.gmra.mxu0 %v383
      %v594 = vpop.f32.mrf.mxu0
      %v595 = vadd.f32 0.0, %v594
      %v596 = vpop.f32.mrf.mxu0
      %v597 = vadd.f32 0.0, %v596
      %598 = vdwg.mxu0
      %599 = vmatpush.bf16.msra.mxu0 0
      %600 = vmatpush.bf16.msra.mxu0 0
      %601 = vmatpush.bf16.msra.mxu0 0
      %602 = vmatpush.bf16.msra.mxu0 0
      %603 = vmatpush.bf16.msra.mxu0 0
      %604 = vmatpush.bf16.msra.mxu0 0
      %605 = vmatpush.bf16.msra.mxu0 %v450
      %606 = vmatpush.bf16.msra.mxu0 %v449
      %607 = vmatmul.bf16.gmra.mxu0 %v463
      %v608 = vpop.f32.mrf.mxu0
      %v609 = vadd.f32 %v520, %v608
      %v610 = vpop.f32.mrf.mxu0
      %v611 = vadd.f32 %v522, %v610
      %612 = vmatmul.bf16.gmra.mxu0 %v466
      %v613 = vpop.f32.mrf.mxu0
      %v614 = vadd.f32 %v525, %v613
      %v615 = vpop.f32.mrf.mxu0
      %v616 = vadd.f32 %v527, %v615
      %617 = vmatmul.bf16.gmra.mxu0 %v469
      %v618 = vpop.f32.mrf.mxu0
      %v619 = vadd.f32 %v530, %v618
      %v620 = vpop.f32.mrf.mxu0
      %v621 = vadd.f32 %v532, %v620
      %622 = vmatmul.bf16.gmra.mxu0 %v472
      %v623 = vpop.f32.mrf.mxu0
      %v624 = vadd.f32 %v535, %v623
      %v625 = vpop.f32.mrf.mxu0
      %v626 = vadd.f32 %v537, %v625
      %627 = vmatmul.bf16.gmra.mxu0 %v475
      %v628 = vpop.f32.mrf.mxu0
      %v629 = vadd.f32 %v540, %v628
      %v630 = vpop.f32.mrf.mxu0
      %v631 = vadd.f32 %v542, %v630
      %632 = vmatmul.bf16.gmra.mxu0 %v478
      %v633 = vpop.f32.mrf.mxu0
      %v634 = vadd.f32 %v545, %v633
      %v635 = vpop.f32.mrf.mxu0
      %v636 = vadd.f32 %v547, %v635
      %637 = vmatmul.bf16.gmra.mxu0 %v481
      %v638 = vpop.f32.mrf.mxu0
      %v639 = vadd.f32 %v550, %v638
      %v640 = vpop.f32.mrf.mxu0
      %v641 = vadd.f32 %v552, %v640
      %642 = vmatmul.bf16.gmra.mxu0 %v484
      %v643 = vpop.f32.mrf.mxu0
      %v644 = vadd.f32 %v555, %v643
      %v645 = vpop.f32.mrf.mxu0
      %v646 = vadd.f32 %v557, %v645
      %647 = vmatmul.bf16.gmra.mxu0 %v487
      %v648 = vpop.f32.mrf.mxu0
      %v649 = vadd.f32 %v560, %v648
      %v650 = vpop.f32.mrf.mxu0
      %v651 = vadd.f32 %v562, %v650
      %652 = vmatmul.bf16.gmra.mxu0 %v490
      %v653 = vpop.f32.mrf.mxu0
      %v654 = vadd.f32 %v565, %v653
      %v655 = vpop.f32.mrf.mxu0
      %v656 = vadd.f32 %v567, %v655
      %657 = vmatmul.bf16.gmra.mxu0 %v493
      %v658 = vpop.f32.mrf.mxu0
      %v659 = vadd.f32 %v570, %v658
      %v660 = vpop.f32.mrf.mxu0
      %v661 = vadd.f32 %v572, %v660
      %662 = vmatmul.bf16.gmra.mxu0 %v496
      %v663 = vpop.f32.mrf.mxu0
      %v664 = vadd.f32 %v575, %v663
      %v665 = vpop.f32.mrf.mxu0
      %v666 = vadd.f32 %v577, %v665
      %667 = vmatmul.bf16.gmra.mxu0 %v499
      %v668 = vpop.f32.mrf.mxu0
      %v669 = vadd.f32 %v580, %v668
      %v670 = vpop.f32.mrf.mxu0
      %v671 = vadd.f32 %v582, %v670
      %672 = vmatmul.bf16.gmra.mxu0 %v502
      %v673 = vpop.f32.mrf.mxu0
      %v674 = vadd.f32 %v585, %v673
      %v675 = vpop.f32.mrf.mxu0
      %v676 = vadd.f32 %v587, %v675
      %677 = vmatmul.bf16.gmra.mxu0 %v505
      %v678 = vpop.f32.mrf.mxu0
      %v679 = vadd.f32 %v590, %v678
      %v680 = vpop.f32.mrf.mxu0
      %v681 = vadd.f32 %v592, %v680
      %682 = vmatmul.bf16.gmra.mxu0 %v508
      %v683 = vpop.f32.mrf.mxu0
      %v684 = vadd.f32 %v595, %v683
      %v685 = vpop.f32.mrf.mxu0
      %v686 = vadd.f32 %v597, %v685
      %687 = vdwg.mxu0
      %v688 = vld [vmem:[%s2] sm:$0x1]
      %v690 = vperm.slane %v688, 0
      %v692 = vmul.f32 %v609, %v690
      %v693 = vmul.f32 %v611, %v690
      %v694 = vmul.f32 %v614, %v690
      %v695 = vmul.f32 %v616, %v690
      %v696 = vmul.f32 %v619, %v690
      %v697 = vmul.f32 %v621, %v690
      %v698 = vmul.f32 %v624, %v690
      %v699 = vmul.f32 %v626, %v690
      %v700 = vmul.f32 %v629, %v690
      %v701 = vmul.f32 %v631, %v690
      %v702 = vmul.f32 %v634, %v690
      %v703 = vmul.f32 %v636, %v690
      %v704 = vmul.f32 %v639, %v690
      %v705 = vmul.f32 %v641, %v690
      %v706 = vmul.f32 %v644, %v690
      %v707 = vmul.f32 %v646, %v690
      %v708 = vmul.f32 %v649, %v690
      %v709 = vmul.f32 %v651, %v690
      %v710 = vmul.f32 %v654, %v690
      %v711 = vmul.f32 %v656, %v690
      %v712 = vmul.f32 %v659, %v690
      %v713 = vmul.f32 %v661, %v690
      %v714 = vmul.f32 %v664, %v690
      %v715 = vmul.f32 %v666, %v690
      %v716 = vmul.f32 %v669, %v690
      %v717 = vmul.f32 %v671, %v690
      %v718 = vmul.f32 %v674, %v690
      %v719 = vmul.f32 %v676, %v690
      %v720 = vmul.f32 %v679, %v690
      %v721 = vmul.f32 %v681, %v690
      %v722 = vmul.f32 %v684, %v690
      %v723 = vmul.f32 %v686, %v690
      %v724 = vld [vmem:[%s3] sm:$0x1]
      %v726 = vperm.slane %v724, 0
      %v728 = vadd.f32 %v692, %v726
      %v729 = vadd.f32 %v693, %v726
      %v730 = vadd.f32 %v694, %v726
      %v731 = vadd.f32 %v695, %v726
      %v732 = vadd.f32 %v696, %v726
      %v733 = vadd.f32 %v697, %v726
      %v734 = vadd.f32 %v698, %v726
      %v735 = vadd.f32 %v699, %v726
      %v736 = vadd.f32 %v700, %v726
      %v737 = vadd.f32 %v701, %v726
      %v738 = vadd.f32 %v702, %v726
      %v739 = vadd.f32 %v703, %v726
      %v740 = vadd.f32 %v704, %v726
      %v741 = vadd.f32 %v705, %v726
      %v742 = vadd.f32 %v706, %v726
      %v743 = vadd.f32 %v707, %v726
      %v744 = vadd.f32 %v708, %v726
      %v745 = vadd.f32 %v709, %v726
      %v746 = vadd.f32 %v710, %v726
      %v747 = vadd.f32 %v711, %v726
      %v748 = vadd.f32 %v712, %v726
      %v749 = vadd.f32 %v713, %v726
      %v750 = vadd.f32 %v714, %v726
      %v751 = vadd.f32 %v715, %v726
      %v752 = vadd.f32 %v716, %v726
      %v753 = vadd.f32 %v717, %v726
      %v754 = vadd.f32 %v718, %v726
      %v755 = vadd.f32 %v719, %v726
      %v756 = vadd.f32 %v720, %v726
      %v757 = vadd.f32 %v721, %v726
      %v758 = vadd.f32 %v722, %v726
      %v759 = vadd.f32 %v723, %v726
      %v760 = vmax.f32 %v728, 0.0
      %v761 = vmax.f32 %v729, 0.0
      %v762 = vmax.f32 %v730, 0.0
      %v763 = vmax.f32 %v731, 0.0
      %v764 = vmax.f32 %v732, 0.0
      %v765 = vmax.f32 %v733, 0.0
      %v766 = vmax.f32 %v734, 0.0
      %v767 = vmax.f32 %v735, 0.0
      %v768 = vmax.f32 %v736, 0.0
      %v769 = vmax.f32 %v737, 0.0
      %v770 = vmax.f32 %v738, 0.0
      %v771 = vmax.f32 %v739, 0.0
      %v772 = vmax.f32 %v740, 0.0
      %v773 = vmax.f32 %v741, 0.0
      %v774 = vmax.f32 %v742, 0.0
      %v775 = vmax.f32 %v743, 0.0
      %v776 = vmax.f32 %v744, 0.0
      %v777 = vmax.f32 %v745, 0.0
      %v778 = vmax.f32 %v746, 0.0
      %v779 = vmax.f32 %v747, 0.0
      %v780 = vmax.f32 %v748, 0.0
      %v781 = vmax.f32 %v749, 0.0
      %v782 = vmax.f32 %v750, 0.0
      %v783 = vmax.f32 %v751, 0.0
      %v784 = vmax.f32 %v752, 0.0
      %v785 = vmax.f32 %v753, 0.0
      %v786 = vmax.f32 %v754, 0.0
      %v787 = vmax.f32 %v755, 0.0
      %v788 = vmax.f32 %v756, 0.0
      %v789 = vmax.f32 %v757, 0.0
      %v790 = vmax.f32 %v758, 0.0
      %v791 = vmax.f32 %v759, 0.0
      %v792 = vpack.c.bf16 %v760, %v760
      %v793 = vpack.c.bf16 %v761, %v761
      %v794 = vpack.c.bf16 %v762, %v762
      %v795 = vpack.c.bf16 %v763, %v763
      %v796 = vpack.c.bf16 %v764, %v764
      %v797 = vpack.c.bf16 %v765, %v765
      %v798 = vpack.c.bf16 %v766, %v766
      %v799 = vpack.c.bf16 %v767, %v767
      %v800 = vpack.c.bf16 %v768, %v768
      %v801 = vpack.c.bf16 %v769, %v769
      %v802 = vpack.c.bf16 %v770, %v770
      %v803 = vpack.c.bf16 %v771, %v771
      %v804 = vpack.c.bf16 %v772, %v772
      %v805 = vpack.c.bf16 %v773, %v773
      %v806 = vpack.c.bf16 %v774, %v774
      %v807 = vpack.c.bf16 %v775, %v775
      %v808 = vpack.c.bf16 %v776, %v776
      %v809 = vpack.c.bf16 %v777, %v777
      %v810 = vpack.c.bf16 %v778, %v778
      %v811 = vpack.c.bf16 %v779, %v779
      %v812 = vpack.c.bf16 %v780, %v780
      %v813 = vpack.c.bf16 %v781, %v781
      %v814 = vpack.c.bf16 %v782, %v782
      %v815 = vpack.c.bf16 %v783, %v783
      %v816 = vpack.c.bf16 %v784, %v784
      %v817 = vpack.c.bf16 %v785, %v785
      %v818 = vpack.c.bf16 %v786, %v786
      %v819 = vpack.c.bf16 %v787, %v787
      %v820 = vpack.c.bf16 %v788, %v788
      %v821 = vpack.c.bf16 %v789, %v789
      %v822 = vpack.c.bf16 %v790, %v790
      %v823 = vpack.c.bf16 %v791, %v791
      %824 = vst [vmem:[%s202] sm:$0xf] %v792
      %825 = vst [vmem:[%s202 + $0x4] sm:$0xf] %v793
      %826 = vst [vmem:[%s202 + $0x8] sm:$0xf] %v794
      %827 = vst [vmem:[%s202 + $0xc] sm:$0xf] %v795
      %828 = vst [vmem:[%s202 + $0x10] sm:$0xf] %v796
      %829 = vst [vmem:[%s202 + $0x14] sm:$0xf] %v797
      %830 = vst [vmem:[%s202 + $0x18] sm:$0xf] %v798
      %831 = vst [vmem:[%s202 + $0x1c] sm:$0xf] %v799
      %832 = vst [vmem:[%s202 + $0x20] sm:$0xf] %v800
      %833 = vst [vmem:[%s202 + $0x24] sm:$0xf] %v801
      %834 = vst [vmem:[%s202 + $0x28] sm:$0xf] %v802
      %835 = vst [vmem:[%s202 + $0x2c] sm:$0xf] %v803
      %836 = vst [vmem:[%s202 + $0x30] sm:$0xf] %v804
      %837 = vst [vmem:[%s202 + $0x34] sm:$0xf] %v805
      %838 = vst [vmem:[%s202 + $0x38] sm:$0xf] %v806
      %839 = vst [vmem:[%s202 + $0x3c] sm:$0xf] %v807
      %840 = vst [vmem:[%s202 + $0x40] sm:$0xf] %v808
      %841 = vst [vmem:[%s202 + $0x44] sm:$0xf] %v809
      %842 = vst [vmem:[%s202 + $0x48] sm:$0xf] %v810
      %843 = vst [vmem:[%s202 + $0x4c] sm:$0xf] %v811
      %844 = vst [vmem:[%s202 + $0x50] sm:$0xf] %v812
      %845 = vst [vmem:[%s202 + $0x54] sm:$0xf] %v813
      %846 = vst [vmem:[%s202 + $0x58] sm:$0xf] %v814
      %847 = vst [vmem:[%s202 + $0x5c] sm:$0xf] %v815
      %848 = vst [vmem:[%s202 + $0x60] sm:$0xf] %v816
      %849 = vst [vmem:[%s202 + $0x64] sm:$0xf] %v817
      %850 = vst [vmem:[%s202 + $0x68] sm:$0xf] %v818
      %851 = vst [vmem:[%s202 + $0x6c] sm:$0xf] %v819
      %852 = vst [vmem:[%s202 + $0x70] sm:$0xf] %v820
      %853 = vst [vmem:[%s202 + $0x74] sm:$0xf] %v821
      %854 = vst [vmem:[%s202 + $0x78] sm:$0xf] %v822
      %855 = vst [vmem:[%s202 + $0x7c] sm:$0xf] %v823
      %s856 = smul.u32 32, %s15
      %p857 = scmp.lt.s32.totalorder %s856, 63
      %s858 = scalar_select %p857, %s856, 63
      %s859 = smul.addr %s858, 4
      %s860 = scalar_lea.vmem %s4, %s859
      // Predicated region
      $region37: #{visible_module_forward.5} parent=35 // pred_check
        %p861 = pneg %p122
      $region38: #{visible_module_forward.5} parent=35 // pred_check_branch
        %863 = sbr.rel (%p861) target = $region40
      $region39: #{visible_module_forward.5} parent=35 // pred_region
        %s864 = smul.u32 32, %s15
      $region40: #{visible_module_forward.5} parent=35 // pred_fallthru
        _
    $region36: #{visible_module_forward.5} parent=5 // pred_fallthru
      _
    %p865 = scmp.le.s32.totalorder 2, %s10
    // Predicated region
    $region41: #{visible_module_forward.5} parent=5 // pred_check
      %p866 = pneg %p865
    $region42: #{visible_module_forward.5} parent=5 // pred_check_branch
      %868 = sbr.rel (%p866) target = $region44
    $region43: #{visible_module_forward.5} parent=5 // pred_region
      %s869 = ssub.s32 %s10, 2
      // Predicated region
      $region45: #{visible_module_forward.5} parent=43 // pred_check
        %p870 = pneg %p128
      $region46: #{visible_module_forward.5} parent=43 // pred_check_branch
        %872 = sbr.rel (%p870) target = $region48
      $region47: #{visible_module_forward.5} parent=43 // pred_region
        %s873 = smul.u32 32, %s16
        %p874 = scmp.lt.s32.totalorder %s873, 63
        %s875 = scalar_select %p874, %s873, 63
        %s876 = smul.addr %s875, 4
        %s877 = scalar_lea.vmem %s4, %s876
      $region48: #{visible_module_forward.5} parent=43 // pred_fallthru
        _
    $region44: #{visible_module_forward.5} parent=5 // pred_fallthru
      _
  $region6: #{visible_module_forward.5} parent=0 // loop_footer
    %s14 = sadd.s32 1, %s10
  $region7: #{visible_module_forward.5} parent=0 // loop_footer_branch
    %9 = sbr.rel target = $region3
  $region8: #{visible_module_forward.5} parent=0 // loop_exit
    _

// kernel: visible_module_forward.6
$region0: #{visible_module_forward.6}
  #allocation0 [shape = 'u32[]', space=smem, size = 0x4, offset = 0x4, fixed_abs, tag = 'smem constant byte address 0x4 - core index']
  #allocation1 [shape = 'u32[72,128]{1,0:T(1,128)}', space=vmem, size = 0x9000, scoped, tag = 'internal scratch']
  %s0 = inlined_call_operand.vmem [shape: bf16[2,18,18,128], index: 0, kind: input, shape index: {}]
  %s1 = inlined_call_operand.vmem [shape: bf16[2,8,16,128], index: 1, kind: output, shape index: {}]
  %s2 = sld [smem:[#allocation0]]
  $region37: #{visible_module_forward.6} parent=0
    _
  %s4 = ssub.s32 1, %s2
  %s5 = scalar_select 0, %s4, %s2
  loop: start=0, step=1, limit=4
  $region2: #{visible_module_forward.6} parent=0 // loop_pre_header
    _
  $region3: #{visible_module_forward.6} parent=0 // loop_header
    %s7 = sphi 0, %s11
    %p8 = scmp.ge.s32.totalorder %s7, 4
    %s17 = sphi 0, %s19
    %s20 = sphi 0, %s17
    %s21 = sphi 0, %s20
    %s37 = sphi 0, %s21
    %s43 = sphi 0, %s45
    %s46 = sphi 0, %s43
    %s47 = sphi 0, %s46
    %s63 = sphi 0, %s47
  $region4: #{visible_module_forward.6} parent=0 // loop_header_branch
    %10 = sbr.rel (%p8) target = $region8
  $region5: #{visible_module_forward.6} parent=0 // loop_body
    %s12 = ssub.s32 %s7, 1
    %s13 = ssub.s32 %s7, 2
    %s14 = sadd.s32 %s7, 1
    %s15 = ssub.s32 %s7, %s14
    %p16 = scmp.eq.s32.totalorder %s15, 0
    %s18 = sadd.s32 %s17, 1
    %s19 = scalar_select %p16, %s17, %s18
    %p22 = pneg %p16
    %p23 = scmp.eq.s32.totalorder %s7, 1
    %p24 = por %p22, %p23
    %p25 = scmp.ne.s32.totalorder %s17, %s20
    %p26 = scmp.eq.s32.totalorder %s7, 0
    %p27 = por %p25, %p26
    %p28 = scmp.ne.s32.totalorder %s17, %s20
    %p29 = scmp.eq.s32.totalorder %s12, 1
    %p30 = por %p28, %p29
    %p31 = scmp.ne.s32.totalorder %s20, %s21
    %p32 = scmp.eq.s32.totalorder %s12, 0
    %p33 = por %p31, %p32
    %p34 = scmp.ne.s32.totalorder %s20, %s21
    %p35 = scmp.eq.s32.totalorder %s13, 1
    %p36 = por %p34, %p35
    %p38 = scmp.ne.s32.totalorder %s21, %s37
    %p39 = scmp.eq.s32.totalorder %s13, 0
    %p40 = por %p38, %p39
    %s41 = ssub.s32 %s7, %s14
    %p42 = scmp.eq.s32.totalorder %s41, 0
    %s44 = sadd.s32 %s43, 1
    %s45 = scalar_select %p42, %s43, %s44
    %p48 = pneg %p42
    %p49 = scmp.eq.s32.totalorder %s7, 1
    %p50 = por %p48, %p49
    %p51 = scmp.ne.s32.totalorder %s43, %s46
    %p52 = scmp.eq.s32.totalorder %s7, 0
    %p53 = por %p51, %p52
    %p54 = scmp.ne.s32.totalorder %s43, %s46
    %p55 = scmp.eq.s32.totalorder %s12, 1
    %p56 = por %p54, %p55
    %p57 = scmp.ne.s32.totalorder %s46, %s47
    %p58 = scmp.eq.s32.totalorder %s12, 0
    %p59 = por %p57, %p58
    %p60 = scmp.ne.s32.totalorder %s46, %s47
    %p61 = scmp.eq.s32.totalorder %s13, 1
    %p62 = por %p60, %p61
    %p64 = scmp.ne.s32.totalorder %s47, %s63
    %p65 = scmp.eq.s32.totalorder %s13, 0
    %p66 = por %p64, %p65
    %p67 = scmp.le.s32.totalorder 1, %s7
    %p68 = scmp.lt.s32.totalorder %s7, 3
    %p69 = pnand %p67, %p68
    %p70 = pneg %p69
    // Predicated region
    $region9: #{visible_module_forward.6} parent=5 // pred_check
      _
    $region10: #{visible_module_forward.6} parent=5 // pred_check_branch
      %72 = sbr.rel (%p69) target = $region12
    $region11: #{visible_module_forward.6} parent=5 // pred_region
      %s73 = ssub.s32 %s7, 1
    $region12: #{visible_module_forward.6} parent=5 // pred_fallthru
      _
    %p74 = scmp.lt.s32.totalorder %s7, 2
    // Predicated region
    $region13: #{visible_module_forward.6} parent=5 // pred_check
      %p75 = pneg %p74
    $region14: #{visible_module_forward.6} parent=5 // pred_check_branch
      %77 = sbr.rel (%p75) target = $region16
    $region15: #{visible_module_forward.6} parent=5 // pred_region
      // Predicated region
      $region17: #{visible_module_forward.6} parent=15 // pred_check
        %p78 = pneg %p27
      $region18: #{visible_module_forward.6} parent=15 // pred_check_branch
        %80 = sbr.rel (%p78) target = $region20
      $region19: #{visible_module_forward.6} parent=15 // pred_region
        %p81 = scmp.lt.s32.totalorder %s7, 1
        %s82 = scalar_select %p81, %s7, 1
        %s83 = smul.addr %s82, 54
        %s84 = smul.addr %s83, 4
        %s85 = scalar_lea.vmem %s0, %s84
      $region20: #{visible_module_forward.6} parent=15 // pred_fallthru
        _
    $region16: #{visible_module_forward.6} parent=5 // pred_fallthru
      _
    %p86 = scmp.le.s32.totalorder 1, %s7
    %p87 = scmp.lt.s32.totalorder %s7, 3
    %p88 = pnand %p86, %p87
    %p89 = pneg %p88
    // Predicated region
    $region21: #{visible_module_forward.6} parent=5 // pred_check
      _
    $region22: #{visible_module_forward.6} parent=5 // pred_check_branch
      %91 = sbr.rel (%p88) target = $region24
    $region23: #{visible_module_forward.6} parent=5 // pred_region
      %s92 = ssub.s32 %s7, 1
      %p93 = scmp.lt.s32.totalorder %s12, 1
      %s94 = scalar_select %p93, %s12, 1
      %s95 = smul.addr %s94, 54
      %s96 = smul.addr %s95, 4
      %s97 = scalar_lea.vmem %s0, %s96
      %p98 = pneg %p33
      %p99 = pneg %p30
      %p100 = pneg %p59
      %p101 = pneg %p56
      %p102 = scmp.lt.s32.totalorder %s12, 1
      %s103 = scalar_select %p102, %s12, 1
      %s104 = smul.addr %s103, 16
      %s105 = smul.addr %s104, 4
      %s106 = scalar_lea.vmem %s1, %s105
      %p107 = scmp.lt.s32.totalorder %s12, 1
      %s108 = scalar_select %p107, %s12, 1
      %s109 = smul.addr %s108, 54
      %s110 = smul.addr %s109, 4
      %s111 = scalar_lea.vmem %s0, %s110
      %p112 = scmp.lt.s32.totalorder %s12, 1
      %s113 = scalar_select %p112, %s12, 1
      %s114 = smul.addr %s113, 16
      %s115 = smul.addr %s114, 4
      %s116 = scalar_lea.vmem %s1, %s115
      %v117 = vld [vmem:[%s111] sm:$0xf]
      %v118 = vld [vmem:[%s111 + $0x4] sm:$0xf]
      %v119 = vld [vmem:[%s111 + $0x8] sm:$0x1]
      %v120 = vld [vmem:[%s111 + $0xc] sm:$0xf]
      %v121 = vld [vmem:[%s111 + $0x10] sm:$0xf]
      %v122 = vld [vmem:[%s111 + $0x14] sm:$0x1]
      %v123 = vld [vmem:[%s111 + $0x18] sm:$0xf]
      %v124 = vld [vmem:[%s111 + $0x1c] sm:$0xf]
      %v125 = vld [vmem:[%s111 + $0x20] sm:$0x1]
      %v126 = vld [vmem:[%s111 + $0x24] sm:$0xf]
      %v127 = vld [vmem:[%s111 + $0x28] sm:$0xf]
      %v128 = vld [vmem:[%s111 + $0x2c] sm:$0x1]
      %v129 = vld [vmem:[%s111 + $0x30] sm:$0xf]
      %v130 = vld [vmem:[%s111 + $0x34] sm:$0xf]
      %v131 = vld [vmem:[%s111 + $0x38] sm:$0x1]
      %v132 = vld [vmem:[%s111 + $0x3c] sm:$0xf]
      %v133 = vld [vmem:[%s111 + $0x40] sm:$0xf]
      %v134 = vld [vmem:[%s111 + $0x44] sm:$0x1]
      %v135 = vld [vmem:[%s111 + $0x48] sm:$0xf]
      %v136 = vld [vmem:[%s111 + $0x4c] sm:$0xf]
      %v137 = vld [vmem:[%s111 + $0x50] sm:$0x1]
      %v138 = vld [vmem:[%s111 + $0x54] sm:$0xf]
      %v139 = vld [vmem:[%s111 + $0x58] sm:$0xf]
      %v140 = vld [vmem:[%s111 + $0x5c] sm:$0x1]
      %v141 = vld [vmem:[%s111 + $0x60] sm:$0xf]
      %v142 = vld [vmem:[%s111 + $0x64] sm:$0xf]
      %v143 = vld [vmem:[%s111 + $0x68] sm:$0x1]
      %v144 = vld [vmem:[%s111 + $0x6c] sm:$0xf]
      %v145 = vld [vmem:[%s111 + $0x70] sm:$0xf]
      %v146 = vld [vmem:[%s111 + $0x74] sm:$0x1]
      %v147 = vld [vmem:[%s111 + $0x78] sm:$0xf]
      %v148 = vld [vmem:[%s111 + $0x7c] sm:$0xf]
      %v149 = vld [vmem:[%s111 + $0x80] sm:$0x1]
      %v150 = vld [vmem:[%s111 + $0x84] sm:$0xf]
      %v151 = vld [vmem:[%s111 + $0x88] sm:$0xf]
      %v152 = vld [vmem:[%s111 + $0x8c] sm:$0x1]
      %v153 = vld [vmem:[%s111 + $0x90] sm:$0xf]
      %v154 = vld [vmem:[%s111 + $0x94] sm:$0xf]
      %v155 = vld [vmem:[%s111 + $0x98] sm:$0x1]
      %v156 = vld [vmem:[%s111 + $0x9c] sm:$0xf]
      %v157 = vld [vmem:[%s111 + $0xa0] sm:$0xf]
      %v158 = vld [vmem:[%s111 + $0xa4] sm:$0x1]
      %v159 = vld [vmem:[%s111 + $0xa8] sm:$0xf]
      %v160 = vld [vmem:[%s111 + $0xac] sm:$0xf]
      %v161 = vld [vmem:[%s111 + $0xb0] sm:$0x1]
      %v162 = vld [vmem:[%s111 + $0xb4] sm:$0xf]
      %v163 = vld [vmem:[%s111 + $0xb8] sm:$0xf]
      %v164 = vld [vmem:[%s111 + $0xbc] sm:$0x1]
      %v165 = vld [vmem:[%s111 + $0xc0] sm:$0xf]
      %v166 = vld [vmem:[%s111 + $0xc4] sm:$0xf]
      %v167 = vld [vmem:[%s111 + $0xc8] sm:$0x1]
      %v168 = vunpack.c.l.bf16 %v117
      %v169 = vunpack.c.l.bf16 %v118
      %v170 = vunpack.c.l.bf16 %v119
      %v171 = vunpack.c.l.bf16 %v123
      %v172 = vunpack.c.l.bf16 %v124
      %v173 = vunpack.c.l.bf16 %v125
      %v174 = vunpack.c.l.bf16 %v129
      %v175 = vunpack.c.l.bf16 %v130
      %v176 = vunpack.c.l.bf16 %v131
      %v177 = vunpack.c.l.bf16 %v135
      %v178 = vunpack.c.l.bf16 %v136
      %v179 = vunpack.c.l.bf16 %v137
      %v180 = vunpack.c.l.bf16 %v141
      %v181 = vunpack.c.l.bf16 %v142
      %v182 = vunpack.c.l.bf16 %v143
      %v183 = vunpack.c.l.bf16 %v147
      %v184 = vunpack.c.l.bf16 %v148
      %v185 = vunpack.c.l.bf16 %v149
      %v186 = vunpack.c.l.bf16 %v153
      %v187 = vunpack.c.l.bf16 %v154
      %v188 = vunpack.c.l.bf16 %v155
      %v189 = vunpack.c.l.bf16 %v159
      %v190 = vunpack.c.l.bf16 %v160
      %v191 = vunpack.c.l.bf16 %v161
      %v192 = vunpack.c.l.bf16 %v120
      %v193 = vunpack.c.l.bf16 %v121
      %v194 = vunpack.c.l.bf16 %v122
      %v195 = vunpack.c.l.bf16 %v126
      %v196 = vunpack.c.l.bf16 %v127
      %v197 = vunpack.c.l.bf16 %v128
      %v198 = vunpack.c.l.bf16 %v132
      %v199 = vunpack.c.l.bf16 %v133
      %v200 = vunpack.c.l.bf16 %v134
      %v201 = vunpack.c.l.bf16 %v138
      %v202 = vunpack.c.l.bf16 %v139
      %v203 = vunpack.c.l.bf16 %v140
      %v204 = vunpack.c.l.bf16 %v144
      %v205 = vunpack.c.l.bf16 %v145
      %v206 = vunpack.c.l.bf16 %v146
      %v207 = vunpack.c.l.bf16 %v150
      %v208 = vunpack.c.l.bf16 %v151
      %v209 = vunpack.c.l.bf16 %v152
      %v210 = vunpack.c.l.bf16 %v156
      %v211 = vunpack.c.l.bf16 %v157
      %v212 = vunpack.c.l.bf16 %v158
      %v213 = vunpack.c.l.bf16 %v162
      %v214 = vunpack.c.l.bf16 %v163
      %v215 = vunpack.c.l.bf16 %v164
      %v216 = vmax.f32 %v168, %v192
      %v217 = vmax.f32 %v169, %v193
      %v218 = vmax.f32 %v170, %v194
      %v219 = vmax.f32 %v171, %v195
      %v220 = vmax.f32 %v172, %v196
      %v221 = vmax.f32 %v173, %v197
      %v222 = vmax.f32 %v174, %v198
      %v223 = vmax.f32 %v175, %v199
      %v224 = vmax.f32 %v176, %v200
      %v225 = vmax.f32 %v177, %v201
      %v226 = vmax.f32 %v178, %v202
      %v227 = vmax.f32 %v179, %v203
      %v228 = vmax.f32 %v180, %v204
      %v229 = vmax.f32 %v181, %v205
      %v230 = vmax.f32 %v182, %v206
      %v231 = vmax.f32 %v183, %v207
      %v232 = vmax.f32 %v184, %v208
      %v233 = vmax.f32 %v185, %v209
      %v234 = vmax.f32 %v186, %v210
      %v235 = vmax.f32 %v187, %v211
      %v236 = vmax.f32 %v188, %v212
      %v237 = vmax.f32 %v189, %v213
      %v238 = vmax.f32 %v190, %v214
      %v239 = vmax.f32 %v191, %v215
      %v240 = vpack.c.bf16 %v216, %v216
      %v241 = vpack.c.bf16 %v217, %v217
      %v242 = vpack.c.bf16 %v218, %v218
      %v243 = vpack.c.bf16 %v219, %v219
      %v244 = vpack.c.bf16 %v220, %v220
      %v245 = vpack.c.bf16 %v221, %v221
      %v246 = vpack.c.bf16 %v222, %v222
      %v247 = vpack.c.bf16 %v223, %v223
      %v248 = vpack.c.bf16 %v224, %v224
      %v249 = vpack.c.bf16 %v225, %v225
      %v250 = vpack.c.bf16 %v226, %v226
      %v251 = vpack.c.bf16 %v227, %v227
      %v252 = vpack.c.bf16 %v228, %v228
      %v253 = vpack.c.bf16 %v229, %v229
      %v254 = vpack.c.bf16 %v230, %v230
      %v255 = vpack.c.bf16 %v231, %v231
      %v256 = vpack.c.bf16 %v232, %v232
      %v257 = vpack.c.bf16 %v233, %v233
      %v258 = vpack.c.bf16 %v234, %v234
      %v259 = vpack.c.bf16 %v235, %v235
      %v260 = vpack.c.bf16 %v236, %v236
      %v261 = vpack.c.bf16 %v237, %v237
      %v262 = vpack.c.bf16 %v238, %v238
      %v263 = vpack.c.bf16 %v239, %v239
      %v264 = vunpack.c.l.bf16 %v240
      %v265 = vunpack.c.l.bf16 %v241
      %v266 = vunpack.c.l.bf16 %v242
      %v267 = vunpack.c.l.bf16 %v243
      %v268 = vunpack.c.l.bf16 %v244
      %v269 = vunpack.c.l.bf16 %v245
      %v270 = vunpack.c.l.bf16 %v246
      %v271 = vunpack.c.l.bf16 %v247
      %v272 = vunpack.c.l.bf16 %v248
      %v273 = vunpack.c.l.bf16 %v249
      %v274 = vunpack.c.l.bf16 %v250
      %v275 = vunpack.c.l.bf16 %v251
      %v276 = vunpack.c.l.bf16 %v252
      %v277 = vunpack.c.l.bf16 %v253
      %v278 = vunpack.c.l.bf16 %v254
      %v279 = vunpack.c.l.bf16 %v255
      %v280 = vunpack.c.l.bf16 %v256
      %v281 = vunpack.c.l.bf16 %v257
      %v282 = vunpack.c.l.bf16 %v258
      %v283 = vunpack.c.l.bf16 %v259
      %v284 = vunpack.c.l.bf16 %v260
      %v285 = vunpack.c.l.bf16 %v261
      %v286 = vunpack.c.l.bf16 %v262
      %v287 = vunpack.c.l.bf16 %v263
      %v288 = vunpack.c.l.bf16 %v165
      %v289 = vunpack.c.l.bf16 %v166
      %v290 = vunpack.c.l.bf16 %v167
      %v291 = vmax.f32 %v264, %v171
      %v292 = vmax.f32 %v265, %v172
      %v293 = vmax.f32 %v266, %v173
      %v294 = vmax.f32 %v267, %v174
      %v295 = vmax.f32 %v268, %v175
      %v296 = vmax.f32 %v269, %v176
      %v297 = vmax.f32 %v270, %v177
      %v298 = vmax.f32 %v271, %v178
      %v299 = vmax.f32 %v272, %v179
      %v300 = vmax.f32 %v273, %v180
      %v301 = vmax.f32 %v274, %v181
      %v302 = vmax.f32 %v275, %v182
      %v303 = vmax.f32 %v276, %v183
      %v304 = vmax.f32 %v277, %v184
      %v305 = vmax.f32 %v278, %v185
      %v306 = vmax.f32 %v279, %v186
      %v307 = vmax.f32 %v280, %v187
      %v308 = vmax.f32 %v281, %v188
      %v309 = vmax.f32 %v282, %v189
      %v310 = vmax.f32 %v283, %v190
      %v311 = vmax.f32 %v284, %v191
      %v312 = vmax.f32 %v285, %v288
      %v313 = vmax.f32 %v286, %v289
      %v314 = vmax.f32 %v287, %v290
      %v315 = vpack.c.bf16 %v291, %v291
      %v316 = vpack.c.bf16 %v292, %v292
      %v317 = vpack.c.bf16 %v293, %v293
      %v318 = vpack.c.bf16 %v294, %v294
      %v319 = vpack.c.bf16 %v295, %v295
      %v320 = vpack.c.bf16 %v296, %v296
      %v321 = vpack.c.bf16 %v297, %v297
      %v322 = vpack.c.bf16 %v298, %v298
      %v323 = vpack.c.bf16 %v299, %v299
      %v324 = vpack.c.bf16 %v300, %v300
      %v325 = vpack.c.bf16 %v301, %v301
      %v326 = vpack.c.bf16 %v302, %v302
      %v327 = vpack.c.bf16 %v303, %v303
      %v328 = vpack.c.bf16 %v304, %v304
      %v329 = vpack.c.bf16 %v305, %v305
      %v330 = vpack.c.bf16 %v306, %v306
      %v331 = vpack.c.bf16 %v307, %v307
      %v332 = vpack.c.bf16 %v308, %v308
      %v333 = vpack.c.bf16 %v309, %v309
      %v334 = vpack.c.bf16 %v310, %v310
      %v335 = vpack.c.bf16 %v311, %v311
      %v336 = vpack.c.bf16 %v312, %v312
      %v337 = vpack.c.bf16 %v313, %v313
      %v338 = vpack.c.bf16 %v314, %v314
      %v339 = vunpack.c.l.bf16 %v315
      %v340 = vunpack.c.l.bf16 %v316
      %v341 = vunpack.c.l.bf16 %v318
      %v342 = vunpack.c.l.bf16 %v319
      %v343 = vunpack.c.l.bf16 %v321
      %v344 = vunpack.c.l.bf16 %v322
      %v345 = vunpack.c.l.bf16 %v324
      %v346 = vunpack.c.l.bf16 %v325
      %v347 = vunpack.c.l.bf16 %v327
      %v348 = vunpack.c.l.bf16 %v328
      %v349 = vunpack.c.l.bf16 %v330
      %v350 = vunpack.c.l.bf16 %v331
      %v351 = vunpack.c.l.bf16 %v333
      %v352 = vunpack.c.l.bf16 %v334
      %v353 = vunpack.c.l.bf16 %v336
      %v354 = vunpack.c.l.bf16 %v337
      %v355 = vunpack.c.l.bf16 %v317
      %v356 = vunpack.c.l.bf16 %v320
      %v357 = vunpack.c.l.bf16 %v323
      %v358 = vunpack.c.l.bf16 %v326
      %v359 = vunpack.c.l.bf16 %v329
      %v360 = vunpack.c.l.bf16 %v332
      %v361 = vunpack.c.l.bf16 %v335
      %v362 = vunpack.c.l.bf16 %v338
      %vm387 = vcmask 1046528
      %v388 = vrot.slane %v339, 1
      %v389 = vrot.slane %v340, 1
      %v390 = vsel %vm387, %v388, %v389
      %v391 = vrot.slane %v355, 1
      %v392 = vsel %vm387, %v389, %v391
      %v393 = vrot.slane %v341, 1
      %v394 = vrot.slane %v342, 1
      %v395 = vsel %vm387, %v393, %v394
      %v396 = vrot.slane %v356, 1
      %v397 = vsel %vm387, %v394, %v396
      %v398 = vrot.slane %v343, 1
      %v399 = vrot.slane %v344, 1
      %v400 = vsel %vm387, %v398, %v399
      %v401 = vrot.slane %v357, 1
      %v402 = vsel %vm387, %v399, %v401
      %v403 = vrot.slane %v345, 1
      %v404 = vrot.slane %v346, 1
      %v405 = vsel %vm387, %v403, %v404
      %v406 = vrot.slane %v358, 1
      %v407 = vsel %vm387, %v404, %v406
      %v408 = vrot.slane %v347, 1
      %v409 = vrot.slane %v348, 1
      %v410 = vsel %vm387, %v408, %v409
      %v411 = vrot.slane %v359, 1
      %v412 = vsel %vm387, %v409, %v411
      %v413 = vrot.slane %v349, 1
      %v414 = vrot.slane %v350, 1
      %v415 = vsel %vm387, %v413, %v414
      %v416 = vrot.slane %v360, 1
      %v417 = vsel %vm387, %v414, %v416
      %v418 = vrot.slane %v351, 1
      %v419 = vrot.slane %v352, 1
      %v420 = vsel %vm387, %v418, %v419
      %v421 = vrot.slane %v361, 1
      %v422 = vsel %vm387, %v419, %v421
      %v423 = vrot.slane %v353, 1
      %v424 = vrot.slane %v354, 1
      %v425 = vsel %vm387, %v423, %v424
      %v426 = vrot.slane %v362, 1
      %v427 = vsel %vm387, %v424, %v426
      %v444 = vmax.f32 %v339, %v390
      %v445 = vmax.f32 %v340, %v392
      %v446 = vmax.f32 %v341, %v395
      %v447 = vmax.f32 %v342, %v397
      %v448 = vmax.f32 %v343, %v400
      %v449 = vmax.f32 %v344, %v402
      %v450 = vmax.f32 %v345, %v405
      %v451 = vmax.f32 %v346, %v407
      %v452 = vmax.f32 %v347, %v410
      %v453 = vmax.f32 %v348, %v412
      %v454 = vmax.f32 %v349, %v415
      %v455 = vmax.f32 %v350, %v417
      %v456 = vmax.f32 %v351, %v420
      %v457 = vmax.f32 %v352, %v422
      %v458 = vmax.f32 %v353, %v425
      %v459 = vmax.f32 %v354, %v427
      %v460 = vpack.c.bf16 %v444, %v444
      %v461 = vpack.c.bf16 %v445, %v445
      %v462 = vpack.c.bf16 %v446, %v446
      %v463 = vpack.c.bf16 %v447, %v447
      %v464 = vpack.c.bf16 %v448, %v448
      %v465 = vpack.c.bf16 %v449, %v449
      %v466 = vpack.c.bf16 %v450, %v450
      %v467 = vpack.c.bf16 %v451, %v451
      %v468 = vpack.c.bf16 %v452, %v452
      %v469 = vpack.c.bf16 %v453, %v453
      %v470 = vpack.c.bf16 %v454, %v454
      %v471 = vpack.c.bf16 %v455, %v455
      %v472 = vpack.c.bf16 %v456, %v456
      %v473 = vpack.c.bf16 %v457, %v457
      %v474 = vpack.c.bf16 %v458, %v458
      %v475 = vpack.c.bf16 %v459, %v459
      %v476 = vunpack.c.l.bf16 %v460
      %v477 = vunpack.c.l.bf16 %v461
      %v478 = vunpack.c.l.bf16 %v462
      %v479 = vunpack.c.l.bf16 %v463
      %v480 = vunpack.c.l.bf16 %v464
      %v481 = vunpack.c.l.bf16 %v465
      %v482 = vunpack.c.l.bf16 %v466
      %v483 = vunpack.c.l.bf16 %v467
      %v484 = vunpack.c.l.bf16 %v468
      %v485 = vunpack.c.l.bf16 %v469
      %v486 = vunpack.c.l.bf16 %v470
      %v487 = vunpack.c.l.bf16 %v471
      %v488 = vunpack.c.l.bf16 %v472
      %v489 = vunpack.c.l.bf16 %v473
      %v490 = vunpack.c.l.bf16 %v474
      %v491 = vunpack.c.l.bf16 %v475
      %vm492 = vcmask 1045504
      %v493 = vrot.slane %v339, 2
      %v494 = vrot.slane %v340, 2
      %v495 = vsel %vm492, %v493, %v494
      %v496 = vrot.slane %v355, 2
      %v497 = vsel %vm492, %v494, %v496
      %v498 = vrot.slane %v341, 2
      %v499 = vrot.slane %v342, 2
      %v500 = vsel %vm492, %v498, %v499
      %v501 = vrot.slane %v356, 2
      %v502 = vsel %vm492, %v499, %v501
      %v503 = vrot.slane %v343, 2
      %v504 = vrot.slane %v344, 2
      %v505 = vsel %vm492, %v503, %v504
      %v506 = vrot.slane %v357, 2
      %v507 = vsel %vm492, %v504, %v506
      %v508 = vrot.slane %v345, 2
      %v509 = vrot.slane %v346, 2
      %v510 = vsel %vm492, %v508, %v509
      %v511 = vrot.slane %v358, 2
      %v512 = vsel %vm492, %v509, %v511
      %v513 = vrot.slane %v347, 2
      %v514 = vrot.slane %v348, 2
      %v515 = vsel %vm492, %v513, %v514
      %v516 = vrot.slane %v359, 2
      %v517 = vsel %vm492, %v514, %v516
      %v518 = vrot.slane %v349, 2
      %v519 = vrot.slane %v350, 2
      %v520 = vsel %vm492, %v518, %v519
      %v521 = vrot.slane %v360, 2
      %v522 = vsel %vm492, %v519, %v521
      %v523 = vrot.slane %v351, 2
      %v524 = vrot.slane %v352, 2
      %v525 = vsel %vm492, %v523, %v524
      %v526 = vrot.slane %v361, 2
      %v527 = vsel %vm492, %v524, %v526
      %v528 = vrot.slane %v353, 2
      %v529 = vrot.slane %v354, 2
      %v530 = vsel %vm492, %v528, %v529
      %v531 = vrot.slane %v362, 2
      %v532 = vsel %vm492, %v529, %v531
      %v549 = vmax.f32 %v476, %v495
      %v550 = vmax.f32 %v477, %v497
      %v551 = vmax.f32 %v478, %v500
      %v552 = vmax.f32 %v479, %v502
      %v553 = vmax.f32 %v480, %v505
      %v554 = vmax.f32 %v481, %v507
      %v555 = vmax.f32 %v482, %v510
      %v556 = vmax.f32 %v483, %v512
      %v557 = vmax.f32 %v484, %v515
      %v558 = vmax.f32 %v485, %v517
      %v559 = vmax.f32 %v486, %v520
      %v560 = vmax.f32 %v487, %v522
      %v561 = vmax.f32 %v488, %v525
      %v562 = vmax.f32 %v489, %v527
      %v563 = vmax.f32 %v490, %v530
      %v564 = vmax.f32 %v491, %v532
      %v565 = vpack.c.bf16 %v549, %v549
      %v566 = vpack.c.bf16 %v550, %v550
      %v567 = vpack.c.bf16 %v551, %v551
      %v568 = vpack.c.bf16 %v552, %v552
      %v569 = vpack.c.bf16 %v553, %v553
      %v570 = vpack.c.bf16 %v554, %v554
      %v571 = vpack.c.bf16 %v555, %v555
      %v572 = vpack.c.bf16 %v556, %v556
      %v573 = vpack.c.bf16 %v557, %v557
      %v574 = vpack.c.bf16 %v558, %v558
      %v575 = vpack.c.bf16 %v559, %v559
      %v576 = vpack.c.bf16 %v560, %v560
      %v577 = vpack.c.bf16 %v561, %v561
      %v578 = vpack.c.bf16 %v562, %v562
      %v579 = vpack.c.bf16 %v563, %v563
      %v580 = vpack.c.bf16 %v564, %v564
      %581 = vst [vmem:[%s116] sm:$0xf] %v565
      %582 = vst [vmem:[%s116 + $0x4] sm:$0xf] %v566
      %583 = vst [vmem:[%s116 + $0x8] sm:$0xf] %v567
      %584 = vst [vmem:[%s116 + $0xc] sm:$0xf] %v568
      %585 = vst [vmem:[%s116 + $0x10] sm:$0xf] %v569
      %586 = vst [vmem:[%s116 + $0x14] sm:$0xf] %v570
      %587 = vst [vmem:[%s116 + $0x18] sm:$0xf] %v571
      %588 = vst [vmem:[%s116 + $0x1c] sm:$0xf] %v572
      %589 = vst [vmem:[%s116 + $0x20] sm:$0xf] %v573
      %590 = vst [vmem:[%s116 + $0x24] sm:$0xf] %v574
      %591 = vst [vmem:[%s116 + $0x28] sm:$0xf] %v575
      %592 = vst [vmem:[%s116 + $0x2c] sm:$0xf] %v576
      %593 = vst [vmem:[%s116 + $0x30] sm:$0xf] %v577
      %594 = vst [vmem:[%s116 + $0x34] sm:$0xf] %v578
      %595 = vst [vmem:[%s116 + $0x38] sm:$0xf] %v579
      %596 = vst [vmem:[%s116 + $0x3c] sm:$0xf] %v580
      %p597 = scmp.lt.s32.totalorder %s12, 1
      %s598 = scalar_select %p597, %s12, 1
      %s599 = smul.addr %s598, 16
      %s600 = smul.addr %s599, 4
      %s601 = scalar_lea.vmem %s1, %s600
      // Predicated region
      $region25: #{visible_module_forward.6} parent=23 // pred_check
        %p602 = pneg %p56
      $region26: #{visible_module_forward.6} parent=23 // pred_check_branch
        %604 = sbr.rel (%p602) target = $region28
      $region27: #{visible_module_forward.6} parent=23 // pred_region
        _
      $region28: #{visible_module_forward.6} parent=23 // pred_fallthru
        _
    $region24: #{visible_module_forward.6} parent=5 // pred_fallthru
      _
    %p605 = scmp.le.s32.totalorder 2, %s7
    // Predicated region
    $region29: #{visible_module_forward.6} parent=5 // pred_check
      %p606 = pneg %p605
    $region30: #{visible_module_forward.6} parent=5 // pred_check_branch
      %608 = sbr.rel (%p606) target = $region32
    $region31: #{visible_module_forward.6} parent=5 // pred_region
      %s609 = ssub.s32 %s7, 2
      // Predicated region
      $region33: #{visible_module_forward.6} parent=31 // pred_check
        %p610 = pneg %p62
      $region34: #{visible_module_forward.6} parent=31 // pred_check_branch
        %612 = sbr.rel (%p610) target = $region36
      $region35: #{visible_module_forward.6} parent=31 // pred_region
        %p613 = scmp.lt.s32.totalorder %s13, 1
        %s614 = scalar_select %p613, %s13, 1
        %s615 = smul.addr %s614, 16
        %s616 = smul.addr %s615, 4
        %s617 = scalar_lea.vmem %s1, %s616
      $region36: #{visible_module_forward.6} parent=31 // pred_fallthru
        _
    $region32: #{visible_module_forward.6} parent=5 // pred_fallthru
      _
  $region6: #{visible_module_forward.6} parent=0 // loop_footer
    %s11 = sadd.s32 1, %s7
  $region7: #{visible_module_forward.6} parent=0 // loop_footer_branch
    %6 = sbr.rel target = $region3
  $region8: #{visible_module_forward.6} parent=0 // loop_exit
    _

// kernel: visible_module_forward.7
$region0: #{visible_module_forward.7}
  #allocation0 [shape = 'u32[]', space=smem, size = 0x4, offset = 0x4, fixed_abs, tag = 'smem constant byte address 0x4 - core index']
  #allocation1 [shape = 'u32[72,128]{1,0:T(1,128)}', space=vmem, size = 0x9000, scoped, tag = 'internal scratch']
  %s0 = inlined_call_operand.vmem [shape: bf16[2,64,128], index: 0, kind: input, shape index: {}]
  %s1 = inlined_call_operand.vmem [shape: bf16[128,64], index: 1, kind: input, shape index: {}]
  %s2 = inlined_call_operand.vmem [shape: f32[1,64], index: 2, kind: input, shape index: {}]
  %s3 = inlined_call_operand.vmem [shape: f32[1,64], index: 3, kind: input, shape index: {}]
  %s4 = inlined_call_operand.vmem [shape: bf16[576,64], index: 4, kind: input, shape index: {}]
  %s5 = inlined_call_operand.vmem [shape: f32[1,64], index: 5, kind: input, shape index: {}]
  %s6 = inlined_call_operand.vmem [shape: f32[1,64], index: 6, kind: input, shape index: {}]
  %s7 = inlined_call_operand.vmem [shape: bf16[64,256], index: 7, kind: input, shape index: {}]
  %s8 = inlined_call_operand.vmem [shape: f32[1,256], index: 8, kind: input, shape index: {}]
  %s9 = inlined_call_operand.vmem [shape: f32[1,256], index: 9, kind: input, shape index: {}]
  %s10 = inlined_call_operand.vmem [shape: bf16[128,256], index: 10, kind: input, shape index: {}]
  %s11 = inlined_call_operand.vmem [shape: f32[1,256], index: 11, kind: input, shape index: {}]
  %s12 = inlined_call_operand.vmem [shape: f32[1,256], index: 12, kind: input, shape index: {}]
  %s13 = inlined_call_operand.vmem [shape: bf16[2,64,256], index: 13, kind: output, shape index: {}]
  %s14 = sld [smem:[#allocation0]]
  $region85: #{visible_module_forward.7} parent=0
    _
  %s16 = ssub.s32 1, %s14
  %s17 = scalar_select 0, %s16, %s14
  loop: start=0, step=1, limit=4
  $region2: #{visible_module_forward.7} parent=0 // loop_pre_header
    _
  $region3: #{visible_module_forward.7} parent=0 // loop_header
    %s19 = sphi 0, %s23
    %p20 = scmp.ge.s32.totalorder %s19, 4
    %s29 = sphi 0, %s31
    %s32 = sphi 0, %s29
    %s33 = sphi 0, %s32
    %s49 = sphi 0, %s33
    %s53 = sphi 0, %s53
    %s55 = sphi 0, %s53
    %s56 = sphi 0, %s55
    %s70 = sphi 0, %s56
    %s74 = sphi 0, %s74
    %s76 = sphi 0, %s74
    %s77 = sphi 0, %s76
    %s91 = sphi 0, %s77
    %s95 = sphi 0, %s95
    %s97 = sphi 0, %s95
    %s98 = sphi 0, %s97
    %s112 = sphi 0, %s98
    %s116 = sphi 0, %s116
    %s118 = sphi 0, %s116
    %s119 = sphi 0, %s118
    %s133 = sphi 0, %s119
    %s137 = sphi 0, %s137
    %s139 = sphi 0, %s137
    %s140 = sphi 0, %s139
    %s154 = sphi 0, %s140
    %s158 = sphi 0, %s158
    %s160 = sphi 0, %s158
    %s161 = sphi 0, %s160
    %s175 = sphi 0, %s161
    %s179 = sphi 0, %s179
    %s181 = sphi 0, %s179
    %s182 = sphi 0, %s181
    %s196 = sphi 0, %s182
    %s200 = sphi 0, %s200
    %s202 = sphi 0, %s200
    %s203 = sphi 0, %s202
    %s217 = sphi 0, %s203
    %s221 = sphi 0, %s221
    %s223 = sphi 0, %s221
    %s224 = sphi 0, %s223
    %s238 = sphi 0, %s224
    %s242 = sphi 0, %s242
    %s244 = sphi 0, %s242
    %s245 = sphi 0, %s244
    %s259 = sphi 0, %s245
    %s263 = sphi 0, %s263
    %s265 = sphi 0, %s263
    %s266 = sphi 0, %s265
    %s280 = sphi 0, %s266
    %s284 = sphi 0, %s284
    %s286 = sphi 0, %s284
    %s287 = sphi 0, %s286
    %s301 = sphi 0, %s287
    %s307 = sphi 0, %s309
    %s310 = sphi 0, %s307
    %s311 = sphi 0, %s310
    %s327 = sphi 0, %s311
  $region4: #{visible_module_forward.7} parent=0 // loop_header_branch
    %22 = sbr.rel (%p20) target = $region8
  $region5: #{visible_module_forward.7} parent=0 // loop_body
    %s24 = ssub.s32 %s19, 1
    %s25 = ssub.s32 %s19, 2
    %s26 = sadd.s32 %s19, 1
    %s27 = ssub.s32 %s19, %s26
    %p28 = scmp.eq.s32.totalorder %s27, 0
    %s30 = sadd.s32 %s29, 1
    %s31 = scalar_select %p28, %s29, %s30
    %p34 = pneg %p28
    %p35 = scmp.eq.s32.totalorder %s19, 1
    %p36 = por %p34, %p35
    %p37 = scmp.ne.s32.totalorder %s29, %s32
    %p38 = scmp.eq.s32.totalorder %s19, 0
    %p39 = por %p37, %p38
    %p40 = scmp.ne.s32.totalorder %s29, %s32
    %p41 = scmp.eq.s32.totalorder %s24, 1
    %p42 = por %p40, %p41
    %p43 = scmp.ne.s32.totalorder %s32, %s33
    %p44 = scmp.eq.s32.totalorder %s24, 0
    %p45 = por %p43, %p44
    %p46 = scmp.ne.s32.totalorder %s32, %s33
    %p47 = scmp.eq.s32.totalorder %s25, 1
    %p48 = por %p46, %p47
    %p50 = scmp.ne.s32.totalorder %s33, %s49
    %p51 = scmp.eq.s32.totalorder %s25, 0
    %p52 = por %p50, %p51
    %s54 = sadd.s32 %s53, 1
    %p57 = scmp.eq.s32.totalorder %s19, 1
    %p58 = scmp.ne.s32.totalorder %s53, %s55
    %p59 = scmp.eq.s32.totalorder %s19, 0
    %p60 = por %p58, %p59
    %p61 = scmp.ne.s32.totalorder %s53, %s55
    %p62 = scmp.eq.s32.totalorder %s24, 1
    %p63 = por %p61, %p62
    %p64 = scmp.ne.s32.totalorder %s55, %s56
    %p65 = scmp.eq.s32.totalorder %s24, 0
    %p66 = por %p64, %p65
    %p67 = scmp.ne.s32.totalorder %s55, %s56
    %p68 = scmp.eq.s32.totalorder %s25, 1
    %p69 = por %p67, %p68
    %p71 = scmp.ne.s32.totalorder %s56, %s70
    %p72 = scmp.eq.s32.totalorder %s25, 0
    %p73 = por %p71, %p72
    %s75 = sadd.s32 %s74, 1
    %p78 = scmp.eq.s32.totalorder %s19, 1
    %p79 = scmp.ne.s32.totalorder %s74, %s76
    %p80 = scmp.eq.s32.totalorder %s19, 0
    %p81 = por %p79, %p80
    %p82 = scmp.ne.s32.totalorder %s74, %s76
    %p83 = scmp.eq.s32.totalorder %s24, 1
    %p84 = por %p82, %p83
    %p85 = scmp.ne.s32.totalorder %s76, %s77
    %p86 = scmp.eq.s32.totalorder %s24, 0
    %p87 = por %p85, %p86
    %p88 = scmp.ne.s32.totalorder %s76, %s77
    %p89 = scmp.eq.s32.totalorder %s25, 1
    %p90 = por %p88, %p89
    %p92 = scmp.ne.s32.totalorder %s77, %s91
    %p93 = scmp.eq.s32.totalorder %s25, 0
    %p94 = por %p92, %p93
    %s96 = sadd.s32 %s95, 1
    %p99 = scmp.eq.s32.totalorder %s19, 1
    %p100 = scmp.ne.s32.totalorder %s95, %s97
    %p101 = scmp.eq.s32.totalorder %s19, 0
    %p102 = por %p100, %p101
    %p103 = scmp.ne.s32.totalorder %s95, %s97
    %p104 = scmp.eq.s32.totalorder %s24, 1
    %p105 = por %p103, %p104
    %p106 = scmp.ne.s32.totalorder %s97, %s98
    %p107 = scmp.eq.s32.totalorder %s24, 0
    %p108 = por %p106, %p107
    %p109 = scmp.ne.s32.totalorder %s97, %s98
    %p110 = scmp.eq.s32.totalorder %s25, 1
    %p111 = por %p109, %p110
    %p113 = scmp.ne.s32.totalorder %s98, %s112
    %p114 = scmp.eq.s32.totalorder %s25, 0
    %p115 = por %p113, %p114
    %s117 = sadd.s32 %s116, 1
    %p120 = scmp.eq.s32.totalorder %s19, 1
    %p121 = scmp.ne.s32.totalorder %s116, %s118
    %p122 = scmp.eq.s32.totalorder %s19, 0
    %p123 = por %p121, %p122
    %p124 = scmp.ne.s32.totalorder %s116, %s118
    %p125 = scmp.eq.s32.totalorder %s24, 1
    %p126 = por %p124, %p125
    %p127 = scmp.ne.s32.totalorder %s118, %s119
    %p128 = scmp.eq.s32.totalorder %s24, 0
    %p129 = por %p127, %p128
    %p130 = scmp.ne.s32.totalorder %s118, %s119
    %p131 = scmp.eq.s32.totalorder %s25, 1
    %p132 = por %p130, %p131
    %p134 = scmp.ne.s32.totalorder %s119, %s133
    %p135 = scmp.eq.s32.totalorder %s25, 0
    %p136 = por %p134, %p135
    %s138 = sadd.s32 %s137, 1
    %p141 = scmp.eq.s32.totalorder %s19, 1
    %p142 = scmp.ne.s32.totalorder %s137, %s139
    %p143 = scmp.eq.s32.totalorder %s19, 0
    %p144 = por %p142, %p143
    %p145 = scmp.ne.s32.totalorder %s137, %s139
    %p146 = scmp.eq.s32.totalorder %s24, 1
    %p147 = por %p145, %p146
    %p148 = scmp.ne.s32.totalorder %s139, %s140
    %p149 = scmp.eq.s32.totalorder %s24, 0
    %p150 = por %p148, %p149
    %p151 = scmp.ne.s32.totalorder %s139, %s140
    %p152 = scmp.eq.s32.totalorder %s25, 1
    %p153 = por %p151, %p152
    %p155 = scmp.ne.s32.totalorder %s140, %s154
    %p156 = scmp.eq.s32.totalorder %s25, 0
    %p157 = por %p155, %p156
    %s159 = sadd.s32 %s158, 1
    %p162 = scmp.eq.s32.totalorder %s19, 1
    %p163 = scmp.ne.s32.totalorder %s158, %s160
    %p164 = scmp.eq.s32.totalorder %s19, 0
    %p165 = por %p163, %p164
    %p166 = scmp.ne.s32.totalorder %s158, %s160
    %p167 = scmp.eq.s32.totalorder %s24, 1
    %p168 = por %p166, %p167
    %p169 = scmp.ne.s32.totalorder %s160, %s161
    %p170 = scmp.eq.s32.totalorder %s24, 0
    %p171 = por %p169, %p170
    %p172 = scmp.ne.s32.totalorder %s160, %s161
    %p173 = scmp.eq.s32.totalorder %s25, 1
    %p174 = por %p172, %p173
    %p176 = scmp.ne.s32.totalorder %s161, %s175
    %p177 = scmp.eq.s32.totalorder %s25, 0
    %p178 = por %p176, %p177
    %s180 = sadd.s32 %s179, 1
    %p183 = scmp.eq.s32.totalorder %s19, 1
    %p184 = scmp.ne.s32.totalorder %s179, %s181
    %p185 = scmp.eq.s32.totalorder %s19, 0
    %p186 = por %p184, %p185
    %p187 = scmp.ne.s32.totalorder %s179, %s181
    %p188 = scmp.eq.s32.totalorder %s24, 1
    %p189 = por %p187, %p188
    %p190 = scmp.ne.s32.totalorder %s181, %s182
    %p191 = scmp.eq.s32.totalorder %s24, 0
    %p192 = por %p190, %p191
    %p193 = scmp.ne.s32.totalorder %s181, %s182
    %p194 = scmp.eq.s32.totalorder %s25, 1
    %p195 = por %p193, %p194
    %p197 = scmp.ne.s32.totalorder %s182, %s196
    %p198 = scmp.eq.s32.totalorder %s25, 0
    %p199 = por %p197, %p198
    %s201 = sadd.s32 %s200, 1
    %p204 = scmp.eq.s32.totalorder %s19, 1
    %p205 = scmp.ne.s32.totalorder %s200, %s202
    %p206 = scmp.eq.s32.totalorder %s19, 0
    %p207 = por %p205, %p206
    %p208 = scmp.ne.s32.totalorder %s200, %s202
    %p209 = scmp.eq.s32.totalorder %s24, 1
    %p210 = por %p208, %p209
    %p211 = scmp.ne.s32.totalorder %s202, %s203
    %p212 = scmp.eq.s32.totalorder %s24, 0
    %p213 = por %p211, %p212
    %p214 = scmp.ne.s32.totalorder %s202, %s203
    %p215 = scmp.eq.s32.totalorder %s25, 1
    %p216 = por %p214, %p215
    %p218 = scmp.ne.s32.totalorder %s203, %s217
    %p219 = scmp.eq.s32.totalorder %s25, 0
    %p220 = por %p218, %p219
    %s222 = sadd.s32 %s221, 1
    %p225 = scmp.eq.s32.totalorder %s19, 1
    %p226 = scmp.ne.s32.totalorder %s221, %s223
    %p227 = scmp.eq.s32.totalorder %s19, 0
    %p228 = por %p226, %p227
    %p229 = scmp.ne.s32.totalorder %s221, %s223
    %p230 = scmp.eq.s32.totalorder %s24, 1
    %p231 = por %p229, %p230
    %p232 = scmp.ne.s32.totalorder %s223, %s224
    %p233 = scmp.eq.s32.totalorder %s24, 0
    %p234 = por %p232, %p233
    %p235 = scmp.ne.s32.totalorder %s223, %s224
    %p236 = scmp.eq.s32.totalorder %s25, 1
    %p237 = por %p235, %p236
    %p239 = scmp.ne.s32.totalorder %s224, %s238
    %p240 = scmp.eq.s32.totalorder %s25, 0
    %p241 = por %p239, %p240
    %s243 = sadd.s32 %s242, 1
    %p246 = scmp.eq.s32.totalorder %s19, 1
    %p247 = scmp.ne.s32.totalorder %s242, %s244
    %p248 = scmp.eq.s32.totalorder %s19, 0
    %p249 = por %p247, %p248
    %p250 = scmp.ne.s32.totalorder %s242, %s244
    %p251 = scmp.eq.s32.totalorder %s24, 1
    %p252 = por %p250, %p251
    %p253 = scmp.ne.s32.totalorder %s244, %s245
    %p254 = scmp.eq.s32.totalorder %s24, 0
    %p255 = por %p253, %p254
    %p256 = scmp.ne.s32.totalorder %s244, %s245
    %p257 = scmp.eq.s32.totalorder %s25, 1
    %p258 = por %p256, %p257
    %p260 = scmp.ne.s32.totalorder %s245, %s259
    %p261 = scmp.eq.s32.totalorder %s25, 0
    %p262 = por %p260, %p261
    %s264 = sadd.s32 %s263, 1
    %p267 = scmp.eq.s32.totalorder %s19, 1
    %p268 = scmp.ne.s32.totalorder %s263, %s265
    %p269 = scmp.eq.s32.totalorder %s19, 0
    %p270 = por %p268, %p269
    %p271 = scmp.ne.s32.totalorder %s263, %s265
    %p272 = scmp.eq.s32.totalorder %s24, 1
    %p273 = por %p271, %p272
    %p274 = scmp.ne.s32.totalorder %s265, %s266
    %p275 = scmp.eq.s32.totalorder %s24, 0
    %p276 = por %p274, %p275
    %p277 = scmp.ne.s32.totalorder %s265, %s266
    %p278 = scmp.eq.s32.totalorder %s25, 1
    %p279 = por %p277, %p278
    %p281 = scmp.ne.s32.totalorder %s266, %s280
    %p282 = scmp.eq.s32.totalorder %s25, 0
    %p283 = por %p281, %p282
    %s285 = sadd.s32 %s284, 1
    %p288 = scmp.eq.s32.totalorder %s19, 1
    %p289 = scmp.ne.s32.totalorder %s284, %s286
    %p290 = scmp.eq.s32.totalorder %s19, 0
    %p291 = por %p289, %p290
    %p292 = scmp.ne.s32.totalorder %s284, %s286
    %p293 = scmp.eq.s32.totalorder %s24, 1
    %p294 = por %p292, %p293
    %p295 = scmp.ne.s32.totalorder %s286, %s287
    %p296 = scmp.eq.s32.totalorder %s24, 0
    %p297 = por %p295, %p296
    %p298 = scmp.ne.s32.totalorder %s286, %s287
    %p299 = scmp.eq.s32.totalorder %s25, 1
    %p300 = por %p298, %p299
    %p302 = scmp.ne.s32.totalorder %s287, %s301
    %p303 = scmp.eq.s32.totalorder %s25, 0
    %p304 = por %p302, %p303
    %s305 = ssub.s32 %s19, %s26
    %p306 = scmp.eq.s32.totalorder %s305, 0
    %s308 = sadd.s32 %s307, 1
    %s309 = scalar_select %p306, %s307, %s308
    %p312 = pneg %p306
    %p313 = scmp.eq.s32.totalorder %s19, 1
    %p314 = por %p312, %p313
    %p315 = scmp.ne.s32.totalorder %s307, %s310
    %p316 = scmp.eq.s32.totalorder %s19, 0
    %p317 = por %p315, %p316
    %p318 = scmp.ne.s32.totalorder %s307, %s310
    %p319 = scmp.eq.s32.totalorder %s24, 1
    %p320 = por %p318, %p319
    %p321 = scmp.ne.s32.totalorder %s310, %s311
    %p322 = scmp.eq.s32.totalorder %s24, 0
    %p323 = por %p321, %p322
    %p324 = scmp.ne.s32.totalorder %s310, %s311
    %p325 = scmp.eq.s32.totalorder %s25, 1
    %p326 = por %p324, %p325
    %p328 = scmp.ne.s32.totalorder %s311, %s327
    %p329 = scmp.eq.s32.totalorder %s25, 0
    %p330 = por %p328, %p329
    %p331 = scmp.le.s32.totalorder 1, %s19
    %p332 = scmp.lt.s32.totalorder %s19, 3
    %p333 = pnand %p331, %p332
    %p334 = pneg %p333
    // Predicated region
    $region9: #{visible_module_forward.7} parent=5 // pred_check
      _
    $region10: #{visible_module_forward.7} parent=5 // pred_check_branch
      %336 = sbr.rel (%p333) target = $region12
    $region11: #{visible_module_forward.7} parent=5 // pred_region
      %s337 = ssub.s32 %s19, 1
      // Predicated region
      $region13: #{visible_module_forward.7} parent=11 // pred_check
        %p338 = pneg %p66
      $region14: #{visible_module_forward.7} parent=11 // pred_check_branch
        %340 = sbr.rel (%p338) target = $region16
      $region15: #{visible_module_forward.7} parent=11 // pred_region
        _
      $region16: #{visible_module_forward.7} parent=11 // pred_fallthru
        _
      // Predicated region
      $region17: #{visible_module_forward.7} parent=11 // pred_check
        %p341 = pneg %p87
      $region18: #{visible_module_forward.7} parent=11 // pred_check_branch
        %343 = sbr.rel (%p341) target = $region20
      $region19: #{visible_module_forward.7} parent=11 // pred_region
        _
      $region20: #{visible_module_forward.7} parent=11 // pred_fallthru
        _
      // Predicated region
      $region21: #{visible_module_forward.7} parent=11 // pred_check
        %p344 = pneg %p108
      $region22: #{visible_module_forward.7} parent=11 // pred_check_branch
        %346 = sbr.rel (%p344) target = $region24
      $region23: #{visible_module_forward.7} parent=11 // pred_region
        _
      $region24: #{visible_module_forward.7} parent=11 // pred_fallthru
        _
      // Predicated region
      $region25: #{visible_module_forward.7} parent=11 // pred_check
        %p347 = pneg %p129
      $region26: #{visible_module_forward.7} parent=11 // pred_check_branch
        %349 = sbr.rel (%p347) target = $region28
      $region27: #{visible_module_forward.7} parent=11 // pred_region
        _
      $region28: #{visible_module_forward.7} parent=11 // pred_fallthru
        _
      // Predicated region
      $region29: #{visible_module_forward.7} parent=11 // pred_check
        %p350 = pneg %p150
      $region30: #{visible_module_forward.7} parent=11 // pred_check_branch
        %352 = sbr.rel (%p350) target = $region32
      $region31: #{visible_module_forward.7} parent=11 // pred_region
        _
      $region32: #{visible_module_forward.7} parent=11 // pred_fallthru
        _
      // Predicated region
      $region33: #{visible_module_forward.7} parent=11 // pred_check
        %p353 = pneg %p171
      $region34: #{visible_module_forward.7} parent=11 // pred_check_branch
        %355 = sbr.rel (%p353) target = $region36
      $region35: #{visible_module_forward.7} parent=11 // pred_region
        _
      $region36: #{visible_module_forward.7} parent=11 // pred_fallthru
        _
      // Predicated region
      $region37: #{visible_module_forward.7} parent=11 // pred_check
        %p356 = pneg %p192
      $region38: #{visible_module_forward.7} parent=11 // pred_check_branch
        %358 = sbr.rel (%p356) target = $region40
      $region39: #{visible_module_forward.7} parent=11 // pred_region
        _
      $region40: #{visible_module_forward.7} parent=11 // pred_fallthru
        _
      // Predicated region
      $region41: #{visible_module_forward.7} parent=11 // pred_check
        %p359 = pneg %p213
      $region42: #{visible_module_forward.7} parent=11 // pred_check_branch
        %361 = sbr.rel (%p359) target = $region44
      $region43: #{visible_module_forward.7} parent=11 // pred_region
        _
      $region44: #{visible_module_forward.7} parent=11 // pred_fallthru
        _
      // Predicated region
      $region45: #{visible_module_forward.7} parent=11 // pred_check
        %p362 = pneg %p234
      $region46: #{visible_module_forward.7} parent=11 // pred_check_branch
        %364 = sbr.rel (%p362) target = $region48
      $region47: #{visible_module_forward.7} parent=11 // pred_region
        _
      $region48: #{visible_module_forward.7} parent=11 // pred_fallthru
        _
      // Predicated region
      $region49: #{visible_module_forward.7} parent=11 // pred_check
        %p365 = pneg %p255
      $region50: #{visible_module_forward.7} parent=11 // pred_check_branch
        %367 = sbr.rel (%p365) target = $region52
      $region51: #{visible_module_forward.7} parent=11 // pred_region
        _
      $region52: #{visible_module_forward.7} parent=11 // pred_fallthru
        _
      // Predicated region
      $region53: #{visible_module_forward.7} parent=11 // pred_check
        %p368 = pneg %p276
      $region54: #{visible_module_forward.7} parent=11 // pred_check_branch
        %370 = sbr.rel (%p368) target = $region56
      $region55: #{visible_module_forward.7} parent=11 // pred_region
        _
      $region56: #{visible_module_forward.7} parent=11 // pred_fallthru
        _
      // Predicated region
      $region57: #{visible_module_forward.7} parent=11 // pred_check
        %p371 = pneg %p297
      $region58: #{visible_module_forward.7} parent=11 // pred_check_branch
        %373 = sbr.rel (%p371) target = $region60
      $region59: #{visible_module_forward.7} parent=11 // pred_region
        _
      $region60: #{visible_module_forward.7} parent=11 // pred_fallthru
        _
    $region12: #{visible_module_forward.7} parent=5 // pred_fallthru
      _
    %p374 = scmp.lt.s32.totalorder %s19, 2
    // Predicated region
    $region61: #{visible_module_forward.7} parent=5 // pred_check
      %p375 = pneg %p374
    $region62: #{visible_module_forward.7} parent=5 // pred_check_branch
      %377 = sbr.rel (%p375) target = $region64
    $region63: #{visible_module_forward.7} parent=5 // pred_region
      // Predicated region
      $region65: #{visible_module_forward.7} parent=63 // pred_check
        %p378 = pneg %p39
      $region66: #{visible_module_forward.7} parent=63 // pred_check_branch
        %380 = sbr.rel (%p378) target = $region68
      $region67: #{visible_module_forward.7} parent=63 // pred_region
        %p381 = scmp.lt.s32.totalorder %s19, 1
        %s382 = scalar_select %p381, %s19, 1
        %s383 = smul.addr %s382, 8
        %s384 = smul.addr %s383, 4
        %s385 = scalar_lea.vmem %s0, %s384
      $region68: #{visible_module_forward.7} parent=63 // pred_fallthru
        _
    $region64: #{visible_module_forward.7} parent=5 // pred_fallthru
      _
    %p386 = scmp.le.s32.totalorder 1, %s19
    %p387 = scmp.lt.s32.totalorder %s19, 3
    %p388 = pnand %p386, %p387
    %p389 = pneg %p388
    // Predicated region
    $region69: #{visible_module_forward.7} parent=5 // pred_check
      _
    $region70: #{visible_module_forward.7} parent=5 // pred_check_branch
      %391 = sbr.rel (%p388) target = $region72
    $region71: #{visible_module_forward.7} parent=5 // pred_region
      %s392 = ssub.s32 %s19, 1
      %p393 = scmp.lt.s32.totalorder %s24, 1
      %s394 = scalar_select %p393, %s24, 1
      %s395 = smul.addr %s394, 8
      %s396 = smul.addr %s395, 4
      %s397 = scalar_lea.vmem %s0, %s396
      %p398 = pneg %p45
      %p399 = pneg %p42
      %p400 = pneg %p66
      %p401 = pneg %p63
      %p402 = pneg %p87
      %p403 = pneg %p84
      %p404 = pneg %p108
      %p405 = pneg %p105
      %p406 = pneg %p129
      %p407 = pneg %p126
      %p408 = pneg %p150
      %p409 = pneg %p147
      %p410 = pneg %p171
      %p411 = pneg %p168
      %p412 = pneg %p192
      %p413 = pneg %p189
      %p414 = pneg %p213
      %p415 = pneg %p210
      %p416 = pneg %p234
      %p417 = pneg %p231
      %p418 = pneg %p255
      %p419 = pneg %p252
      %p420 = pneg %p276
      %p421 = pneg %p273
      %p422 = pneg %p297
      %p423 = pneg %p294
      %p424 = pneg %p323
      %p425 = pneg %p320
      %p426 = scmp.lt.s32.totalorder %s24, 1
      %s427 = scalar_select %p426, %s24, 1
      %s428 = smul.addr %s427, 16
      %s429 = smul.addr %s428, 4
      %s430 = scalar_lea.vmem %s13, %s429
      %p431 = scmp.lt.s32.totalorder %s24, 1
      %s432 = scalar_select %p431, %s24, 1
      %s433 = smul.addr %s432, 8
      %s434 = smul.addr %s433, 4
      %s435 = scalar_lea.vmem %s0, %s434
      %p436 = scmp.lt.s32.totalorder %s24, 1
      %s437 = scalar_select %p436, %s24, 1
      %s438 = smul.addr %s437, 16
      %s439 = smul.addr %s438, 4
      %s440 = scalar_lea.vmem %s13, %s439
      %v444 = vld [vmem:[%s435] sm:$0xf]
      %v445 = vld [vmem:[%s435 + $0x4] sm:$0xf]
      %v446 = vld [vmem:[%s435 + $0x8] sm:$0xf]
      %v447 = vld [vmem:[%s435 + $0xc] sm:$0xf]
      %v448 = vld [vmem:[%s435 + $0x10] sm:$0xf]
      %v449 = vld [vmem:[%s435 + $0x14] sm:$0xf]
      %v450 = vld [vmem:[%s435 + $0x18] sm:$0xf]
      %v451 = vld [vmem:[%s435 + $0x1c] sm:$0xf]
      %v452 = vld [vmem:[%s1] sm:$0xf]
      %v453 = vld [vmem:[%s1 + $0x4] sm:$0xf]
      %v454 = vld [vmem:[%s1 + $0x8] sm:$0xf]
      %v455 = vld [vmem:[%s1 + $0xc] sm:$0xf]
      %v456 = vld [vmem:[%s1 + $0x10] sm:$0xf]
      %v457 = vld [vmem:[%s1 + $0x14] sm:$0xf]
      %v458 = vld [vmem:[%s1 + $0x18] sm:$0xf]
      %v459 = vld [vmem:[%s1 + $0x1c] sm:$0xf]
      %v460 = vld [vmem:[%s1 + $0x20] sm:$0xf]
      %v461 = vld [vmem:[%s1 + $0x24] sm:$0xf]
      %v462 = vld [vmem:[%s1 + $0x28] sm:$0xf]
      %v463 = vld [vmem:[%s1 + $0x2c] sm:$0xf]
      %v464 = vld [vmem:[%s1 + $0x30] sm:$0xf]
      %v465 = vld [vmem:[%s1 + $0x34] sm:$0xf]
      %v466 = vld [vmem:[%s1 + $0x38] sm:$0xf]
      %v467 = vld [vmem:[%s1 + $0x3c] sm:$0xf]
      %v476 = vunpack.c.l.b16 %v444
      %v477 = vunpack.c.l.b16 %v445
      %v478 = vunpack.c.l.b16 %v446
      %v479 = vunpack.c.l.b16 %v447
      %v480 = vunpack.c.l.b16 %v448
      %v481 = vunpack.c.l.b16 %v449
      %v482 = vunpack.c.l.b16 %v450
      %v483 = vunpack.c.l.b16 %v451
      %v484 = vpack.c.b16 %v477, %v476
      %v485 = vpack.c.b16 %v479, %v478
      %v486 = vpack.c.b16 %v481, %v480
      %v487 = vpack.c.b16 %v483, %v482
      %v508 = vunpack.c.l.b16 %v452
      %v509 = vunpack.c.l.b16 %v453
      %v510 = vunpack.c.l.b16 %v454
      %v511 = vunpack.c.l.b16 %v455
      %v512 = vunpack.c.l.b16 %v456
      %v513 = vunpack.c.l.b16 %v457
      %v514 = vunpack.c.l.b16 %v458
      %v515 = vunpack.c.l.b16 %v459
      %v516 = vunpack.c.l.b16 %v460
      %v517 = vunpack.c.l.b16 %v461
      %v518 = vunpack.c.l.b16 %v462
      %v519 = vunpack.c.l.b16 %v463
      %v520 = vunpack.c.l.b16 %v464
      %v521 = vunpack.c.l.b16 %v465
      %v522 = vunpack.c.l.b16 %v466
      %v523 = vunpack.c.l.b16 %v467
      %v524 = vpack.c.b16 %v509, %v508
      %v525 = vpack.c.b16 %v511, %v510
      %v526 = vpack.c.b16 %v513, %v512
      %v527 = vpack.c.b16 %v515, %v514
      %v528 = vpack.c.b16 %v517, %v516
      %v529 = vpack.c.b16 %v519, %v518
      %v530 = vpack.c.b16 %v521, %v520
      %v531 = vpack.c.b16 %v523, %v522
      %540 = vmatpush.bf16.msra.mxu0 %v531
      %541 = vmatpush.bf16.msra.mxu0 %v530
      %542 = vmatpush.bf16.msra.mxu0 %v529
      %543 = vmatpush.bf16.msra.mxu0 %v528
      %544 = vmatpush.bf16.msra.mxu0 %v527
      %545 = vmatpush.bf16.msra.mxu0 %v526
      %546 = vmatpush.bf16.msra.mxu0 %v525
      %547 = vmatpush.bf16.msra.mxu0 %v524
      %548 = vmatmul.bf16.gmra.mxu0 %v484
      %v549 = vpop.f32.mrf.mxu0
      %v550 = vadd.f32 0.0, %v549
      %v551 = vpop.f32.mrf.mxu0
      %v552 = vadd.f32 0.0, %v551
      %553 = vmatmul.bf16.gmra.mxu0 %v485
      %v554 = vpop.f32.mrf.mxu0
      %v555 = vadd.f32 0.0, %v554
      %v556 = vpop.f32.mrf.mxu0
      %v557 = vadd.f32 0.0, %v556
      %558 = vmatmul.bf16.gmra.mxu0 %v486
      %v559 = vpop.f32.mrf.mxu0
      %v560 = vadd.f32 0.0, %v559
      %v561 = vpop.f32.mrf.mxu0
      %v562 = vadd.f32 0.0, %v561
      %563 = vmatmul.bf16.gmra.mxu0 %v487
      %v564 = vpop.f32.mrf.mxu0
      %v565 = vadd.f32 0.0, %v564
      %v566 = vpop.f32.mrf.mxu0
      %v567 = vadd.f32 0.0, %v566
      %568 = vdwg.mxu0
      %v569 = vld [vmem:[%s2] sm:$0x1]
      %v571 = vperm.slane %v569, 0
      %v573 = vmul.f32 %v550, %v571
      %v574 = vmul.f32 %v552, %v571
      %v575 = vmul.f32 %v555, %v571
      %v576 = vmul.f32 %v557, %v571
      %v577 = vmul.f32 %v560, %v571
      %v578 = vmul.f32 %v562, %v571
      %v579 = vmul.f32 %v565, %v571
      %v580 = vmul.f32 %v567, %v571
      %v581 = vld [vmem:[%s3] sm:$0x1]
      %v583 = vperm.slane %v581, 0
      %v585 = vadd.f32 %v573, %v583
      %v586 = vadd.f32 %v574, %v583
      %v587 = vadd.f32 %v575, %v583
      %v588 = vadd.f32 %v576, %v583
      %v589 = vadd.f32 %v577, %v583
      %v590 = vadd.f32 %v578, %v583
      %v591 = vadd.f32 %v579, %v583
      %v592 = vadd.f32 %v580, %v583
      %v593 = vmax.f32 %v585, 0.0
      %v594 = vmax.f32 %v586, 0.0
      %v595 = vmax.f32 %v587, 0.0
      %v596 = vmax.f32 %v588, 0.0
      %v597 = vmax.f32 %v589, 0.0
      %v598 = vmax.f32 %v590, 0.0
      %v599 = vmax.f32 %v591, 0.0
      %v600 = vmax.f32 %v592, 0.0
      %v601 = vpack.c.bf16 %v593, %v593
      %v602 = vpack.c.bf16 %v594, %v594
      %v603 = vpack.c.bf16 %v595, %v595
      %v604 = vpack.c.bf16 %v596, %v596
      %v605 = vpack.c.bf16 %v597, %v597
      %v606 = vpack.c.bf16 %v598, %v598
      %v607 = vpack.c.bf16 %v599, %v599
      %v608 = vpack.c.bf16 %v600, %v600
      %v617 = vunpack.c.l.b16 %v601
      %v618 = vunpack.c.l.b16 %v602
      %v619 = vunpack.c.l.b16 %v603
      %v620 = vunpack.c.l.b16 %v604
      %v621 = vunpack.c.l.b16 %v605
      %v622 = vunpack.c.l.b16 %v606
      %v623 = vunpack.c.l.b16 %v607
      %v624 = vunpack.c.l.b16 %v608
      %v625 = vpack.c.b16 %v618, %v617
      %v626 = vpack.c.b16 %v620, %v619
      %v627 = vpack.c.b16 %v622, %v621
      %v628 = vpack.c.b16 %v624, %v623
      %v633 = vlaneseq
      %v634 = vshrl.u32 %v633, 7
      %v635 = vadd.s32 %v634, 8
      %v636 = vadd.s32 %v634, 16
      %v637 = vadd.s32 %v634, 24
      %v638 = vadd.s32 %v634, 32
      %v639 = vadd.s32 %v634, 40
      %v640 = vadd.s32 %v634, 48
      %v641 = vadd.s32 %v634, 56
      %vm642 = vcmp.lt.s32.totalorder %v634, 0
      %v643 = vsub.s32 0, %v634
      %v644 = vsel %vm642, %v643, %v634
      %v645 = vshrl.u32 %v644, 3
      %v646 = vand.u32 %v644, 7
      %v647 = vsub.s32 0, %v646
      %v648 = vsel %vm642, %v647, %v646
      %vm649 = vcmp.lt.s32.totalorder %v635, 0
      %v650 = vsub.s32 0, %v635
      %v651 = vsel %vm649, %v650, %v635
      %v652 = vshrl.u32 %v651, 3
      %v653 = vand.u32 %v651, 7
      %v654 = vsub.s32 0, %v653
      %v655 = vsel %vm649, %v654, %v653
      %vm656 = vcmp.lt.s32.totalorder %v636, 0
      %v657 = vsub.s32 0, %v636
      %v658 = vsel %vm656, %v657, %v636
      %v659 = vshrl.u32 %v658, 3
      %v660 = vand.u32 %v658, 7
      %v661 = vsub.s32 0, %v660
      %v662 = vsel %vm656, %v661, %v660
      %vm663 = vcmp.lt.s32.totalorder %v637, 0
      %v664 = vsub.s32 0, %v637
      %v665 = vsel %vm663, %v664, %v637
      %v666 = vshrl.u32 %v665, 3
      %v667 = vand.u32 %v665, 7
      %v668 = vsub.s32 0, %v667
      %v669 = vsel %vm663, %v668, %v667
      %vm670 = vcmp.lt.s32.totalorder %v638, 0
      %v671 = vsub.s32 0, %v638
      %v672 = vsel %vm670, %v671, %v638
      %v673 = vshrl.u32 %v672, 3
      %v674 = vand.u32 %v672, 7
      %v675 = vsub.s32 0, %v674
      %v676 = vsel %vm670, %v675, %v674
      %vm677 = vcmp.lt.s32.totalorder %v639, 0
      %v678 = vsub.s32 0, %v639
      %v679 = vsel %vm677, %v678, %v639
      %v680 = vshrl.u32 %v679, 3
      %v681 = vand.u32 %v679, 7
      %v682 = vsub.s32 0, %v681
      %v683 = vsel %vm677, %v682, %v681
      %vm684 = vcmp.lt.s32.totalorder %v640, 0
      %v685 = vsub.s32 0, %v640
      %v686 = vsel %vm684, %v685, %v640
      %v687 = vshrl.u32 %v686, 3
      %v688 = vand.u32 %v686, 7
      %v689 = vsub.s32 0, %v688
      %v690 = vsel %vm684, %v689, %v688
      %vm691 = vcmp.lt.s32.totalorder %v641, 0
      %v692 = vsub.s32 0, %v641
      %v693 = vsel %vm691, %v692, %v641
      %v694 = vshrl.u32 %v693, 3
      %v695 = vand.u32 %v693, 7
      %v696 = vsub.s32 0, %v695
      %v697 = vsel %vm691, %v696, %v695
      %vm698 = vcmp.ne.s32.totalorder %v648, 0
      %vm699 = vcmp.ne.s32.totalorder %v655, 0
      %vm700 = vcmp.ne.s32.totalorder %v662, 0
      %vm701 = vcmp.ne.s32.totalorder %v669, 0
      %vm702 = vcmp.ne.s32.totalorder %v676, 0
      %vm703 = vcmp.ne.s32.totalorder %v683, 0
      %vm704 = vcmp.ne.s32.totalorder %v690, 0
      %vm705 = vcmp.ne.s32.totalorder %v697, 0
      %vm706 = vcmp.lt.s32.totalorder %v648, 0
      %vm707 = vcmp.lt.s32.totalorder %v655, 0
      %vm708 = vcmp.lt.s32.totalorder %v662, 0
      %vm709 = vcmp.lt.s32.totalorder %v669, 0
      %vm710 = vcmp.lt.s32.totalorder %v676, 0
      %vm711 = vcmp.lt.s32.totalorder %v683, 0
      %vm712 = vcmp.lt.s32.totalorder %v690, 0
      %vm713 = vcmp.lt.s32.totalorder %v697, 0
      %vm714 = vmand %vm706, %vm698
      %vm715 = vmand %vm707, %vm699
      %vm716 = vmand %vm708, %vm700
      %vm717 = vmand %vm709, %vm701
      %vm718 = vmand %vm710, %vm702
      %vm719 = vmand %vm711, %vm703
      %vm720 = vmand %vm712, %vm704
      %vm721 = vmand %vm713, %vm705
      %v722 = vadd.s32 %v648, 8
      %v723 = vadd.s32 %v655, 8
      %v724 = vadd.s32 %v662, 8
      %v725 = vadd.s32 %v669, 8
      %v726 = vadd.s32 %v676, 8
      %v727 = vadd.s32 %v683, 8
      %v728 = vadd.s32 %v690, 8
      %v729 = vadd.s32 %v697, 8
      %v730 = vsel %vm714, %v722, %v648
      %v731 = vsel %vm715, %v723, %v655
      %v732 = vsel %vm716, %v724, %v662
      %v733 = vsel %vm717, %v725, %v669
      %v734 = vsel %vm718, %v726, %v676
      %v735 = vsel %vm719, %v727, %v683
      %v736 = vsel %vm720, %v728, %v690
      %v737 = vsel %vm721, %v729, %v697
      %vm738 = vcmp.ne.s32.totalorder %v730, 0
      %vm739 = vcmp.ne.s32.totalorder %v731, 0
      %vm740 = vcmp.ne.s32.totalorder %v732, 0
      %vm741 = vcmp.ne.s32.totalorder %v733, 0
      %vm742 = vcmp.ne.s32.totalorder %v734, 0
      %vm743 = vcmp.ne.s32.totalorder %v735, 0
      %vm744 = vcmp.ne.s32.totalorder %v736, 0
      %vm745 = vcmp.ne.s32.totalorder %v737, 0
      %vm746 = vcmp.ne.s32.totalorder %v730, 7
      %vm747 = vcmp.ne.s32.totalorder %v731, 7
      %vm748 = vcmp.ne.s32.totalorder %v732, 7
      %vm749 = vcmp.ne.s32.totalorder %v733, 7
      %vm750 = vcmp.ne.s32.totalorder %v734, 7
      %vm751 = vcmp.ne.s32.totalorder %v735, 7
      %vm752 = vcmp.ne.s32.totalorder %v736, 7
      %vm753 = vcmp.ne.s32.totalorder %v737, 7
      %v754 = vsel %vm738, 1, 0
      %v755 = vsel %vm739, 1, 0
      %v756 = vsel %vm740, 1, 0
      %v757 = vsel %vm741, 1, 0
      %v758 = vsel %vm742, 1, 0
      %v759 = vsel %vm743, 1, 0
      %v760 = vsel %vm744, 1, 0
      %v761 = vsel %vm745, 1, 0
      %vm762 = vcmp.eq.s32.totalorder %v754, 1
      %vm763 = vcmp.eq.s32.totalorder %v755, 1
      %vm764 = vcmp.eq.s32.totalorder %v756, 1
      %vm765 = vcmp.eq.s32.totalorder %v757, 1
      %vm766 = vcmp.eq.s32.totalorder %v758, 1
      %vm767 = vcmp.eq.s32.totalorder %v759, 1
      %vm768 = vcmp.eq.s32.totalorder %v760, 1
      %vm769 = vcmp.eq.s32.totalorder %v761, 1
      %vm770 = vmpackc.low %vm762, %vm762
      %vm771 = vmpackc.low %vm763, %vm763
      %vm772 = vmpackc.low %vm764, %vm764
      %vm773 = vmpackc.low %vm765, %vm765
      %vm774 = vmpackc.low %vm766, %vm766
      %vm775 = vmpackc.low %vm767, %vm767
      %vm776 = vmpackc.low %vm768, %vm768
      %vm777 = vmpackc.low %vm769, %vm769
      %v778 = vsel %vm770, 65537, 0
      %v779 = vsel %vm771, 65537, 0
      %v780 = vsel %vm772, 65537, 0
      %v781 = vsel %vm773, 65537, 0
      %v782 = vsel %vm774, 65537, 0
      %v783 = vsel %vm775, 65537, 0
      %v784 = vsel %vm776, 65537, 0
      %v785 = vsel %vm777, 65537, 0
      %v786 = vunpack.c.l.b16 %v778
      %v787 = vunpack.c.l.b16 %v779
      %v788 = vunpack.c.l.b16 %v780
      %v789 = vunpack.c.l.b16 %v781
      %v790 = vunpack.c.l.b16 %v782
      %v791 = vunpack.c.l.b16 %v783
      %v792 = vunpack.c.l.b16 %v784
      %v793 = vunpack.c.l.b16 %v785
      %v794 = vpack.c.b16 %v787, %v786
      %v795 = vpack.c.b16 %v789, %v788
      %v796 = vpack.c.b16 %v791, %v790
      %v797 = vpack.c.b16 %v793, %v792
      %vm798 = vsmask.f32 3328
      %v800 = vshrl.u32 %v794, 16
      %v802 = vrot.slane %v800, 4
      %v803 = vshll.u32 %v794, 16
      %v805 = vrot.slane %v803, 5
      %v806 = vor.u32 %v802, %v805
      %v808 = vshrl.u32 %v795, 16
      %v810 = vrot.slane %v808, 4
      %v811 = vshll.u32 %v795, 16
      %v813 = vrot.slane %v811, 5
      %v814 = vor.u32 %v810, %v813
      %v815 = vsel %vm798, %v806, %v814
      %v817 = vshrl.u32 %v796, 16
      %v819 = vrot.slane %v817, 4
      %v820 = vshll.u32 %v796, 16
      %v822 = vrot.slane %v820, 5
      %v823 = vor.u32 %v819, %v822
      %v824 = vsel %vm798, %v814, %v823
      %v826 = vshrl.u32 %v797, 16
      %v828 = vrot.slane %v826, 4
      %v829 = vshll.u32 %v797, 16
      %v831 = vrot.slane %v829, 5
      %v832 = vor.u32 %v828, %v831
      %v833 = vsel %vm798, %v823, %v832
      %v834 = vunpack.c.l.b16 %v815
      %v835 = vunpack.c.h.b16 %v815
      %v836 = vunpack.c.l.b16 0
      %v837 = vunpack.c.h.b16 0
      %vm838 = vcmp.ne.s32.totalorder %v834, %v836
      %vm839 = vcmp.ne.s32.totalorder %v835, %v837
      %vm840 = vmpackc.low %vm839, %vm838
      %v841 = vunpack.c.l.b16 %v824
      %v842 = vunpack.c.h.b16 %v824
      %v843 = vunpack.c.l.b16 0
      %v844 = vunpack.c.h.b16 0
      %vm845 = vcmp.ne.s32.totalorder %v841, %v843
      %vm846 = vcmp.ne.s32.totalorder %v842, %v844
      %vm847 = vmpackc.low %vm846, %vm845
      %v848 = vunpack.c.l.b16 %v833
      %v849 = vunpack.c.h.b16 %v833
      %v850 = vunpack.c.l.b16 0
      %v851 = vunpack.c.h.b16 0
      %vm852 = vcmp.ne.s32.totalorder %v848, %v850
      %vm853 = vcmp.ne.s32.totalorder %v849, %v851
      %vm854 = vmpackc.low %vm853, %vm852
      %v855 = vunpack.c.l.b16 %v832
      %v856 = vunpack.c.h.b16 %v832
      %v857 = vunpack.c.l.b16 0
      %v858 = vunpack.c.h.b16 0
      %vm859 = vcmp.ne.s32.totalorder %v855, %v857
      %vm860 = vcmp.ne.s32.totalorder %v856, %v858
      %vm861 = vmpackc.low %vm860, %vm859
      %v862 = vsel %vm840, %v625, 0
      %v863 = vsel %vm847, %v626, 0
      %v864 = vsel %vm854, %v627, 0
      %v865 = vsel %vm861, %v628, 0
      %v866 = vsel %vm746, 1, 0
      %v867 = vsel %vm747, 1, 0
      %v868 = vsel %vm748, 1, 0
      %v869 = vsel %vm749, 1, 0
      %v870 = vsel %vm750, 1, 0
      %v871 = vsel %vm751, 1, 0
      %v872 = vsel %vm752, 1, 0
      %v873 = vsel %vm753, 1, 0
      %vm874 = vcmp.eq.s32.totalorder %v866, 1
      %vm875 = vcmp.eq.s32.totalorder %v867, 1
      %vm876 = vcmp.eq.s32.totalorder %v868, 1
      %vm877 = vcmp.eq.s32.totalorder %v869, 1
      %vm878 = vcmp.eq.s32.totalorder %v870, 1
      %vm879 = vcmp.eq.s32.totalorder %v871, 1
      %vm880 = vcmp.eq.s32.totalorder %v872, 1
      %vm881 = vcmp.eq.s32.totalorder %v873, 1
      %vm882 = vmpackc.low %vm874, %vm874
      %vm883 = vmpackc.low %vm875, %vm875
      %vm884 = vmpackc.low %vm876, %vm876
      %vm885 = vmpackc.low %vm877, %vm877
      %vm886 = vmpackc.low %vm878, %vm878
      %vm887 = vmpackc.low %vm879, %vm879
      %vm888 = vmpackc.low %vm880, %vm880
      %vm889 = vmpackc.low %vm881, %vm881
      %v890 = vsel %vm882, 65537, 0
      %v891 = vsel %vm883, 65537, 0
      %v892 = vsel %vm884, 65537, 0
      %v893 = vsel %vm885, 65537, 0
      %v894 = vsel %vm886, 65537, 0
      %v895 = vsel %vm887, 65537, 0
      %v896 = vsel %vm888, 65537, 0
      %v897 = vsel %vm889, 65537, 0
      %v898 = vunpack.c.l.b16 %v890
      %v899 = vunpack.c.l.b16 %v891
      %v900 = vunpack.c.l.b16 %v892
      %v901 = vunpack.c.l.b16 %v893
      %v902 = vunpack.c.l.b16 %v894
      %v903 = vunpack.c.l.b16 %v895
      %v904 = vunpack.c.l.b16 %v896
      %v905 = vunpack.c.l.b16 %v897
      %v906 = vpack.c.b16 %v899, %v898
      %v907 = vpack.c.b16 %v901, %v900
      %v908 = vpack.c.b16 %v903, %v902
      %v909 = vpack.c.b16 %v905, %v904
      %vm910 = vsmask.f32 4352
      %v912 = vshrl.u32 %v906, 16
      %v914 = vrot.slane %v912, 3
      %v915 = vshll.u32 %v906, 16
      %v917 = vrot.slane %v915, 4
      %v918 = vor.u32 %v914, %v917
      %v920 = vshrl.u32 %v907, 16
      %v922 = vrot.slane %v920, 3
      %v923 = vshll.u32 %v907, 16
      %v925 = vrot.slane %v923, 4
      %v926 = vor.u32 %v922, %v925
      %v927 = vsel %vm910, %v918, %v926
      %v929 = vshrl.u32 %v908, 16
      %v931 = vrot.slane %v929, 3
      %v932 = vshll.u32 %v908, 16
      %v934 = vrot.slane %v932, 4
      %v935 = vor.u32 %v931, %v934
      %v936 = vsel %vm910, %v926, %v935
      %v938 = vshrl.u32 %v909, 16
      %v940 = vrot.slane %v938, 3
      %v941 = vshll.u32 %v909, 16
      %v943 = vrot.slane %v941, 4
      %v944 = vor.u32 %v940, %v943
      %v945 = vsel %vm910, %v935, %v944
      %v946 = vunpack.c.l.b16 %v927
      %v947 = vunpack.c.h.b16 %v927
      %v948 = vunpack.c.l.b16 0
      %v949 = vunpack.c.h.b16 0
      %vm950 = vcmp.ne.s32.totalorder %v946, %v948
      %vm951 = vcmp.ne.s32.totalorder %v947, %v949
      %vm952 = vmpackc.low %vm951, %vm950
      %v953 = vunpack.c.l.b16 %v936
      %v954 = vunpack.c.h.b16 %v936
      %v955 = vunpack.c.l.b16 0
      %v956 = vunpack.c.h.b16 0
      %vm957 = vcmp.ne.s32.totalorder %v953, %v955
      %vm958 = vcmp.ne.s32.totalorder %v954, %v956
      %vm959 = vmpackc.low %vm958, %vm957
      %v960 = vunpack.c.l.b16 %v945
      %v961 = vunpack.c.h.b16 %v945
      %v962 = vunpack.c.l.b16 0
      %v963 = vunpack.c.h.b16 0
      %vm964 = vcmp.ne.s32.totalorder %v960, %v962
      %vm965 = vcmp.ne.s32.totalorder %v961, %v963
      %vm966 = vmpackc.low %vm965, %vm964
      %v967 = vunpack.c.l.b16 %v944
      %v968 = vunpack.c.h.b16 %v944
      %v969 = vunpack.c.l.b16 0
      %v970 = vunpack.c.h.b16 0
      %vm971 = vcmp.ne.s32.totalorder %v967, %v969
      %vm972 = vcmp.ne.s32.totalorder %v968, %v970
      %vm973 = vmpackc.low %vm972, %vm971
      %v974 = vsel %vm952, %v625, 0
      %v975 = vsel %vm959, %v626, 0
      %v976 = vsel %vm966, %v627, 0
      %v977 = vsel %vm973, %v628, 0
      %vm978 = vsmask.f32 7424
      %v979 = vrot.slane %v803, 1
      %v980 = vor.u32 %v800, %v979
      %v981 = vrot.slane %v811, 1
      %v982 = vsel %vm978, %v980, %v981
      %v983 = vor.u32 %v808, %v981
      %v984 = vrot.slane %v820, 1
      %v985 = vsel %vm978, %v983, %v984
      %v986 = vor.u32 %v817, %v984
      %v987 = vrot.slane %v829, 1
      %v988 = vsel %vm978, %v986, %v987
      %v989 = vor.u32 %v826, %v987
      %v990 = vunpack.c.l.b16 %v982
      %v991 = vunpack.c.h.b16 %v982
      %v992 = vunpack.c.l.b16 0
      %v993 = vunpack.c.h.b16 0
      %vm994 = vcmp.ne.s32.totalorder %v990, %v992
      %vm995 = vcmp.ne.s32.totalorder %v991, %v993
      %vm996 = vmpackc.low %vm995, %vm994
      %v997 = vunpack.c.l.b16 %v985
      %v998 = vunpack.c.h.b16 %v985
      %v999 = vunpack.c.l.b16 0
      %v1000 = vunpack.c.h.b16 0
      %vm1001 = vcmp.ne.s32.totalorder %v997, %v999
      %vm1002 = vcmp.ne.s32.totalorder %v998, %v1000
      %vm1003 = vmpackc.low %vm1002, %vm1001
      %v1004 = vunpack.c.l.b16 %v988
      %v1005 = vunpack.c.h.b16 %v988
      %v1006 = vunpack.c.l.b16 0
      %v1007 = vunpack.c.h.b16 0
      %vm1008 = vcmp.ne.s32.totalorder %v1004, %v1006
      %vm1009 = vcmp.ne.s32.totalorder %v1005, %v1007
      %vm1010 = vmpackc.low %vm1009, %vm1008
      %v1011 = vunpack.c.l.b16 %v989
      %v1012 = vunpack.c.h.b16 %v989
      %v1013 = vunpack.c.l.b16 0
      %v1014 = vunpack.c.h.b16 0
      %vm1015 = vcmp.ne.s32.totalorder %v1011, %v1013
      %vm1016 = vcmp.ne.s32.totalorder %v1012, %v1014
      %vm1017 = vmpackc.low %vm1016, %vm1015
      %v1018 = vsel %vm996, %v625, 0
      %v1019 = vsel %vm1003, %v626, 0
      %v1020 = vsel %vm1010, %v627, 0
      %v1021 = vsel %vm1017, %v628, 0
      %vm1022 = vsmask.f32 256
      %v1023 = vrot.slane %v912, 7
      %v1024 = vor.u32 %v1023, %v915
      %v1025 = vrot.slane %v920, 7
      %v1026 = vor.u32 %v1025, %v923
      %v1027 = vsel %vm1022, %v1023, %v1026
      %v1028 = vrot.slane %v929, 7
      %v1029 = vor.u32 %v1028, %v932
      %v1030 = vsel %vm1022, %v1025, %v1029
      %v1031 = vrot.slane %v938, 7
      %v1032 = vor.u32 %v1031, %v941
      %v1033 = vsel %vm1022, %v1028, %v1032
      %v1034 = vunpack.c.l.b16 %v1024
      %v1035 = vunpack.c.h.b16 %v1024
      %v1036 = vunpack.c.l.b16 0
      %v1037 = vunpack.c.h.b16 0
      %vm1038 = vcmp.ne.s32.totalorder %v1034, %v1036
      %vm1039 = vcmp.ne.s32.totalorder %v1035, %v1037
      %vm1040 = vmpackc.low %vm1039, %vm1038
      %v1041 = vunpack.c.l.b16 %v1027
      %v1042 = vunpack.c.h.b16 %v1027
      %v1043 = vunpack.c.l.b16 0
      %v1044 = vunpack.c.h.b16 0
      %vm1045 = vcmp.ne.s32.totalorder %v1041, %v1043
      %vm1046 = vcmp.ne.s32.totalorder %v1042, %v1044
      %vm1047 = vmpackc.low %vm1046, %vm1045
      %v1048 = vunpack.c.l.b16 %v1030
      %v1049 = vunpack.c.h.b16 %v1030
      %v1050 = vunpack.c.l.b16 0
      %v1051 = vunpack.c.h.b16 0
      %vm1052 = vcmp.ne.s32.totalorder %v1048, %v1050
      %vm1053 = vcmp.ne.s32.totalorder %v1049, %v1051
      %vm1054 = vmpackc.low %vm1053, %vm1052
      %v1055 = vunpack.c.l.b16 %v1033
      %v1056 = vunpack.c.h.b16 %v1033
      %v1057 = vunpack.c.l.b16 0
      %v1058 = vunpack.c.h.b16 0
      %vm1059 = vcmp.ne.s32.totalorder %v1055, %v1057
      %vm1060 = vcmp.ne.s32.totalorder %v1056, %v1058
      %vm1061 = vmpackc.low %vm1060, %vm1059
      %v1062 = vsel %vm1040, %v625, 0
      %v1063 = vsel %vm1047, %v626, 0
      %v1064 = vsel %vm1054, %v627, 0
      %v1065 = vsel %vm1061, %v628, 0
      %v1066 = vunpack.c.l.b16 %v806
      %v1067 = vunpack.c.h.b16 %v806
      %v1068 = vunpack.c.l.b16 0
      %v1069 = vunpack.c.h.b16 0
      %vm1070 = vcmp.ne.s32.totalorder %v1066, %v1068
      %vm1071 = vcmp.ne.s32.totalorder %v1067, %v1069
      %vm1072 = vmpackc.low %vm1071, %vm1070
      %v1073 = vsel %vm1072, %v625, 0
      %v1074 = vsel %vm840, %v626, 0
      %v1075 = vsel %vm847, %v627, 0
      %v1076 = vsel %vm854, %v628, 0
      %v1077 = vunpack.c.l.b16 %v918
      %v1078 = vunpack.c.h.b16 %v918
      %v1079 = vunpack.c.l.b16 0
      %v1080 = vunpack.c.h.b16 0
      %vm1081 = vcmp.ne.s32.totalorder %v1077, %v1079
      %vm1082 = vcmp.ne.s32.totalorder %v1078, %v1080
      %vm1083 = vmpackc.low %vm1082, %vm1081
      %v1084 = vsel %vm1083, %v625, 0
      %v1085 = vsel %vm952, %v626, 0
      %v1086 = vsel %vm959, %v627, 0
      %v1087 = vsel %vm966, %v628, 0
      %v1089 = vshrl.u32 0, 16
      %v1091 = vshll.u32 0, 16
      %v1093 = vrot.slane %v1091, 1
      %v1094 = vor.u32 %v1089, %v1093
      %v1096 = vshll.u32 %v625, 16
      %v1098 = vrot.slane %v1096, 1
      %v1099 = vsel %vm978, %v1094, %v1098
      %v1100 = vshrl.u32 %v625, 16
      %v1102 = vor.u32 %v1100, %v1098
      %v1104 = vshll.u32 %v626, 16
      %v1106 = vrot.slane %v1104, 1
      %v1107 = vsel %vm978, %v1102, %v1106
      %v1108 = vshrl.u32 %v626, 16
      %v1110 = vor.u32 %v1108, %v1106
      %v1112 = vshll.u32 %v627, 16
      %v1114 = vrot.slane %v1112, 1
      %v1115 = vsel %vm978, %v1110, %v1114
      %v1116 = vshrl.u32 %v627, 16
      %v1118 = vor.u32 %v1116, %v1114
      %v1120 = vshll.u32 %v628, 16
      %v1122 = vrot.slane %v1120, 1
      %v1123 = vsel %vm978, %v1118, %v1122
      %v1124 = vshrl.u32 %v628, 16
      %v1126 = vor.u32 %v1124, %v1122
      %1127 = vrot.lane.b32.xlu0 %v1099, 64
      %v1128 = vpop.permute.xlu0 %1127
      %1129 = vrot.lane.b32.xlu0 %v1107, 64
      %v1130 = vpop.permute.xlu0 %1129
      %1131 = vrot.lane.b32.xlu0 %v1115, 64
      %v1132 = vpop.permute.xlu0 %1131
      %1133 = vrot.lane.b32.xlu0 %v1123, 64
      %v1134 = vpop.permute.xlu0 %1133
      %1135 = vrot.lane.b32.xlu0 %v1126, 64
      %v1136 = vpop.permute.xlu0 %1135
      %vm1142 = vcmask 1046528
      %v1143 = vrot.slane 0, 1
      %v1144 = vrot.slane %v974, 1
      %v1145 = vsel %vm1142, %v1143, %v1144
      %v1146 = vrot.slane %v975, 1
      %v1147 = vsel %vm1142, %v1144, %v1146
      %v1148 = vrot.slane %v976, 1
      %v1149 = vsel %vm1142, %v1146, %v1148
      %v1150 = vrot.slane %v977, 1
      %v1151 = vsel %vm1142, %v1148, %v1150
      %vm1156 = vcmask 1043456
      %v1157 = vrot.slane 0, 4
      %v1158 = vrot.slane %v1018, 4
      %v1159 = vsel %vm1156, %v1157, %v1158
      %v1160 = vrot.slane %v1019, 4
      %v1161 = vsel %vm1156, %v1158, %v1160
      %v1162 = vrot.slane %v1020, 4
      %v1163 = vsel %vm1156, %v1160, %v1162
      %v1164 = vrot.slane %v1021, 4
      %v1165 = vsel %vm1156, %v1162, %v1164
      %1166 = vrot.lane.b32.xlu0 %v1159, 64
      %v1167 = vpop.permute.xlu0 %1166
      %1168 = vrot.lane.b32.xlu0 %v1161, 64
      %v1169 = vpop.permute.xlu0 %1168
      %1170 = vrot.lane.b32.xlu0 %v1163, 64
      %v1171 = vpop.permute.xlu0 %1170
      %1172 = vrot.lane.b32.xlu0 %v1165, 64
      %v1173 = vpop.permute.xlu0 %1172
      %1174 = vrot.lane.b32.xlu0 %v1164, 64
      %v1175 = vpop.permute.xlu0 %1174
      %v1176 = vrot.slane %v1100, 4
      %v1177 = vrot.slane %v1096, 5
      %v1178 = vor.u32 %v1176, %v1177
      %v1179 = vrot.slane %v1108, 4
      %v1180 = vrot.slane %v1104, 5
      %v1181 = vor.u32 %v1179, %v1180
      %v1182 = vsel %vm798, %v1178, %v1181
      %v1183 = vrot.slane %v1116, 4
      %v1184 = vrot.slane %v1112, 5
      %v1185 = vor.u32 %v1183, %v1184
      %v1186 = vsel %vm798, %v1181, %v1185
      %v1187 = vrot.slane %v1124, 4
      %v1188 = vrot.slane %v1120, 5
      %v1189 = vor.u32 %v1187, %v1188
      %v1190 = vsel %vm798, %v1185, %v1189
      %vm1195 = vcmask 1042432
      %v1196 = vrot.slane %v1062, 5
      %v1197 = vrot.slane %v1063, 5
      %v1198 = vsel %vm1195, %v1196, %v1197
      %v1199 = vrot.slane %v1064, 5
      %v1200 = vsel %vm1195, %v1197, %v1199
      %v1201 = vrot.slane %v1065, 5
      %v1202 = vsel %vm1195, %v1199, %v1201
      %v1203 = vrot.slane 0, 5
      %v1204 = vsel %vm1195, %v1201, %v1203
      %1205 = vrot.lane.b32.xlu0 %v1196, 64
      %v1206 = vpop.permute.xlu0 %1205
      %1207 = vrot.lane.b32.xlu0 %v1198, 64
      %v1208 = vpop.permute.xlu0 %1207
      %1209 = vrot.lane.b32.xlu0 %v1200, 64
      %v1210 = vpop.permute.xlu0 %1209
      %1211 = vrot.lane.b32.xlu0 %v1202, 64
      %v1212 = vpop.permute.xlu0 %1211
      %1213 = vrot.lane.b32.xlu0 %v1204, 64
      %v1214 = vpop.permute.xlu0 %1213
      %v1215 = vsel %vm978, %v1126, %v1093
      %1216 = vrot.lane.b32.xlu0 %v1215, 64
      %v1217 = vpop.permute.xlu0 %1216
      %1218 = vrot.lane.b32.xlu0 %v1094, 64
      %v1219 = vpop.permute.xlu0 %1218
      %v1224 = vrot.slane %v1084, 1
      %v1225 = vrot.slane %v1085, 1
      %v1226 = vsel %vm1142, %v1224, %v1225
      %v1227 = vrot.slane %v1086, 1
      %v1228 = vsel %vm1142, %v1225, %v1227
      %v1229 = vrot.slane %v1087, 1
      %v1230 = vsel %vm1142, %v1227, %v1229
      %v1231 = vsel %vm1142, %v1229, %v1143
      %vm1232 = vcmask 523264
      %v1234 = vsel %vm1232, 0, %v1128
      %v1237 = vsel %vm1232, %v862, %v1130
      %v1240 = vsel %vm1232, %v863, %v1132
      %v1243 = vsel %vm1232, %v864, %v1134
      %v1246 = vsel %vm1232, %v865, %v1136
      %v1249 = vsel %vm1232, %v1145, %v1167
      %v1252 = vsel %vm1232, %v1147, %v1169
      %v1255 = vsel %vm1232, %v1149, %v1171
      %v1258 = vsel %vm1232, %v1151, %v1173
      %v1261 = vsel %vm1232, %v1150, %v1175
      %v1264 = vsel %vm1232, %v1178, %v1206
      %v1267 = vsel %vm1232, %v1182, %v1208
      %v1270 = vsel %vm1232, %v1186, %v1210
      %v1273 = vsel %vm1232, %v1190, %v1212
      %v1276 = vsel %vm1232, %v1189, %v1214
      %v1278 = vsel %vm1232, %v1073, %v1130
      %v1280 = vsel %vm1232, %v1074, %v1132
      %v1282 = vsel %vm1232, %v1075, %v1134
      %v1285 = vsel %vm1232, %v1076, %v1217
      %v1287 = vsel %vm1232, 0, %v1219
      %v1288 = vld [vmem:[%s4] sm:$0xf]
      %v1289 = vld [vmem:[%s4 + $0x4] sm:$0xf]
      %v1290 = vld [vmem:[%s4 + $0x8] sm:$0xf]
      %v1291 = vld [vmem:[%s4 + $0xc] sm:$0xf]
      %v1292 = vld [vmem:[%s4 + $0x10] sm:$0xf]
      %v1293 = vld [vmem:[%s4 + $0x14] sm:$0xf]
      %v1294 = vld [vmem:[%s4 + $0x18] sm:$0xf]
      %v1295 = vld [vmem:[%s4 + $0x1c] sm:$0xf]
      %v1296 = vld [vmem:[%s4 + $0x20] sm:$0xf]
      %v1297 = vld [vmem:[%s4 + $0x24] sm:$0xf]
      %v1298 = vld [vmem:[%s4 + $0x28] sm:$0xf]
      %v1299 = vld [vmem:[%s4 + $0x2c] sm:$0xf]
      %v1300 = vld [vmem:[%s4 + $0x30] sm:$0xf]
      %v1301 = vld [vmem:[%s4 + $0x34] sm:$0xf]
      %v1302 = vld [vmem:[%s4 + $0x38] sm:$0xf]
      %v1303 = vld [vmem:[%s4 + $0x3c] sm:$0xf]
      %v1304 = vld [vmem:[%s4 + $0x40] sm:$0xf]
      %v1305 = vld [vmem:[%s4 + $0x44] sm:$0xf]
      %v1306 = vld [vmem:[%s4 + $0x48] sm:$0xf]
      %v1307 = vld [vmem:[%s4 + $0x4c] sm:$0xf]
      %v1308 = vld [vmem:[%s4 + $0x50] sm:$0xf]
      %v1309 = vld [vmem:[%s4 + $0x54] sm:$0xf]
      %v1310 = vld [vmem:[%s4 + $0x58] sm:$0xf]
      %v1311 = vld [vmem:[%s4 + $0x5c] sm:$0xf]
      %v1312 = vld [vmem:[%s4 + $0x60] sm:$0xf]
      %v1313 = vld [vmem:[%s4 + $0x64] sm:$0xf]
      %v1314 = vld [vmem:[%s4 + $0x68] sm:$0xf]
      %v1315 = vld [vmem:[%s4 + $0x6c] sm:$0xf]
      %v1316 = vld [vmem:[%s4 + $0x70] sm:$0xf]
      %v1317 = vld [vmem:[%s4 + $0x74] sm:$0xf]
      %v1318 = vld [vmem:[%s4 + $0x78] sm:$0xf]
      %v1319 = vld [vmem:[%s4 + $0x7c] sm:$0xf]
      %v1320 = vld [vmem:[%s4 + $0x80] sm:$0xf]
      %v1321 = vld [vmem:[%s4 + $0x84] sm:$0xf]
      %v1322 = vld [vmem:[%s4 + $0x88] sm:$0xf]
      %v1323 = vld [vmem:[%s4 + $0x8c] sm:$0xf]
      %v1324 = vld [vmem:[%s4 + $0x90] sm:$0xf]
      %v1325 = vld [vmem:[%s4 + $0x94] sm:$0xf]
      %v1326 = vld [vmem:[%s4 + $0x98] sm:$0xf]
      %v1327 = vld [vmem:[%s4 + $0x9c] sm:$0xf]
      %v1328 = vld [vmem:[%s4 + $0xa0] sm:$0xf]
      %v1329 = vld [vmem:[%s4 + $0xa4] sm:$0xf]
      %v1330 = vld [vmem:[%s4 + $0xa8] sm:$0xf]
      %v1331 = vld [vmem:[%s4 + $0xac] sm:$0xf]
      %v1332 = vld [vmem:[%s4 + $0xb0] sm:$0xf]
      %v1333 = vld [vmem:[%s4 + $0xb4] sm:$0xf]
      %v1334 = vld [vmem:[%s4 + $0xb8] sm:$0xf]
      %v1335 = vld [vmem:[%s4 + $0xbc] sm:$0xf]
      %v1336 = vld [vmem:[%s4 + $0xc0] sm:$0xf]
      %v1337 = vld [vmem:[%s4 + $0xc4] sm:$0xf]
      %v1338 = vld [vmem:[%s4 + $0xc8] sm:$0xf]
      %v1339 = vld [vmem:[%s4 + $0xcc] sm:$0xf]
      %v1340 = vld [vmem:[%s4 + $0xd0] sm:$0xf]
      %v1341 = vld [vmem:[%s4 + $0xd4] sm:$0xf]
      %v1342 = vld [vmem:[%s4 + $0xd8] sm:$0xf]
      %v1343 = vld [vmem:[%s4 + $0xdc] sm:$0xf]
      %v1344 = vld [vmem:[%s4 + $0xe0] sm:$0xf]
      %v1345 = vld [vmem:[%s4 + $0xe4] sm:$0xf]
      %v1346 = vld [vmem:[%s4 + $0xe8] sm:$0xf]
      %v1347 = vld [vmem:[%s4 + $0xec] sm:$0xf]
      %v1348 = vld [vmem:[%s4 + $0xf0] sm:$0xf]
      %v1349 = vld [vmem:[%s4 + $0xf4] sm:$0xf]
      %v1350 = vld [vmem:[%s4 + $0xf8] sm:$0xf]
      %v1351 = vld [vmem:[%s4 + $0xfc] sm:$0xf]
      %v1352 = vld [vmem:[%s4 + $0x100] sm:$0xf]
      %v1353 = vld [vmem:[%s4 + $0x104] sm:$0xf]
      %v1354 = vld [vmem:[%s4 + $0x108] sm:$0xf]
      %v1355 = vld [vmem:[%s4 + $0x10c] sm:$0xf]
      %v1356 = vld [vmem:[%s4 + $0x110] sm:$0xf]
      %v1357 = vld [vmem:[%s4 + $0x114] sm:$0xf]
      %v1358 = vld [vmem:[%s4 + $0x118] sm:$0xf]
      %v1359 = vld [vmem:[%s4 + $0x11c] sm:$0xf]
      %v1360 = vshrl.u32 %v1234, 16
      %v1362 = vrot.slane %v1360, 3
      %v1363 = vshll.u32 %v1234, 16
      %v1365 = vrot.slane %v1363, 4
      %v1366 = vor.u32 %v1362, %v1365
      %v1367 = vshrl.u32 %v1237, 16
      %v1369 = vrot.slane %v1367, 3
      %v1370 = vshll.u32 %v1237, 16
      %v1372 = vrot.slane %v1370, 4
      %v1373 = vor.u32 %v1369, %v1372
      %v1374 = vsel %vm910, %v1366, %v1373
      %v1375 = vshrl.u32 %v1249, 16
      %v1377 = vrot.slane %v1375, 3
      %v1378 = vshll.u32 %v1249, 16
      %v1380 = vrot.slane %v1378, 4
      %v1381 = vor.u32 %v1377, %v1380
      %v1382 = vshrl.u32 %v1252, 16
      %v1384 = vrot.slane %v1382, 3
      %v1385 = vshll.u32 %v1252, 16
      %v1387 = vrot.slane %v1385, 4
      %v1388 = vor.u32 %v1384, %v1387
      %v1389 = vsel %vm910, %v1381, %v1388
      %v1390 = vshrl.u32 %v1264, 16
      %v1392 = vrot.slane %v1390, 3
      %v1393 = vshll.u32 %v1264, 16
      %v1395 = vrot.slane %v1393, 4
      %v1396 = vor.u32 %v1392, %v1395
      %v1397 = vshrl.u32 %v1267, 16
      %v1399 = vrot.slane %v1397, 3
      %v1400 = vshll.u32 %v1267, 16
      %v1402 = vrot.slane %v1400, 4
      %v1403 = vor.u32 %v1399, %v1402
      %v1404 = vsel %vm910, %v1396, %v1403
      %v1405 = vshrl.u32 %v1278, 16
      %v1407 = vrot.slane %v1405, 3
      %v1408 = vshll.u32 %v1278, 16
      %v1410 = vrot.slane %v1408, 4
      %v1411 = vor.u32 %v1407, %v1410
      %v1412 = vshrl.u32 %v1280, 16
      %v1414 = vrot.slane %v1412, 3
      %v1415 = vshll.u32 %v1280, 16
      %v1417 = vrot.slane %v1415, 4
      %v1418 = vor.u32 %v1414, %v1417
      %v1419 = vsel %vm910, %v1411, %v1418
      %v1421 = vshrl.u32 %v1226, 16
      %v1423 = vrot.slane %v1421, 3
      %v1424 = vshll.u32 %v1226, 16
      %v1426 = vrot.slane %v1424, 4
      %v1427 = vor.u32 %v1423, %v1426
      %v1429 = vshrl.u32 %v1228, 16
      %v1431 = vrot.slane %v1429, 3
      %v1432 = vshll.u32 %v1228, 16
      %v1434 = vrot.slane %v1432, 4
      %v1435 = vor.u32 %v1431, %v1434
      %v1436 = vsel %vm910, %v1427, %v1435
      %v1437 = vshrl.u32 %v1240, 16
      %v1439 = vrot.slane %v1437, 3
      %v1440 = vshll.u32 %v1240, 16
      %v1442 = vrot.slane %v1440, 4
      %v1443 = vor.u32 %v1439, %v1442
      %v1444 = vsel %vm910, %v1373, %v1443
      %v1445 = vshrl.u32 %v1255, 16
      %v1447 = vrot.slane %v1445, 3
      %v1448 = vshll.u32 %v1255, 16
      %v1450 = vrot.slane %v1448, 4
      %v1451 = vor.u32 %v1447, %v1450
      %v1452 = vsel %vm910, %v1388, %v1451
      %v1453 = vshrl.u32 %v1270, 16
      %v1455 = vrot.slane %v1453, 3
      %v1456 = vshll.u32 %v1270, 16
      %v1458 = vrot.slane %v1456, 4
      %v1459 = vor.u32 %v1455, %v1458
      %v1460 = vsel %vm910, %v1403, %v1459
      %v1461 = vshrl.u32 %v1282, 16
      %v1463 = vrot.slane %v1461, 3
      %v1464 = vshll.u32 %v1282, 16
      %v1466 = vrot.slane %v1464, 4
      %v1467 = vor.u32 %v1463, %v1466
      %v1468 = vsel %vm910, %v1418, %v1467
      %v1470 = vshrl.u32 %v1230, 16
      %v1472 = vrot.slane %v1470, 3
      %v1473 = vshll.u32 %v1230, 16
      %v1475 = vrot.slane %v1473, 4
      %v1476 = vor.u32 %v1472, %v1475
      %v1477 = vsel %vm910, %v1435, %v1476
      %v1478 = vshrl.u32 %v1243, 16
      %v1480 = vrot.slane %v1478, 3
      %v1481 = vshll.u32 %v1243, 16
      %v1483 = vrot.slane %v1481, 4
      %v1484 = vor.u32 %v1480, %v1483
      %v1485 = vsel %vm910, %v1443, %v1484
      %v1486 = vshrl.u32 %v1258, 16
      %v1488 = vrot.slane %v1486, 3
      %v1489 = vshll.u32 %v1258, 16
      %v1491 = vrot.slane %v1489, 4
      %v1492 = vor.u32 %v1488, %v1491
      %v1493 = vsel %vm910, %v1451, %v1492
      %v1494 = vshrl.u32 %v1273, 16
      %v1496 = vrot.slane %v1494, 3
      %v1497 = vshll.u32 %v1273, 16
      %v1499 = vrot.slane %v1497, 4
      %v1500 = vor.u32 %v1496, %v1499
      %v1501 = vsel %vm910, %v1459, %v1500
      %v1502 = vshrl.u32 %v1285, 16
      %v1504 = vrot.slane %v1502, 3
      %v1505 = vshll.u32 %v1285, 16
      %v1507 = vrot.slane %v1505, 4
      %v1508 = vor.u32 %v1504, %v1507
      %v1509 = vsel %vm910, %v1467, %v1508
      %v1511 = vshrl.u32 %v1231, 16
      %v1513 = vrot.slane %v1511, 3
      %v1514 = vshll.u32 %v1231, 16
      %v1516 = vrot.slane %v1514, 4
      %v1517 = vor.u32 %v1513, %v1516
      %v1518 = vsel %vm910, %v1476, %v1517
      %v1519 = vshrl.u32 %v1246, 16
      %v1521 = vrot.slane %v1519, 3
      %v1522 = vshll.u32 %v1246, 16
      %v1524 = vrot.slane %v1522, 4
      %v1525 = vor.u32 %v1521, %v1524
      %v1526 = vsel %vm910, %v1484, %v1525
      %v1527 = vshrl.u32 %v1261, 16
      %v1529 = vrot.slane %v1527, 3
      %v1530 = vshll.u32 %v1261, 16
      %v1532 = vrot.slane %v1530, 4
      %v1533 = vor.u32 %v1529, %v1532
      %v1534 = vsel %vm910, %v1492, %v1533
      %v1535 = vshrl.u32 %v1276, 16
      %v1537 = vrot.slane %v1535, 3
      %v1538 = vshll.u32 %v1276, 16
      %v1540 = vrot.slane %v1538, 4
      %v1541 = vor.u32 %v1537, %v1540
      %v1542 = vsel %vm910, %v1500, %v1541
      %v1543 = vshrl.u32 %v1287, 16
      %v1545 = vrot.slane %v1543, 3
      %v1546 = vshll.u32 %v1287, 16
      %v1548 = vrot.slane %v1546, 4
      %v1549 = vor.u32 %v1545, %v1548
      %v1550 = vsel %vm910, %v1508, %v1549
      %v1552 = vshrl.u32 %v1143, 16
      %v1554 = vrot.slane %v1552, 3
      %v1555 = vshll.u32 %v1143, 16
      %v1557 = vrot.slane %v1555, 4
      %v1558 = vor.u32 %v1554, %v1557
      %v1559 = vsel %vm910, %v1517, %v1558
      %v1648 = vunpack.c.l.b16 %v1288
      %v1649 = vunpack.c.l.b16 %v1289
      %v1650 = vunpack.c.l.b16 %v1290
      %v1651 = vunpack.c.l.b16 %v1291
      %v1652 = vunpack.c.l.b16 %v1292
      %v1653 = vunpack.c.l.b16 %v1293
      %v1654 = vunpack.c.l.b16 %v1294
      %v1655 = vunpack.c.l.b16 %v1295
      %v1656 = vunpack.c.l.b16 %v1296
      %v1657 = vunpack.c.l.b16 %v1297
      %v1658 = vunpack.c.l.b16 %v1298
      %v1659 = vunpack.c.l.b16 %v1299
      %v1660 = vunpack.c.l.b16 %v1300
      %v1661 = vunpack.c.l.b16 %v1301
      %v1662 = vunpack.c.l.b16 %v1302
      %v1663 = vunpack.c.l.b16 %v1303
      %v1664 = vunpack.c.l.b16 %v1304
      %v1665 = vunpack.c.l.b16 %v1305
      %v1666 = vunpack.c.l.b16 %v1306
      %v1667 = vunpack.c.l.b16 %v1307
      %v1668 = vunpack.c.l.b16 %v1308
      %v1669 = vunpack.c.l.b16 %v1309
      %v1670 = vunpack.c.l.b16 %v1310
      %v1671 = vunpack.c.l.b16 %v1311
      %v1672 = vunpack.c.l.b16 %v1312
      %v1673 = vunpack.c.l.b16 %v1313
      %v1674 = vunpack.c.l.b16 %v1314
      %v1675 = vunpack.c.l.b16 %v1315
      %v1676 = vunpack.c.l.b16 %v1316
      %v1677 = vunpack.c.l.b16 %v1317
      %v1678 = vunpack.c.l.b16 %v1318
      %v1679 = vunpack.c.l.b16 %v1319
      %v1680 = vunpack.c.l.b16 %v1320
      %v1681 = vunpack.c.l.b16 %v1321
      %v1682 = vunpack.c.l.b16 %v1322
      %v1683 = vunpack.c.l.b16 %v1323
      %v1684 = vunpack.c.l.b16 %v1324
      %v1685 = vunpack.c.l.b16 %v1325
      %v1686 = vunpack.c.l.b16 %v1326
      %v1687 = vunpack.c.l.b16 %v1327
      %v1688 = vunpack.c.l.b16 %v1328
      %v1689 = vunpack.c.l.b16 %v1329
      %v1690 = vunpack.c.l.b16 %v1330
      %v1691 = vunpack.c.l.b16 %v1331
      %v1692 = vunpack.c.l.b16 %v1332
      %v1693 = vunpack.c.l.b16 %v1333
      %v1694 = vunpack.c.l.b16 %v1334
      %v1695 = vunpack.c.l.b16 %v1335
      %v1696 = vunpack.c.l.b16 %v1336
      %v1697 = vunpack.c.l.b16 %v1337
      %v1698 = vunpack.c.l.b16 %v1338
      %v1699 = vunpack.c.l.b16 %v1339
      %v1700 = vunpack.c.l.b16 %v1340
      %v1701 = vunpack.c.l.b16 %v1341
      %v1702 = vunpack.c.l.b16 %v1342
      %v1703 = vunpack.c.l.b16 %v1343
      %v1704 = vunpack.c.l.b16 %v1344
      %v1705 = vunpack.c.l.b16 %v1345
      %v1706 = vunpack.c.l.b16 %v1346
      %v1707 = vunpack.c.l.b16 %v1347
      %v1708 = vunpack.c.l.b16 %v1348
      %v1709 = vunpack.c.l.b16 %v1349
      %v1710 = vunpack.c.l.b16 %v1350
      %v1711 = vunpack.c.l.b16 %v1351
      %v1712 = vunpack.c.l.b16 %v1352
      %v1713 = vunpack.c.l.b16 %v1353
      %v1714 = vunpack.c.l.b16 %v1354
      %v1715 = vunpack.c.l.b16 %v1355
      %v1716 = vunpack.c.l.b16 %v1356
      %v1717 = vunpack.c.l.b16 %v1357
      %v1718 = vunpack.c.l.b16 %v1358
      %v1719 = vunpack.c.l.b16 %v1359
      %v1720 = vpack.c.b16 %v1649, %v1648
      %v1721 = vpack.c.b16 %v1651, %v1650
      %v1722 = vpack.c.b16 %v1653, %v1652
      %v1723 = vpack.c.b16 %v1655, %v1654
      %v1724 = vpack.c.b16 %v1657, %v1656
      %v1725 = vpack.c.b16 %v1659, %v1658
      %v1726 = vpack.c.b16 %v1661, %v1660
      %v1727 = vpack.c.b16 %v1663, %v1662
      %v1728 = vpack.c.b16 %v1665, %v1664
      %v1729 = vpack.c.b16 %v1667, %v1666
      %v1730 = vpack.c.b16 %v1669, %v1668
      %v1731 = vpack.c.b16 %v1671, %v1670
      %v1732 = vpack.c.b16 %v1673, %v1672
      %v1733 = vpack.c.b16 %v1675, %v1674
      %v1734 = vpack.c.b16 %v1677, %v1676
      %v1735 = vpack.c.b16 %v1679, %v1678
      %v1736 = vpack.c.b16 %v1681, %v1680
      %v1737 = vpack.c.b16 %v1683, %v1682
      %v1738 = vpack.c.b16 %v1685, %v1684
      %v1739 = vpack.c.b16 %v1687, %v1686
      %v1740 = vpack.c.b16 %v1689, %v1688
      %v1741 = vpack.c.b16 %v1691, %v1690
      %v1742 = vpack.c.b16 %v1693, %v1692
      %v1743 = vpack.c.b16 %v1695, %v1694
      %v1744 = vpack.c.b16 %v1697, %v1696
      %v1745 = vpack.c.b16 %v1699, %v1698
      %v1746 = vpack.c.b16 %v1701, %v1700
      %v1747 = vpack.c.b16 %v1703, %v1702
      %v1748 = vpack.c.b16 %v1705, %v1704
      %v1749 = vpack.c.b16 %v1707, %v1706
      %v1750 = vpack.c.b16 %v1709, %v1708
      %v1751 = vpack.c.b16 %v1711, %v1710
      %v1752 = vpack.c.b16 %v1713, %v1712
      %v1753 = vpack.c.b16 %v1715, %v1714
      %v1754 = vpack.c.b16 %v1717, %v1716
      %v1755 = vpack.c.b16 %v1719, %v1718
      %v1793 = vsel %vm1232, %v1436, 0
      %v1796 = vsel %vm1232, %v1477, 0
      %v1799 = vsel %vm1232, %v1518, 0
      %v1802 = vsel %vm1232, %v1559, 0
      %1804 = vmatpush.bf16.msra.mxu0 %v1727
      %1805 = vmatpush.bf16.msra.mxu0 %v1726
      %1806 = vmatpush.bf16.msra.mxu0 %v1725
      %1807 = vmatpush.bf16.msra.mxu0 %v1724
      %1808 = vmatpush.bf16.msra.mxu0 %v1723
      %1809 = vmatpush.bf16.msra.mxu0 %v1722
      %1810 = vmatpush.bf16.msra.mxu0 %v1721
      %1811 = vmatpush.bf16.msra.mxu0 %v1720
      %1812 = vmatmul.bf16.gmra.mxu0 %v1374
      %v1813 = vpop.f32.mrf.mxu0
      %v1814 = vadd.f32 0.0, %v1813
      %v1815 = vpop.f32.mrf.mxu0
      %v1816 = vadd.f32 0.0, %v1815
      %1817 = vmatmul.bf16.gmra.mxu0 %v1444
      %v1818 = vpop.f32.mrf.mxu0
      %v1819 = vadd.f32 0.0, %v1818
      %v1820 = vpop.f32.mrf.mxu0
      %v1821 = vadd.f32 0.0, %v1820
      %1822 = vmatmul.bf16.gmra.mxu0 %v1485
      %v1823 = vpop.f32.mrf.mxu0
      %v1824 = vadd.f32 0.0, %v1823
      %v1825 = vpop.f32.mrf.mxu0
      %v1826 = vadd.f32 0.0, %v1825
      %1827 = vmatmul.bf16.gmra.mxu0 %v1526
      %v1828 = vpop.f32.mrf.mxu0
      %v1829 = vadd.f32 0.0, %v1828
      %v1830 = vpop.f32.mrf.mxu0
      %v1831 = vadd.f32 0.0, %v1830
      %1832 = vdwg.mxu0
      %1833 = vmatpush.bf16.msra.mxu0 %v1735
      %1834 = vmatpush.bf16.msra.mxu0 %v1734
      %1835 = vmatpush.bf16.msra.mxu0 %v1733
      %1836 = vmatpush.bf16.msra.mxu0 %v1732
      %1837 = vmatpush.bf16.msra.mxu0 %v1731
      %1838 = vmatpush.bf16.msra.mxu0 %v1730
      %1839 = vmatpush.bf16.msra.mxu0 %v1729
      %1840 = vmatpush.bf16.msra.mxu0 %v1728
      %1841 = vmatmul.bf16.gmra.mxu0 %v1389
      %v1842 = vpop.f32.mrf.mxu0
      %v1843 = vadd.f32 %v1814, %v1842
      %v1844 = vpop.f32.mrf.mxu0
      %v1845 = vadd.f32 %v1816, %v1844
      %1846 = vmatmul.bf16.gmra.mxu0 %v1452
      %v1847 = vpop.f32.mrf.mxu0
      %v1848 = vadd.f32 %v1819, %v1847
      %v1849 = vpop.f32.mrf.mxu0
      %v1850 = vadd.f32 %v1821, %v1849
      %1851 = vmatmul.bf16.gmra.mxu0 %v1493
      %v1852 = vpop.f32.mrf.mxu0
      %v1853 = vadd.f32 %v1824, %v1852
      %v1854 = vpop.f32.mrf.mxu0
      %v1855 = vadd.f32 %v1826, %v1854
      %1856 = vmatmul.bf16.gmra.mxu0 %v1534
      %v1857 = vpop.f32.mrf.mxu0
      %v1858 = vadd.f32 %v1829, %v1857
      %v1859 = vpop.f32.mrf.mxu0
      %v1860 = vadd.f32 %v1831, %v1859
      %1861 = vdwg.mxu0
      %1862 = vmatpush.bf16.msra.mxu0 %v1743
      %1863 = vmatpush.bf16.msra.mxu0 %v1742
      %1864 = vmatpush.bf16.msra.mxu0 %v1741
      %1865 = vmatpush.bf16.msra.mxu0 %v1740
      %1866 = vmatpush.bf16.msra.mxu0 %v1739
      %1867 = vmatpush.bf16.msra.mxu0 %v1738
      %1868 = vmatpush.bf16.msra.mxu0 %v1737
      %1869 = vmatpush.bf16.msra.mxu0 %v1736
      %1870 = vmatmul.bf16.gmra.mxu0 %v1404
      %v1871 = vpop.f32.mrf.mxu0
      %v1872 = vadd.f32 %v1843, %v1871
      %v1873 = vpop.f32.mrf.mxu0
      %v1874 = vadd.f32 %v1845, %v1873
      %1875 = vmatmul.bf16.gmra.mxu0 %v1460
      %v1876 = vpop.f32.mrf.mxu0
      %v1877 = vadd.f32 %v1848, %v1876
      %v1878 = vpop.f32.mrf.mxu0
      %v1879 = vadd.f32 %v1850, %v1878
      %1880 = vmatmul.bf16.gmra.mxu0 %v1501
      %v1881 = vpop.f32.mrf.mxu0
      %v1882 = vadd.f32 %v1853, %v1881
      %v1883 = vpop.f32.mrf.mxu0
      %v1884 = vadd.f32 %v1855, %v1883
      %1885 = vmatmul.bf16.gmra.mxu0 %v1542
      %v1886 = vpop.f32.mrf.mxu0
      %v1887 = vadd.f32 %v1858, %v1886
      %v1888 = vpop.f32.mrf.mxu0
      %v1889 = vadd.f32 %v1860, %v1888
      %1890 = vdwg.mxu0
      %1891 = vmatpush.bf16.msra.mxu0 %v1751
      %1892 = vmatpush.bf16.msra.mxu0 %v1750
      %1893 = vmatpush.bf16.msra.mxu0 %v1749
      %1894 = vmatpush.bf16.msra.mxu0 %v1748
      %1895 = vmatpush.bf16.msra.mxu0 %v1747
      %1896 = vmatpush.bf16.msra.mxu0 %v1746
      %1897 = vmatpush.bf16.msra.mxu0 %v1745
      %1898 = vmatpush.bf16.msra.mxu0 %v1744
      %1899 = vmatmul.bf16.gmra.mxu0 %v1419
      %v1900 = vpop.f32.mrf.mxu0
      %v1901 = vadd.f32 %v1872, %v1900
      %v1902 = vpop.f32.mrf.mxu0
      %v1903 = vadd.f32 %v1874, %v1902
      %1904 = vmatmul.bf16.gmra.mxu0 %v1468
      %v1905 = vpop.f32.mrf.mxu0
      %v1906 = vadd.f32 %v1877, %v1905
      %v1907 = vpop.f32.mrf.mxu0
      %v1908 = vadd.f32 %v1879, %v1907
      %1909 = vmatmul.bf16.gmra.mxu0 %v1509
      %v1910 = vpop.f32.mrf.mxu0
      %v1911 = vadd.f32 %v1882, %v1910
      %v1912 = vpop.f32.mrf.mxu0
      %v1913 = vadd.f32 %v1884, %v1912
      %1914 = vmatmul.bf16.gmra.mxu0 %v1550
      %v1915 = vpop.f32.mrf.mxu0
      %v1916 = vadd.f32 %v1887, %v1915
      %v1917 = vpop.f32.mrf.mxu0
      %v1918 = vadd.f32 %v1889, %v1917
      %1919 = vdwg.mxu0
      %1920 = vmatpush.bf16.msra.mxu0 0
      %1921 = vmatpush.bf16.msra.mxu0 0
      %1922 = vmatpush.bf16.msra.mxu0 0
      %1923 = vmatpush.bf16.msra.mxu0 0
      %1924 = vmatpush.bf16.msra.mxu0 %v1755
      %1925 = vmatpush.bf16.msra.mxu0 %v1754
      %1926 = vmatpush.bf16.msra.mxu0 %v1753
      %1927 = vmatpush.bf16.msra.mxu0 %v1752
      %1928 = vmatmul.bf16.gmra.mxu0 %v1793
      %v1929 = vpop.f32.mrf.mxu0
      %v1930 = vadd.f32 %v1901, %v1929
      %v1931 = vpop.f32.mrf.mxu0
      %v1932 = vadd.f32 %v1903, %v1931
      %1933 = vmatmul.bf16.gmra.mxu0 %v1796
      %v1934 = vpop.f32.mrf.mxu0
      %v1935 = vadd.f32 %v1906, %v1934
      %v1936 = vpop.f32.mrf.mxu0
      %v1937 = vadd.f32 %v1908, %v1936
      %1938 = vmatmul.bf16.gmra.mxu0 %v1799
      %v1939 = vpop.f32.mrf.mxu0
      %v1940 = vadd.f32 %v1911, %v1939
      %v1941 = vpop.f32.mrf.mxu0
      %v1942 = vadd.f32 %v1913, %v1941
      %1943 = vmatmul.bf16.gmra.mxu0 %v1802
      %v1944 = vpop.f32.mrf.mxu0
      %v1945 = vadd.f32 %v1916, %v1944
      %v1946 = vpop.f32.mrf.mxu0
      %v1947 = vadd.f32 %v1918, %v1946
      %1948 = vdwg.mxu0
      %v1949 = vld [vmem:[%s5] sm:$0x1]
      %v1951 = vperm.slane %v1949, 0
      %v1953 = vmul.f32 %v1930, %v1951
      %v1954 = vmul.f32 %v1932, %v1951
      %v1955 = vmul.f32 %v1935, %v1951
      %v1956 = vmul.f32 %v1937, %v1951
      %v1957 = vmul.f32 %v1940, %v1951
      %v1958 = vmul.f32 %v1942, %v1951
      %v1959 = vmul.f32 %v1945, %v1951
      %v1960 = vmul.f32 %v1947, %v1951
      %v1961 = vld [vmem:[%s6] sm:$0x1]
      %v1963 = vperm.slane %v1961, 0
      %v1965 = vadd.f32 %v1953, %v1963
      %v1966 = vadd.f32 %v1954, %v1963
      %v1967 = vadd.f32 %v1955, %v1963
      %v1968 = vadd.f32 %v1956, %v1963
      %v1969 = vadd.f32 %v1957, %v1963
      %v1970 = vadd.f32 %v1958, %v1963
      %v1971 = vadd.f32 %v1959, %v1963
      %v1972 = vadd.f32 %v1960, %v1963
      %v1973 = vmax.f32 %v1965, 0.0
      %v1974 = vmax.f32 %v1966, 0.0
      %v1975 = vmax.f32 %v1967, 0.0
      %v1976 = vmax.f32 %v1968, 0.0
      %v1977 = vmax.f32 %v1969, 0.0
      %v1978 = vmax.f32 %v1970, 0.0
      %v1979 = vmax.f32 %v1971, 0.0
      %v1980 = vmax.f32 %v1972, 0.0
      %v1981 = vpack.c.bf16 %v1974, %v1973
      %v1982 = vpack.c.bf16 %v1976, %v1975
      %v1983 = vpack.c.bf16 %v1978, %v1977
      %v1984 = vpack.c.bf16 %v1980, %v1979
      %v1985 = vld [vmem:[%s7] sm:$0xff]
      %v1986 = vld [vmem:[%s7 + $0x8] sm:$0xff]
      %v1987 = vld [vmem:[%s7 + $0x10] sm:$0xff]
      %v1988 = vld [vmem:[%s7 + $0x18] sm:$0xff]
      %v1989 = vld [vmem:[%s7 + $0x20] sm:$0xff]
      %v1990 = vld [vmem:[%s7 + $0x28] sm:$0xff]
      %v1991 = vld [vmem:[%s7 + $0x30] sm:$0xff]
      %v1992 = vld [vmem:[%s7 + $0x38] sm:$0xff]
      %v2001 = vunpack.c.l.b16 %v1985
      %v2002 = vunpack.c.h.b16 %v1985
      %v2003 = vunpack.c.l.b16 %v1986
      %v2004 = vunpack.c.h.b16 %v1986
      %v2005 = vunpack.c.l.b16 %v1987
      %v2006 = vunpack.c.h.b16 %v1987
      %v2007 = vunpack.c.l.b16 %v1988
      %v2008 = vunpack.c.h.b16 %v1988
      %v2009 = vunpack.c.l.b16 %v1989
      %v2010 = vunpack.c.h.b16 %v1989
      %v2011 = vunpack.c.l.b16 %v1990
      %v2012 = vunpack.c.h.b16 %v1990
      %v2013 = vunpack.c.l.b16 %v1991
      %v2014 = vunpack.c.h.b16 %v1991
      %v2015 = vunpack.c.l.b16 %v1992
      %v2016 = vunpack.c.h.b16 %v1992
      %v2017 = vpack.c.b16 %v2003, %v2001
      %v2018 = vpack.c.b16 %v2004, %v2002
      %v2019 = vpack.c.b16 %v2007, %v2005
      %v2020 = vpack.c.b16 %v2008, %v2006
      %v2021 = vpack.c.b16 %v2011, %v2009
      %v2022 = vpack.c.b16 %v2012, %v2010
      %v2023 = vpack.c.b16 %v2015, %v2013
      %v2024 = vpack.c.b16 %v2016, %v2014
      %v2034 = vsel %vm1232, %v1981, 0
      %v2037 = vsel %vm1232, %v1982, 0
      %v2040 = vsel %vm1232, %v1983, 0
      %v2043 = vsel %vm1232, %v1984, 0
      %2045 = vmatpush.bf16.msra.mxu0 0
      %2046 = vmatpush.bf16.msra.mxu0 0
      %2047 = vmatpush.bf16.msra.mxu0 0
      %2048 = vmatpush.bf16.msra.mxu0 0
      %2049 = vmatpush.bf16.msra.mxu0 %v2023
      %2050 = vmatpush.bf16.msra.mxu0 %v2021
      %2051 = vmatpush.bf16.msra.mxu0 %v2019
      %2052 = vmatpush.bf16.msra.mxu0 %v2017
      %2053 = vmatmul.bf16.gmra.mxu0 %v2034
      %v2054 = vpop.f32.mrf.mxu0
      %v2055 = vadd.f32 0.0, %v2054
      %v2056 = vpop.f32.mrf.mxu0
      %v2057 = vadd.f32 0.0, %v2056
      %2058 = vmatmul.bf16.gmra.mxu0 %v2037
      %v2059 = vpop.f32.mrf.mxu0
      %v2060 = vadd.f32 0.0, %v2059
      %v2061 = vpop.f32.mrf.mxu0
      %v2062 = vadd.f32 0.0, %v2061
      %2063 = vmatmul.bf16.gmra.mxu0 %v2040
      %v2064 = vpop.f32.mrf.mxu0
      %v2065 = vadd.f32 0.0, %v2064
      %v2066 = vpop.f32.mrf.mxu0
      %v2067 = vadd.f32 0.0, %v2066
      %2068 = vmatmul.bf16.gmra.mxu0 %v2043
      %v2069 = vpop.f32.mrf.mxu0
      %v2070 = vadd.f32 0.0, %v2069
      %v2071 = vpop.f32.mrf.mxu0
      %v2072 = vadd.f32 0.0, %v2071
      %2073 = vdwg.mxu0
      %2074 = vmatpush.bf16.msra.mxu0 0
      %2075 = vmatpush.bf16.msra.mxu0 0
      %2076 = vmatpush.bf16.msra.mxu0 0
      %2077 = vmatpush.bf16.msra.mxu0 0
      %2078 = vmatpush.bf16.msra.mxu0 %v2024
      %2079 = vmatpush.bf16.msra.mxu0 %v2022
      %2080 = vmatpush.bf16.msra.mxu0 %v2020
      %2081 = vmatpush.bf16.msra.mxu0 %v2018
      %2082 = vmatmul.bf16.gmra.mxu0 %v2034
      %v2083 = vpop.f32.mrf.mxu0
      %v2084 = vadd.f32 0.0, %v2083
      %v2085 = vpop.f32.mrf.mxu0
      %v2086 = vadd.f32 0.0, %v2085
      %2087 = vmatmul.bf16.gmra.mxu0 %v2037
      %v2088 = vpop.f32.mrf.mxu0
      %v2089 = vadd.f32 0.0, %v2088
      %v2090 = vpop.f32.mrf.mxu0
      %v2091 = vadd.f32 0.0, %v2090
      %2092 = vmatmul.bf16.gmra.mxu0 %v2040
      %v2093 = vpop.f32.mrf.mxu0
      %v2094 = vadd.f32 0.0, %v2093
      %v2095 = vpop.f32.mrf.mxu0
      %v2096 = vadd.f32 0.0, %v2095
      %2097 = vmatmul.bf16.gmra.mxu0 %v2043
      %v2098 = vpop.f32.mrf.mxu0
      %v2099 = vadd.f32 0.0, %v2098
      %v2100 = vpop.f32.mrf.mxu0
      %v2101 = vadd.f32 0.0, %v2100
      %2102 = vdwg.mxu0
      %v2103 = vld [vmem:[%s8] sm:$0x3]
      %v2105 = vperm.slane %v2103, 0
      %v2106 = vperm.slane %v2103, 1
      %v2109 = vmul.f32 %v2055, %v2105
      %v2110 = vmul.f32 %v2084, %v2106
      %v2111 = vmul.f32 %v2057, %v2105
      %v2112 = vmul.f32 %v2086, %v2106
      %v2113 = vmul.f32 %v2060, %v2105
      %v2114 = vmul.f32 %v2089, %v2106
      %v2115 = vmul.f32 %v2062, %v2105
      %v2116 = vmul.f32 %v2091, %v2106
      %v2117 = vmul.f32 %v2065, %v2105
      %v2118 = vmul.f32 %v2094, %v2106
      %v2119 = vmul.f32 %v2067, %v2105
      %v2120 = vmul.f32 %v2096, %v2106
      %v2121 = vmul.f32 %v2070, %v2105
      %v2122 = vmul.f32 %v2099, %v2106
      %v2123 = vmul.f32 %v2072, %v2105
      %v2124 = vmul.f32 %v2101, %v2106
      %v2125 = vld [vmem:[%s9] sm:$0x3]
      %v2127 = vperm.slane %v2125, 0
      %v2128 = vperm.slane %v2125, 1
      %v2131 = vadd.f32 %v2109, %v2127
      %v2132 = vadd.f32 %v2110, %v2128
      %v2133 = vadd.f32 %v2111, %v2127
      %v2134 = vadd.f32 %v2112, %v2128
      %v2135 = vadd.f32 %v2113, %v2127
      %v2136 = vadd.f32 %v2114, %v2128
      %v2137 = vadd.f32 %v2115, %v2127
      %v2138 = vadd.f32 %v2116, %v2128
      %v2139 = vadd.f32 %v2117, %v2127
      %v2140 = vadd.f32 %v2118, %v2128
      %v2141 = vadd.f32 %v2119, %v2127
      %v2142 = vadd.f32 %v2120, %v2128
      %v2143 = vadd.f32 %v2121, %v2127
      %v2144 = vadd.f32 %v2122, %v2128
      %v2145 = vadd.f32 %v2123, %v2127
      %v2146 = vadd.f32 %v2124, %v2128
      %v2147 = vld [vmem:[%s10] sm:$0xff]
      %v2148 = vld [vmem:[%s10 + $0x8] sm:$0xff]
      %v2149 = vld [vmem:[%s10 + $0x10] sm:$0xff]
      %v2150 = vld [vmem:[%s10 + $0x18] sm:$0xff]
      %v2151 = vld [vmem:[%s10 + $0x20] sm:$0xff]
      %v2152 = vld [vmem:[%s10 + $0x28] sm:$0xff]
      %v2153 = vld [vmem:[%s10 + $0x30] sm:$0xff]
      %v2154 = vld [vmem:[%s10 + $0x38] sm:$0xff]
      %v2155 = vld [vmem:[%s10 + $0x40] sm:$0xff]
      %v2156 = vld [vmem:[%s10 + $0x48] sm:$0xff]
      %v2157 = vld [vmem:[%s10 + $0x50] sm:$0xff]
      %v2158 = vld [vmem:[%s10 + $0x58] sm:$0xff]
      %v2159 = vld [vmem:[%s10 + $0x60] sm:$0xff]
      %v2160 = vld [vmem:[%s10 + $0x68] sm:$0xff]
      %v2161 = vld [vmem:[%s10 + $0x70] sm:$0xff]
      %v2162 = vld [vmem:[%s10 + $0x78] sm:$0xff]
      %v2179 = vunpack.c.l.b16 %v2147
      %v2180 = vunpack.c.h.b16 %v2147
      %v2181 = vunpack.c.l.b16 %v2148
      %v2182 = vunpack.c.h.b16 %v2148
      %v2183 = vunpack.c.l.b16 %v2149
      %v2184 = vunpack.c.h.b16 %v2149
      %v2185 = vunpack.c.l.b16 %v2150
      %v2186 = vunpack.c.h.b16 %v2150
      %v2187 = vunpack.c.l.b16 %v2151
      %v2188 = vunpack.c.h.b16 %v2151
      %v2189 = vunpack.c.l.b16 %v2152
      %v2190 = vunpack.c.h.b16 %v2152
      %v2191 = vunpack.c.l.b16 %v2153
      %v2192 = vunpack.c.h.b16 %v2153
      %v2193 = vunpack.c.l.b16 %v2154
      %v2194 = vunpack.c.h.b16 %v2154
      %v2195 = vunpack.c.l.b16 %v2155
      %v2196 = vunpack.c.h.b16 %v2155
      %v2197 = vunpack.c.l.b16 %v2156
      %v2198 = vunpack.c.h.b16 %v2156
      %v2199 = vunpack.c.l.b16 %v2157
      %v2200 = vunpack.c.h.b16 %v2157
      %v2201 = vunpack.c.l.b16 %v2158
      %v2202 = vunpack.c.h.b16 %v2158
      %v2203 = vunpack.c.l.b16 %v2159
      %v2204 = vunpack.c.h.b16 %v2159
      %v2205 = vunpack.c.l.b16 %v2160
      %v2206 = vunpack.c.h.b16 %v2160
      %v2207 = vunpack.c.l.b16 %v2161
      %v2208 = vunpack.c.h.b16 %v2161
      %v2209 = vunpack.c.l.b16 %v2162
      %v2210 = vunpack.c.h.b16 %v2162
      %v2211 = vpack.c.b16 %v2181, %v2179
      %v2212 = vpack.c.b16 %v2182, %v2180
      %v2213 = vpack.c.b16 %v2185, %v2183
      %v2214 = vpack.c.b16 %v2186, %v2184
      %v2215 = vpack.c.b16 %v2189, %v2187
      %v2216 = vpack.c.b16 %v2190, %v2188
      %v2217 = vpack.c.b16 %v2193, %v2191
      %v2218 = vpack.c.b16 %v2194, %v2192
      %v2219 = vpack.c.b16 %v2197, %v2195
      %v2220 = vpack.c.b16 %v2198, %v2196
      %v2221 = vpack.c.b16 %v2201, %v2199
      %v2222 = vpack.c.b16 %v2202, %v2200
      %v2223 = vpack.c.b16 %v2205, %v2203
      %v2224 = vpack.c.b16 %v2206, %v2204
      %v2225 = vpack.c.b16 %v2209, %v2207
      %v2226 = vpack.c.b16 %v2210, %v2208
      %2243 = vmatpush.bf16.msra.mxu0 %v2225
      %2244 = vmatpush.bf16.msra.mxu0 %v2223
      %2245 = vmatpush.bf16.msra.mxu0 %v2221
      %2246 = vmatpush.bf16.msra.mxu0 %v2219
      %2247 = vmatpush.bf16.msra.mxu0 %v2217
      %2248 = vmatpush.bf16.msra.mxu0 %v2215
      %2249 = vmatpush.bf16.msra.mxu0 %v2213
      %2250 = vmatpush.bf16.msra.mxu0 %v2211
      %2251 = vmatmul.bf16.gmra.mxu0 %v484
      %v2252 = vpop.f32.mrf.mxu0
      %v2253 = vadd.f32 0.0, %v2252
      %v2254 = vpop.f32.mrf.mxu0
      %v2255 = vadd.f32 0.0, %v2254
      %2256 = vmatmul.bf16.gmra.mxu0 %v485
      %v2257 = vpop.f32.mrf.mxu0
      %v2258 = vadd.f32 0.0, %v2257
      %v2259 = vpop.f32.mrf.mxu0
      %v2260 = vadd.f32 0.0, %v2259
      %2261 = vmatmul.bf16.gmra.mxu0 %v486
      %v2262 = vpop.f32.mrf.mxu0
      %v2263 = vadd.f32 0.0, %v2262
      %v2264 = vpop.f32.mrf.mxu0
      %v2265 = vadd.f32 0.0, %v2264
      %2266 = vmatmul.bf16.gmra.mxu0 %v487
      %v2267 = vpop.f32.mrf.mxu0
      %v2268 = vadd.f32 0.0, %v2267
      %v2269 = vpop.f32.mrf.mxu0
      %v2270 = vadd.f32 0.0, %v2269
      %2271 = vdwg.mxu0
      %2272 = vmatpush.bf16.msra.mxu0 %v2226
      %2273 = vmatpush.bf16.msra.mxu0 %v2224
      %2274 = vmatpush.bf16.msra.mxu0 %v2222
      %2275 = vmatpush.bf16.msra.mxu0 %v2220
      %2276 = vmatpush.bf16.msra.mxu0 %v2218
      %2277 = vmatpush.bf16.msra.mxu0 %v2216
      %2278 = vmatpush.bf16.msra.mxu0 %v2214
      %2279 = vmatpush.bf16.msra.mxu0 %v2212
      %2280 = vmatmul.bf16.gmra.mxu0 %v484
      %v2281 = vpop.f32.mrf.mxu0
      %v2282 = vadd.f32 0.0, %v2281
      %v2283 = vpop.f32.mrf.mxu0
      %v2284 = vadd.f32 0.0, %v2283
      %2285 = vmatmul.bf16.gmra.mxu0 %v485
      %v2286 = vpop.f32.mrf.mxu0
      %v2287 = vadd.f32 0.0, %v2286
      %v2288 = vpop.f32.mrf.mxu0
      %v2289 = vadd.f32 0.0, %v2288
      %2290 = vmatmul.bf16.gmra.mxu0 %v486
      %v2291 = vpop.f32.mrf.mxu0
      %v2292 = vadd.f32 0.0, %v2291
      %v2293 = vpop.f32.mrf.mxu0
      %v2294 = vadd.f32 0.0, %v2293
      %2295 = vmatmul.bf16.gmra.mxu0 %v487
      %v2296 = vpop.f32.mrf.mxu0
      %v2297 = vadd.f32 0.0, %v2296
      %v2298 = vpop.f32.mrf.mxu0
      %v2299 = vadd.f32 0.0, %v2298
      %2300 = vdwg.mxu0
      %v2301 = vld [vmem:[%s11] sm:$0x3]
      %v2303 = vperm.slane %v2301, 0
      %v2304 = vperm.slane %v2301, 1
      %v2307 = vmul.f32 %v2253, %v2303
      %v2308 = vmul.f32 %v2282, %v2304
      %v2309 = vmul.f32 %v2255, %v2303
      %v2310 = vmul.f32 %v2284, %v2304
      %v2311 = vmul.f32 %v2258, %v2303
      %v2312 = vmul.f32 %v2287, %v2304
      %v2313 = vmul.f32 %v2260, %v2303
      %v2314 = vmul.f32 %v2289, %v2304
      %v2315 = vmul.f32 %v2263, %v2303
      %v2316 = vmul.f32 %v2292, %v2304
      %v2317 = vmul.f32 %v2265, %v2303
      %v2318 = vmul.f32 %v2294, %v2304
      %v2319 = vmul.f32 %v2268, %v2303
      %v2320 = vmul.f32 %v2297, %v2304
      %v2321 = vmul.f32 %v2270, %v2303
      %v2322 = vmul.f32 %v2299, %v2304
      %v2323 = vld [vmem:[%s12] sm:$0x3]
      %v2325 = vperm.slane %v2323, 0
      %v2326 = vperm.slane %v2323, 1
      %v2329 = vadd.f32 %v2307, %v2325
      %v2330 = vadd.f32 %v2308, %v2326
      %v2331 = vadd.f32 %v2309, %v2325
      %v2332 = vadd.f32 %v2310, %v2326
      %v2333 = vadd.f32 %v2311, %v2325
      %v2334 = vadd.f32 %v2312, %v2326
      %v2335 = vadd.f32 %v2313, %v2325
      %v2336 = vadd.f32 %v2314, %v2326
      %v2337 = vadd.f32 %v2315, %v2325
      %v2338 = vadd.f32 %v2316, %v2326
      %v2339 = vadd.f32 %v2317, %v2325
      %v2340 = vadd.f32 %v2318, %v2326
      %v2341 = vadd.f32 %v2319, %v2325
      %v2342 = vadd.f32 %v2320, %v2326
      %v2343 = vadd.f32 %v2321, %v2325
      %v2344 = vadd.f32 %v2322, %v2326
      %v2345 = vadd.f32 %v2131, %v2329
      %v2346 = vadd.f32 %v2132, %v2330
      %v2347 = vadd.f32 %v2133, %v2331
      %v2348 = vadd.f32 %v2134, %v2332
      %v2349 = vadd.f32 %v2135, %v2333
      %v2350 = vadd.f32 %v2136, %v2334
      %v2351 = vadd.f32 %v2137, %v2335
      %v2352 = vadd.f32 %v2138, %v2336
      %v2353 = vadd.f32 %v2139, %v2337
      %v2354 = vadd.f32 %v2140, %v2338
      %v2355 = vadd.f32 %v2141, %v2339
      %v2356 = vadd.f32 %v2142, %v2340
      %v2357 = vadd.f32 %v2143, %v2341
      %v2358 = vadd.f32 %v2144, %v2342
      %v2359 = vadd.f32 %v2145, %v2343
      %v2360 = vadd.f32 %v2146, %v2344
      %v2361 = vmax.f32 %v2345, 0.0
      %v2362 = vmax.f32 %v2346, 0.0
      %v2363 = vmax.f32 %v2347, 0.0
      %v2364 = vmax.f32 %v2348, 0.0
      %v2365 = vmax.f32 %v2349, 0.0
      %v2366 = vmax.f32 %v2350, 0.0
      %v2367 = vmax.f32 %v2351, 0.0
      %v2368 = vmax.f32 %v2352, 0.0
      %v2369 = vmax.f32 %v2353, 0.0
      %v2370 = vmax.f32 %v2354, 0.0
      %v2371 = vmax.f32 %v2355, 0.0
      %v2372 = vmax.f32 %v2356, 0.0
      %v2373 = vmax.f32 %v2357, 0.0
      %v2374 = vmax.f32 %v2358, 0.0
      %v2375 = vmax.f32 %v2359, 0.0
      %v2376 = vmax.f32 %v2360, 0.0
      %v2377 = vpack.c.bf16 %v2362, %v2361
      %v2378 = vpack.c.bf16 %v2364, %v2363
      %v2379 = vpack.c.bf16 %v2366, %v2365
      %v2380 = vpack.c.bf16 %v2368, %v2367
      %v2381 = vpack.c.bf16 %v2370, %v2369
      %v2382 = vpack.c.bf16 %v2372, %v2371
      %v2383 = vpack.c.bf16 %v2374, %v2373
      %v2384 = vpack.c.bf16 %v2376, %v2375
      %2385 = vst [vmem:[%s440] sm:$0xff] %v2377
      %2386 = vst [vmem:[%s440 + $0x8] sm:$0xff] %v2378
      %2387 = vst [vmem:[%s440 + $0x10] sm:$0xff] %v2379
      %2388 = vst [vmem:[%s440 + $0x18] sm:$0xff] %v2380
      %2389 = vst [vmem:[%s440 + $0x20] sm:$0xff] %v2381
      %2390 = vst [vmem:[%s440 + $0x28] sm:$0xff] %v2382
      %2391 = vst [vmem:[%s440 + $0x30] sm:$0xff] %v2383
      %2392 = vst [vmem:[%s440 + $0x38] sm:$0xff] %v2384
      %p2393 = scmp.lt.s32.totalorder %s24, 1
      %s2394 = scalar_select %p2393, %s24, 1
      %s2395 = smul.addr %s2394, 16
      %s2396 = smul.addr %s2395, 4
      %s2397 = scalar_lea.vmem %s13, %s2396
      // Predicated region
      $region73: #{visible_module_forward.7} parent=71 // pred_check
        %p2398 = pneg %p320
      $region74: #{visible_module_forward.7} parent=71 // pred_check_branch
        %2400 = sbr.rel (%p2398) target = $region76
      $region75: #{visible_module_forward.7} parent=71 // pred_region
        _
      $region76: #{visible_module_forward.7} parent=71 // pred_fallthru
        _
    $region72: #{visible_module_forward.7} parent=5 // pred_fallthru
      _
    %p2401 = scmp.le.s32.totalorder 2, %s19
    // Predicated region
    $region77: #{visible_module_forward.7} parent=5 // pred_check
      %p2402 = pneg %p2401
    $region78: #{visible_module_forward.7} parent=5 // pred_check_branch
      %2404 = sbr.rel (%p2402) target = $region80
    $region79: #{visible_module_forward.7} parent=5 // pred_region
      %s2405 = ssub.s32 %s19, 2
      // Predicated region
      $region81: #{visible_module_forward.7} parent=79 // pred_check
        %p2406 = pneg %p326
      $region82: #{visible_module_forward.7} parent=79 // pred_check_branch
        %2408 = sbr.rel (%p2406) target = $region84
      $region83: #{visible_module_forward.7} parent=79 // pred_region
        %p2409 = scmp.lt.s32.totalorder %s25, 1
        %s2410 = scalar_select %p2409, %s25, 1
        %s2411 = smul.addr %s2410, 16
        %s2412 = smul.addr %s2411, 4
        %s2413 = scalar_lea.vmem %s13, %s2412
      $region84: #{visible_module_forward.7} parent=79 // pred_fallthru
        _
    $region80: #{visible_module_forward.7} parent=5 // pred_fallthru
      _
  $region6: #{visible_module_forward.7} parent=0 // loop_footer
    %s23 = sadd.s32 1, %s19
  $region7: #{visible_module_forward.7} parent=0 // loop_footer_branch
    %18 = sbr.rel target = $region3
  $region8: #{visible_module_forward.7} parent=0 // loop_exit
    _

// kernel: visible_module_forward.8
$region0: #{visible_module_forward.8}
  #allocation0 [shape = 'u32[]', space=smem, size = 0x4, offset = 0x4, fixed_abs, tag = 'smem constant byte address 0x4 - core index']
  #allocation1 [shape = 'u32[72,128]{1,0:T(1,128)}', space=vmem, size = 0x9000, scoped, tag = 'internal scratch']
  %s0 = inlined_call_operand.vmem [shape: bf16[2,64,256], index: 0, kind: input, shape index: {}]
  %s1 = inlined_call_operand.vmem [shape: bf16[256,64], index: 1, kind: input, shape index: {}]
  %s2 = inlined_call_operand.vmem [shape: f32[1,64], index: 2, kind: input, shape index: {}]
  %s3 = inlined_call_operand.vmem [shape: f32[1,64], index: 3, kind: input, shape index: {}]
  %s4 = inlined_call_operand.vmem [shape: bf16[576,64], index: 4, kind: input, shape index: {}]
  %s5 = inlined_call_operand.vmem [shape: f32[1,64], index: 5, kind: input, shape index: {}]
  %s6 = inlined_call_operand.vmem [shape: f32[1,64], index: 6, kind: input, shape index: {}]
  %s7 = inlined_call_operand.vmem [shape: bf16[64,256], index: 7, kind: input, shape index: {}]
  %s8 = inlined_call_operand.vmem [shape: f32[1,256], index: 8, kind: input, shape index: {}]
  %s9 = inlined_call_operand.vmem [shape: f32[1,256], index: 9, kind: input, shape index: {}]
  %s10 = inlined_call_operand.vmem [shape: bf16[2,64,256], index: 10, kind: output, shape index: {}]
  %s11 = sld [smem:[#allocation0]]
  $region73: #{visible_module_forward.8} parent=0
    _
  %s13 = ssub.s32 1, %s11
  %s14 = scalar_select 0, %s13, %s11
  loop: start=0, step=1, limit=4
  $region2: #{visible_module_forward.8} parent=0 // loop_pre_header
    _
  $region3: #{visible_module_forward.8} parent=0 // loop_header
    %s16 = sphi 0, %s20
    %p17 = scmp.ge.s32.totalorder %s16, 4
    %s26 = sphi 0, %s28
    %s29 = sphi 0, %s26
    %s30 = sphi 0, %s29
    %s46 = sphi 0, %s30
    %s50 = sphi 0, %s50
    %s52 = sphi 0, %s50
    %s53 = sphi 0, %s52
    %s67 = sphi 0, %s53
    %s71 = sphi 0, %s71
    %s73 = sphi 0, %s71
    %s74 = sphi 0, %s73
    %s88 = sphi 0, %s74
    %s92 = sphi 0, %s92
    %s94 = sphi 0, %s92
    %s95 = sphi 0, %s94
    %s109 = sphi 0, %s95
    %s113 = sphi 0, %s113
    %s115 = sphi 0, %s113
    %s116 = sphi 0, %s115
    %s130 = sphi 0, %s116
    %s134 = sphi 0, %s134
    %s136 = sphi 0, %s134
    %s137 = sphi 0, %s136
    %s151 = sphi 0, %s137
    %s155 = sphi 0, %s155
    %s157 = sphi 0, %s155
    %s158 = sphi 0, %s157
    %s172 = sphi 0, %s158
    %s176 = sphi 0, %s176
    %s178 = sphi 0, %s176
    %s179 = sphi 0, %s178
    %s193 = sphi 0, %s179
    %s197 = sphi 0, %s197
    %s199 = sphi 0, %s197
    %s200 = sphi 0, %s199
    %s214 = sphi 0, %s200
    %s218 = sphi 0, %s218
    %s220 = sphi 0, %s218
    %s221 = sphi 0, %s220
    %s235 = sphi 0, %s221
    %s241 = sphi 0, %s243
    %s244 = sphi 0, %s241
    %s245 = sphi 0, %s244
    %s261 = sphi 0, %s245
  $region4: #{visible_module_forward.8} parent=0 // loop_header_branch
    %19 = sbr.rel (%p17) target = $region8
  $region5: #{visible_module_forward.8} parent=0 // loop_body
    %s21 = ssub.s32 %s16, 1
    %s22 = ssub.s32 %s16, 2
    %s23 = sadd.s32 %s16, 1
    %s24 = ssub.s32 %s16, %s23
    %p25 = scmp.eq.s32.totalorder %s24, 0
    %s27 = sadd.s32 %s26, 1
    %s28 = scalar_select %p25, %s26, %s27
    %p31 = pneg %p25
    %p32 = scmp.eq.s32.totalorder %s16, 1
    %p33 = por %p31, %p32
    %p34 = scmp.ne.s32.totalorder %s26, %s29
    %p35 = scmp.eq.s32.totalorder %s16, 0
    %p36 = por %p34, %p35
    %p37 = scmp.ne.s32.totalorder %s26, %s29
    %p38 = scmp.eq.s32.totalorder %s21, 1
    %p39 = por %p37, %p38
    %p40 = scmp.ne.s32.totalorder %s29, %s30
    %p41 = scmp.eq.s32.totalorder %s21, 0
    %p42 = por %p40, %p41
    %p43 = scmp.ne.s32.totalorder %s29, %s30
    %p44 = scmp.eq.s32.totalorder %s22, 1
    %p45 = por %p43, %p44
    %p47 = scmp.ne.s32.totalorder %s30, %s46
    %p48 = scmp.eq.s32.totalorder %s22, 0
    %p49 = por %p47, %p48
    %s51 = sadd.s32 %s50, 1
    %p54 = scmp.eq.s32.totalorder %s16, 1
    %p55 = scmp.ne.s32.totalorder %s50, %s52
    %p56 = scmp.eq.s32.totalorder %s16, 0
    %p57 = por %p55, %p56
    %p58 = scmp.ne.s32.totalorder %s50, %s52
    %p59 = scmp.eq.s32.totalorder %s21, 1
    %p60 = por %p58, %p59
    %p61 = scmp.ne.s32.totalorder %s52, %s53
    %p62 = scmp.eq.s32.totalorder %s21, 0
    %p63 = por %p61, %p62
    %p64 = scmp.ne.s32.totalorder %s52, %s53
    %p65 = scmp.eq.s32.totalorder %s22, 1
    %p66 = por %p64, %p65
    %p68 = scmp.ne.s32.totalorder %s53, %s67
    %p69 = scmp.eq.s32.totalorder %s22, 0
    %p70 = por %p68, %p69
    %s72 = sadd.s32 %s71, 1
    %p75 = scmp.eq.s32.totalorder %s16, 1
    %p76 = scmp.ne.s32.totalorder %s71, %s73
    %p77 = scmp.eq.s32.totalorder %s16, 0
    %p78 = por %p76, %p77
    %p79 = scmp.ne.s32.totalorder %s71, %s73
    %p80 = scmp.eq.s32.totalorder %s21, 1
    %p81 = por %p79, %p80
    %p82 = scmp.ne.s32.totalorder %s73, %s74
    %p83 = scmp.eq.s32.totalorder %s21, 0
    %p84 = por %p82, %p83
    %p85 = scmp.ne.s32.totalorder %s73, %s74
    %p86 = scmp.eq.s32.totalorder %s22, 1
    %p87 = por %p85, %p86
    %p89 = scmp.ne.s32.totalorder %s74, %s88
    %p90 = scmp.eq.s32.totalorder %s22, 0
    %p91 = por %p89, %p90
    %s93 = sadd.s32 %s92, 1
    %p96 = scmp.eq.s32.totalorder %s16, 1
    %p97 = scmp.ne.s32.totalorder %s92, %s94
    %p98 = scmp.eq.s32.totalorder %s16, 0
    %p99 = por %p97, %p98
    %p100 = scmp.ne.s32.totalorder %s92, %s94
    %p101 = scmp.eq.s32.totalorder %s21, 1
    %p102 = por %p100, %p101
    %p103 = scmp.ne.s32.totalorder %s94, %s95
    %p104 = scmp.eq.s32.totalorder %s21, 0
    %p105 = por %p103, %p104
    %p106 = scmp.ne.s32.totalorder %s94, %s95
    %p107 = scmp.eq.s32.totalorder %s22, 1
    %p108 = por %p106, %p107
    %p110 = scmp.ne.s32.totalorder %s95, %s109
    %p111 = scmp.eq.s32.totalorder %s22, 0
    %p112 = por %p110, %p111
    %s114 = sadd.s32 %s113, 1
    %p117 = scmp.eq.s32.totalorder %s16, 1
    %p118 = scmp.ne.s32.totalorder %s113, %s115
    %p119 = scmp.eq.s32.totalorder %s16, 0
    %p120 = por %p118, %p119
    %p121 = scmp.ne.s32.totalorder %s113, %s115
    %p122 = scmp.eq.s32.totalorder %s21, 1
    %p123 = por %p121, %p122
    %p124 = scmp.ne.s32.totalorder %s115, %s116
    %p125 = scmp.eq.s32.totalorder %s21, 0
    %p126 = por %p124, %p125
    %p127 = scmp.ne.s32.totalorder %s115, %s116
    %p128 = scmp.eq.s32.totalorder %s22, 1
    %p129 = por %p127, %p128
    %p131 = scmp.ne.s32.totalorder %s116, %s130
    %p132 = scmp.eq.s32.totalorder %s22, 0
    %p133 = por %p131, %p132
    %s135 = sadd.s32 %s134, 1
    %p138 = scmp.eq.s32.totalorder %s16, 1
    %p139 = scmp.ne.s32.totalorder %s134, %s136
    %p140 = scmp.eq.s32.totalorder %s16, 0
    %p141 = por %p139, %p140
    %p142 = scmp.ne.s32.totalorder %s134, %s136
    %p143 = scmp.eq.s32.totalorder %s21, 1
    %p144 = por %p142, %p143
    %p145 = scmp.ne.s32.totalorder %s136, %s137
    %p146 = scmp.eq.s32.totalorder %s21, 0
    %p147 = por %p145, %p146
    %p148 = scmp.ne.s32.totalorder %s136, %s137
    %p149 = scmp.eq.s32.totalorder %s22, 1
    %p150 = por %p148, %p149
    %p152 = scmp.ne.s32.totalorder %s137, %s151
    %p153 = scmp.eq.s32.totalorder %s22, 0
    %p154 = por %p152, %p153
    %s156 = sadd.s32 %s155, 1
    %p159 = scmp.eq.s32.totalorder %s16, 1
    %p160 = scmp.ne.s32.totalorder %s155, %s157
    %p161 = scmp.eq.s32.totalorder %s16, 0
    %p162 = por %p160, %p161
    %p163 = scmp.ne.s32.totalorder %s155, %s157
    %p164 = scmp.eq.s32.totalorder %s21, 1
    %p165 = por %p163, %p164
    %p166 = scmp.ne.s32.totalorder %s157, %s158
    %p167 = scmp.eq.s32.totalorder %s21, 0
    %p168 = por %p166, %p167
    %p169 = scmp.ne.s32.totalorder %s157, %s158
    %p170 = scmp.eq.s32.totalorder %s22, 1
    %p171 = por %p169, %p170
    %p173 = scmp.ne.s32.totalorder %s158, %s172
    %p174 = scmp.eq.s32.totalorder %s22, 0
    %p175 = por %p173, %p174
    %s177 = sadd.s32 %s176, 1
    %p180 = scmp.eq.s32.totalorder %s16, 1
    %p181 = scmp.ne.s32.totalorder %s176, %s178
    %p182 = scmp.eq.s32.totalorder %s16, 0
    %p183 = por %p181, %p182
    %p184 = scmp.ne.s32.totalorder %s176, %s178
    %p185 = scmp.eq.s32.totalorder %s21, 1
    %p186 = por %p184, %p185
    %p187 = scmp.ne.s32.totalorder %s178, %s179
    %p188 = scmp.eq.s32.totalorder %s21, 0
    %p189 = por %p187, %p188
    %p190 = scmp.ne.s32.totalorder %s178, %s179
    %p191 = scmp.eq.s32.totalorder %s22, 1
    %p192 = por %p190, %p191
    %p194 = scmp.ne.s32.totalorder %s179, %s193
    %p195 = scmp.eq.s32.totalorder %s22, 0
    %p196 = por %p194, %p195
    %s198 = sadd.s32 %s197, 1
    %p201 = scmp.eq.s32.totalorder %s16, 1
    %p202 = scmp.ne.s32.totalorder %s197, %s199
    %p203 = scmp.eq.s32.totalorder %s16, 0
    %p204 = por %p202, %p203
    %p205 = scmp.ne.s32.totalorder %s197, %s199
    %p206 = scmp.eq.s32.totalorder %s21, 1
    %p207 = por %p205, %p206
    %p208 = scmp.ne.s32.totalorder %s199, %s200
    %p209 = scmp.eq.s32.totalorder %s21, 0
    %p210 = por %p208, %p209
    %p211 = scmp.ne.s32.totalorder %s199, %s200
    %p212 = scmp.eq.s32.totalorder %s22, 1
    %p213 = por %p211, %p212
    %p215 = scmp.ne.s32.totalorder %s200, %s214
    %p216 = scmp.eq.s32.totalorder %s22, 0
    %p217 = por %p215, %p216
    %s219 = sadd.s32 %s218, 1
    %p222 = scmp.eq.s32.totalorder %s16, 1
    %p223 = scmp.ne.s32.totalorder %s218, %s220
    %p224 = scmp.eq.s32.totalorder %s16, 0
    %p225 = por %p223, %p224
    %p226 = scmp.ne.s32.totalorder %s218, %s220
    %p227 = scmp.eq.s32.totalorder %s21, 1
    %p228 = por %p226, %p227
    %p229 = scmp.ne.s32.totalorder %s220, %s221
    %p230 = scmp.eq.s32.totalorder %s21, 0
    %p231 = por %p229, %p230
    %p232 = scmp.ne.s32.totalorder %s220, %s221
    %p233 = scmp.eq.s32.totalorder %s22, 1
    %p234 = por %p232, %p233
    %p236 = scmp.ne.s32.totalorder %s221, %s235
    %p237 = scmp.eq.s32.totalorder %s22, 0
    %p238 = por %p236, %p237
    %s239 = ssub.s32 %s16, %s23
    %p240 = scmp.eq.s32.totalorder %s239, 0
    %s242 = sadd.s32 %s241, 1
    %s243 = scalar_select %p240, %s241, %s242
    %p246 = pneg %p240
    %p247 = scmp.eq.s32.totalorder %s16, 1
    %p248 = por %p246, %p247
    %p249 = scmp.ne.s32.totalorder %s241, %s244
    %p250 = scmp.eq.s32.totalorder %s16, 0
    %p251 = por %p249, %p250
    %p252 = scmp.ne.s32.totalorder %s241, %s244
    %p253 = scmp.eq.s32.totalorder %s21, 1
    %p254 = por %p252, %p253
    %p255 = scmp.ne.s32.totalorder %s244, %s245
    %p256 = scmp.eq.s32.totalorder %s21, 0
    %p257 = por %p255, %p256
    %p258 = scmp.ne.s32.totalorder %s244, %s245
    %p259 = scmp.eq.s32.totalorder %s22, 1
    %p260 = por %p258, %p259
    %p262 = scmp.ne.s32.totalorder %s245, %s261
    %p263 = scmp.eq.s32.totalorder %s22, 0
    %p264 = por %p262, %p263
    %p265 = scmp.le.s32.totalorder 1, %s16
    %p266 = scmp.lt.s32.totalorder %s16, 3
    %p267 = pnand %p265, %p266
    %p268 = pneg %p267
    // Predicated region
    $region9: #{visible_module_forward.8} parent=5 // pred_check
      _
    $region10: #{visible_module_forward.8} parent=5 // pred_check_branch
      %270 = sbr.rel (%p267) target = $region12
    $region11: #{visible_module_forward.8} parent=5 // pred_region
      %s271 = ssub.s32 %s16, 1
      // Predicated region
      $region13: #{visible_module_forward.8} parent=11 // pred_check
        %p272 = pneg %p63
      $region14: #{visible_module_forward.8} parent=11 // pred_check_branch
        %274 = sbr.rel (%p272) target = $region16
      $region15: #{visible_module_forward.8} parent=11 // pred_region
        _
      $region16: #{visible_module_forward.8} parent=11 // pred_fallthru
        _
      // Predicated region
      $region17: #{visible_module_forward.8} parent=11 // pred_check
        %p275 = pneg %p84
      $region18: #{visible_module_forward.8} parent=11 // pred_check_branch
        %277 = sbr.rel (%p275) target = $region20
      $region19: #{visible_module_forward.8} parent=11 // pred_region
        _
      $region20: #{visible_module_forward.8} parent=11 // pred_fallthru
        _
      // Predicated region
      $region21: #{visible_module_forward.8} parent=11 // pred_check
        %p278 = pneg %p105
      $region22: #{visible_module_forward.8} parent=11 // pred_check_branch
        %280 = sbr.rel (%p278) target = $region24
      $region23: #{visible_module_forward.8} parent=11 // pred_region
        _
      $region24: #{visible_module_forward.8} parent=11 // pred_fallthru
        _
      // Predicated region
      $region25: #{visible_module_forward.8} parent=11 // pred_check
        %p281 = pneg %p126
      $region26: #{visible_module_forward.8} parent=11 // pred_check_branch
        %283 = sbr.rel (%p281) target = $region28
      $region27: #{visible_module_forward.8} parent=11 // pred_region
        _
      $region28: #{visible_module_forward.8} parent=11 // pred_fallthru
        _
      // Predicated region
      $region29: #{visible_module_forward.8} parent=11 // pred_check
        %p284 = pneg %p147
      $region30: #{visible_module_forward.8} parent=11 // pred_check_branch
        %286 = sbr.rel (%p284) target = $region32
      $region31: #{visible_module_forward.8} parent=11 // pred_region
        _
      $region32: #{visible_module_forward.8} parent=11 // pred_fallthru
        _
      // Predicated region
      $region33: #{visible_module_forward.8} parent=11 // pred_check
        %p287 = pneg %p168
      $region34: #{visible_module_forward.8} parent=11 // pred_check_branch
        %289 = sbr.rel (%p287) target = $region36
      $region35: #{visible_module_forward.8} parent=11 // pred_region
        _
      $region36: #{visible_module_forward.8} parent=11 // pred_fallthru
        _
      // Predicated region
      $region37: #{visible_module_forward.8} parent=11 // pred_check
        %p290 = pneg %p189
      $region38: #{visible_module_forward.8} parent=11 // pred_check_branch
        %292 = sbr.rel (%p290) target = $region40
      $region39: #{visible_module_forward.8} parent=11 // pred_region
        _
      $region40: #{visible_module_forward.8} parent=11 // pred_fallthru
        _
      // Predicated region
      $region41: #{visible_module_forward.8} parent=11 // pred_check
        %p293 = pneg %p210
      $region42: #{visible_module_forward.8} parent=11 // pred_check_branch
        %295 = sbr.rel (%p293) target = $region44
      $region43: #{visible_module_forward.8} parent=11 // pred_region
        _
      $region44: #{visible_module_forward.8} parent=11 // pred_fallthru
        _
      // Predicated region
      $region45: #{visible_module_forward.8} parent=11 // pred_check
        %p296 = pneg %p231
      $region46: #{visible_module_forward.8} parent=11 // pred_check_branch
        %298 = sbr.rel (%p296) target = $region48
      $region47: #{visible_module_forward.8} parent=11 // pred_region
        _
      $region48: #{visible_module_forward.8} parent=11 // pred_fallthru
        _
    $region12: #{visible_module_forward.8} parent=5 // pred_fallthru
      _
    %p299 = scmp.lt.s32.totalorder %s16, 2
    // Predicated region
    $region49: #{visible_module_forward.8} parent=5 // pred_check
      %p300 = pneg %p299
    $region50: #{visible_module_forward.8} parent=5 // pred_check_branch
      %302 = sbr.rel (%p300) target = $region52
    $region51: #{visible_module_forward.8} parent=5 // pred_region
      // Predicated region
      $region53: #{visible_module_forward.8} parent=51 // pred_check
        %p303 = pneg %p36
      $region54: #{visible_module_forward.8} parent=51 // pred_check_branch
        %305 = sbr.rel (%p303) target = $region56
      $region55: #{visible_module_forward.8} parent=51 // pred_region
        %p306 = scmp.lt.s32.totalorder %s16, 1
        %s307 = scalar_select %p306, %s16, 1
        %s308 = smul.addr %s307, 16
        %s309 = smul.addr %s308, 4
        %s310 = scalar_lea.vmem %s0, %s309
      $region56: #{visible_module_forward.8} parent=51 // pred_fallthru
        _
    $region52: #{visible_module_forward.8} parent=5 // pred_fallthru
      _
    %p311 = scmp.le.s32.totalorder 1, %s16
    %p312 = scmp.lt.s32.totalorder %s16, 3
    %p313 = pnand %p311, %p312
    %p314 = pneg %p313
    // Predicated region
    $region57: #{visible_module_forward.8} parent=5 // pred_check
      _
    $region58: #{visible_module_forward.8} parent=5 // pred_check_branch
      %316 = sbr.rel (%p313) target = $region60
    $region59: #{visible_module_forward.8} parent=5 // pred_region
      %s317 = ssub.s32 %s16, 1
      %p318 = scmp.lt.s32.totalorder %s21, 1
      %s319 = scalar_select %p318, %s21, 1
      %s320 = smul.addr %s319, 16
      %s321 = smul.addr %s320, 4
      %s322 = scalar_lea.vmem %s0, %s321
      %p323 = pneg %p42
      %p324 = pneg %p39
      %p325 = pneg %p63
      %p326 = pneg %p60
      %p327 = pneg %p84
      %p328 = pneg %p81
      %p329 = pneg %p105
      %p330 = pneg %p102
      %p331 = pneg %p126
      %p332 = pneg %p123
      %p333 = pneg %p147
      %p334 = pneg %p144
      %p335 = pneg %p168
      %p336 = pneg %p165
      %p337 = pneg %p189
      %p338 = pneg %p186
      %p339 = pneg %p210
      %p340 = pneg %p207
      %p341 = pneg %p231
      %p342 = pneg %p228
      %p343 = pneg %p257
      %p344 = pneg %p254
      %p345 = scmp.lt.s32.totalorder %s21, 1
      %s346 = scalar_select %p345, %s21, 1
      %s347 = smul.addr %s346, 16
      %s348 = smul.addr %s347, 4
      %s349 = scalar_lea.vmem %s10, %s348
      %p350 = scmp.lt.s32.totalorder %s21, 1
      %s351 = scalar_select %p350, %s21, 1
      %s352 = smul.addr %s351, 16
      %s353 = smul.addr %s352, 4
      %s354 = scalar_lea.vmem %s0, %s353
      %p355 = scmp.lt.s32.totalorder %s21, 1
      %s356 = scalar_select %p355, %s21, 1
      %s357 = smul.addr %s356, 16
      %s358 = smul.addr %s357, 4
      %s359 = scalar_lea.vmem %s10, %s358
      %v363 = vld [vmem:[%s354] sm:$0xff]
      %v364 = vld [vmem:[%s354 + $0x8] sm:$0xff]
      %v365 = vld [vmem:[%s354 + $0x10] sm:$0xff]
      %v366 = vld [vmem:[%s354 + $0x18] sm:$0xff]
      %v367 = vld [vmem:[%s354 + $0x20] sm:$0xff]
      %v368 = vld [vmem:[%s354 + $0x28] sm:$0xff]
      %v369 = vld [vmem:[%s354 + $0x30] sm:$0xff]
      %v370 = vld [vmem:[%s354 + $0x38] sm:$0xff]
      %v371 = vld [vmem:[%s1] sm:$0xf]
      %v372 = vld [vmem:[%s1 + $0x4] sm:$0xf]
      %v373 = vld [vmem:[%s1 + $0x8] sm:$0xf]
      %v374 = vld [vmem:[%s1 + $0xc] sm:$0xf]
      %v375 = vld [vmem:[%s1 + $0x10] sm:$0xf]
      %v376 = vld [vmem:[%s1 + $0x14] sm:$0xf]
      %v377 = vld [vmem:[%s1 + $0x18] sm:$0xf]
      %v378 = vld [vmem:[%s1 + $0x1c] sm:$0xf]
      %v379 = vld [vmem:[%s1 + $0x20] sm:$0xf]
      %v380 = vld [vmem:[%s1 + $0x24] sm:$0xf]
      %v381 = vld [vmem:[%s1 + $0x28] sm:$0xf]
      %v382 = vld [vmem:[%s1 + $0x2c] sm:$0xf]
      %v383 = vld [vmem:[%s1 + $0x30] sm:$0xf]
      %v384 = vld [vmem:[%s1 + $0x34] sm:$0xf]
      %v385 = vld [vmem:[%s1 + $0x38] sm:$0xf]
      %v386 = vld [vmem:[%s1 + $0x3c] sm:$0xf]
      %v387 = vld [vmem:[%s1 + $0x40] sm:$0xf]
      %v388 = vld [vmem:[%s1 + $0x44] sm:$0xf]
      %v389 = vld [vmem:[%s1 + $0x48] sm:$0xf]
      %v390 = vld [vmem:[%s1 + $0x4c] sm:$0xf]
      %v391 = vld [vmem:[%s1 + $0x50] sm:$0xf]
      %v392 = vld [vmem:[%s1 + $0x54] sm:$0xf]
      %v393 = vld [vmem:[%s1 + $0x58] sm:$0xf]
      %v394 = vld [vmem:[%s1 + $0x5c] sm:$0xf]
      %v395 = vld [vmem:[%s1 + $0x60] sm:$0xf]
      %v396 = vld [vmem:[%s1 + $0x64] sm:$0xf]
      %v397 = vld [vmem:[%s1 + $0x68] sm:$0xf]
      %v398 = vld [vmem:[%s1 + $0x6c] sm:$0xf]
      %v399 = vld [vmem:[%s1 + $0x70] sm:$0xf]
      %v400 = vld [vmem:[%s1 + $0x74] sm:$0xf]
      %v401 = vld [vmem:[%s1 + $0x78] sm:$0xf]
      %v402 = vld [vmem:[%s1 + $0x7c] sm:$0xf]
      %v411 = vunpack.c.l.b16 %v363
      %v412 = vunpack.c.h.b16 %v363
      %v413 = vunpack.c.l.b16 %v364
      %v414 = vunpack.c.h.b16 %v364
      %v415 = vunpack.c.l.b16 %v365
      %v416 = vunpack.c.h.b16 %v365
      %v417 = vunpack.c.l.b16 %v366
      %v418 = vunpack.c.h.b16 %v366
      %v419 = vunpack.c.l.b16 %v367
      %v420 = vunpack.c.h.b16 %v367
      %v421 = vunpack.c.l.b16 %v368
      %v422 = vunpack.c.h.b16 %v368
      %v423 = vunpack.c.l.b16 %v369
      %v424 = vunpack.c.h.b16 %v369
      %v425 = vunpack.c.l.b16 %v370
      %v426 = vunpack.c.h.b16 %v370
      %v427 = vpack.c.b16 %v413, %v411
      %v428 = vpack.c.b16 %v414, %v412
      %v429 = vpack.c.b16 %v417, %v415
      %v430 = vpack.c.b16 %v418, %v416
      %v431 = vpack.c.b16 %v421, %v419
      %v432 = vpack.c.b16 %v422, %v420
      %v433 = vpack.c.b16 %v425, %v423
      %v434 = vpack.c.b16 %v426, %v424
      %v475 = vunpack.c.l.b16 %v371
      %v476 = vunpack.c.l.b16 %v372
      %v477 = vunpack.c.l.b16 %v373
      %v478 = vunpack.c.l.b16 %v374
      %v479 = vunpack.c.l.b16 %v375
      %v480 = vunpack.c.l.b16 %v376
      %v481 = vunpack.c.l.b16 %v377
      %v482 = vunpack.c.l.b16 %v378
      %v483 = vunpack.c.l.b16 %v379
      %v484 = vunpack.c.l.b16 %v380
      %v485 = vunpack.c.l.b16 %v381
      %v486 = vunpack.c.l.b16 %v382
      %v487 = vunpack.c.l.b16 %v383
      %v488 = vunpack.c.l.b16 %v384
      %v489 = vunpack.c.l.b16 %v385
      %v490 = vunpack.c.l.b16 %v386
      %v491 = vunpack.c.l.b16 %v387
      %v492 = vunpack.c.l.b16 %v388
      %v493 = vunpack.c.l.b16 %v389
      %v494 = vunpack.c.l.b16 %v390
      %v495 = vunpack.c.l.b16 %v391
      %v496 = vunpack.c.l.b16 %v392
      %v497 = vunpack.c.l.b16 %v393
      %v498 = vunpack.c.l.b16 %v394
      %v499 = vunpack.c.l.b16 %v395
      %v500 = vunpack.c.l.b16 %v396
      %v501 = vunpack.c.l.b16 %v397
      %v502 = vunpack.c.l.b16 %v398
      %v503 = vunpack.c.l.b16 %v399
      %v504 = vunpack.c.l.b16 %v400
      %v505 = vunpack.c.l.b16 %v401
      %v506 = vunpack.c.l.b16 %v402
      %v507 = vpack.c.b16 %v476, %v475
      %v508 = vpack.c.b16 %v478, %v477
      %v509 = vpack.c.b16 %v480, %v479
      %v510 = vpack.c.b16 %v482, %v481
      %v511 = vpack.c.b16 %v484, %v483
      %v512 = vpack.c.b16 %v486, %v485
      %v513 = vpack.c.b16 %v488, %v487
      %v514 = vpack.c.b16 %v490, %v489
      %v515 = vpack.c.b16 %v492, %v491
      %v516 = vpack.c.b16 %v494, %v493
      %v517 = vpack.c.b16 %v496, %v495
      %v518 = vpack.c.b16 %v498, %v497
      %v519 = vpack.c.b16 %v500, %v499
      %v520 = vpack.c.b16 %v502, %v501
      %v521 = vpack.c.b16 %v504, %v503
      %v522 = vpack.c.b16 %v506, %v505
      %539 = vmatpush.bf16.msra.mxu0 %v514
      %540 = vmatpush.bf16.msra.mxu0 %v513
      %541 = vmatpush.bf16.msra.mxu0 %v512
      %542 = vmatpush.bf16.msra.mxu0 %v511
      %543 = vmatpush.bf16.msra.mxu0 %v510
      %544 = vmatpush.bf16.msra.mxu0 %v509
      %545 = vmatpush.bf16.msra.mxu0 %v508
      %546 = vmatpush.bf16.msra.mxu0 %v507
      %547 = vmatmul.bf16.gmra.mxu0 %v427
      %v548 = vpop.f32.mrf.mxu0
      %v549 = vadd.f32 0.0, %v548
      %v550 = vpop.f32.mrf.mxu0
      %v551 = vadd.f32 0.0, %v550
      %552 = vmatmul.bf16.gmra.mxu0 %v429
      %v553 = vpop.f32.mrf.mxu0
      %v554 = vadd.f32 0.0, %v553
      %v555 = vpop.f32.mrf.mxu0
      %v556 = vadd.f32 0.0, %v555
      %557 = vmatmul.bf16.gmra.mxu0 %v431
      %v558 = vpop.f32.mrf.mxu0
      %v559 = vadd.f32 0.0, %v558
      %v560 = vpop.f32.mrf.mxu0
      %v561 = vadd.f32 0.0, %v560
      %562 = vmatmul.bf16.gmra.mxu0 %v433
      %v563 = vpop.f32.mrf.mxu0
      %v564 = vadd.f32 0.0, %v563
      %v565 = vpop.f32.mrf.mxu0
      %v566 = vadd.f32 0.0, %v565
      %567 = vdwg.mxu0
      %568 = vmatpush.bf16.msra.mxu0 %v522
      %569 = vmatpush.bf16.msra.mxu0 %v521
      %570 = vmatpush.bf16.msra.mxu0 %v520
      %571 = vmatpush.bf16.msra.mxu0 %v519
      %572 = vmatpush.bf16.msra.mxu0 %v518
      %573 = vmatpush.bf16.msra.mxu0 %v517
      %574 = vmatpush.bf16.msra.mxu0 %v516
      %575 = vmatpush.bf16.msra.mxu0 %v515
      %576 = vmatmul.bf16.gmra.mxu0 %v428
      %v577 = vpop.f32.mrf.mxu0
      %v578 = vadd.f32 %v549, %v577
      %v579 = vpop.f32.mrf.mxu0
      %v580 = vadd.f32 %v551, %v579
      %581 = vmatmul.bf16.gmra.mxu0 %v430
      %v582 = vpop.f32.mrf.mxu0
      %v583 = vadd.f32 %v554, %v582
      %v584 = vpop.f32.mrf.mxu0
      %v585 = vadd.f32 %v556, %v584
      %586 = vmatmul.bf16.gmra.mxu0 %v432
      %v587 = vpop.f32.mrf.mxu0
      %v588 = vadd.f32 %v559, %v587
      %v589 = vpop.f32.mrf.mxu0
      %v590 = vadd.f32 %v561, %v589
      %591 = vmatmul.bf16.gmra.mxu0 %v434
      %v592 = vpop.f32.mrf.mxu0
      %v593 = vadd.f32 %v564, %v592
      %v594 = vpop.f32.mrf.mxu0
      %v595 = vadd.f32 %v566, %v594
      %596 = vdwg.mxu0
      %v597 = vld [vmem:[%s2] sm:$0x1]
      %v599 = vperm.slane %v597, 0
      %v601 = vmul.f32 %v578, %v599
      %v602 = vmul.f32 %v580, %v599
      %v603 = vmul.f32 %v583, %v599
      %v604 = vmul.f32 %v585, %v599
      %v605 = vmul.f32 %v588, %v599
      %v606 = vmul.f32 %v590, %v599
      %v607 = vmul.f32 %v593, %v599
      %v608 = vmul.f32 %v595, %v599
      %v609 = vld [vmem:[%s3] sm:$0x1]
      %v611 = vperm.slane %v609, 0
      %v613 = vadd.f32 %v601, %v611
      %v614 = vadd.f32 %v602, %v611
      %v615 = vadd.f32 %v603, %v611
      %v616 = vadd.f32 %v604, %v611
      %v617 = vadd.f32 %v605, %v611
      %v618 = vadd.f32 %v606, %v611
      %v619 = vadd.f32 %v607, %v611
      %v620 = vadd.f32 %v608, %v611
      %v621 = vmax.f32 %v613, 0.0
      %v622 = vmax.f32 %v614, 0.0
      %v623 = vmax.f32 %v615, 0.0
      %v624 = vmax.f32 %v616, 0.0
      %v625 = vmax.f32 %v617, 0.0
      %v626 = vmax.f32 %v618, 0.0
      %v627 = vmax.f32 %v619, 0.0
      %v628 = vmax.f32 %v620, 0.0
      %v629 = vpack.c.bf16 %v621, %v621
      %v630 = vpack.c.bf16 %v622, %v622
      %v631 = vpack.c.bf16 %v623, %v623
      %v632 = vpack.c.bf16 %v624, %v624
      %v633 = vpack.c.bf16 %v625, %v625
      %v634 = vpack.c.bf16 %v626, %v626
      %v635 = vpack.c.bf16 %v627, %v627
      %v636 = vpack.c.bf16 %v628, %v628
      %v645 = vunpack.c.l.b16 %v629
      %v646 = vunpack.c.l.b16 %v630
      %v647 = vunpack.c.l.b16 %v631
      %v648 = vunpack.c.l.b16 %v632
      %v649 = vunpack.c.l.b16 %v633
      %v650 = vunpack.c.l.b16 %v634
      %v651 = vunpack.c.l.b16 %v635
      %v652 = vunpack.c.l.b16 %v636
      %v653 = vpack.c.b16 %v646, %v645
      %v654 = vpack.c.b16 %v648, %v647
      %v655 = vpack.c.b16 %v650, %v649
      %v656 = vpack.c.b16 %v652, %v651
      %v661 = vlaneseq
      %v662 = vshrl.u32 %v661, 7
      %v663 = vadd.s32 %v662, 8
      %v664 = vadd.s32 %v662, 16
      %v665 = vadd.s32 %v662, 24
      %v666 = vadd.s32 %v662, 32
      %v667 = vadd.s32 %v662, 40
      %v668 = vadd.s32 %v662, 48
      %v669 = vadd.s32 %v662, 56
      %vm670 = vcmp.lt.s32.totalorder %v662, 0
      %v671 = vsub.s32 0, %v662
      %v672 = vsel %vm670, %v671, %v662
      %v673 = vshrl.u32 %v672, 3
      %v674 = vand.u32 %v672, 7
      %v675 = vsub.s32 0, %v674
      %v676 = vsel %vm670, %v675, %v674
      %vm677 = vcmp.lt.s32.totalorder %v663, 0
      %v678 = vsub.s32 0, %v663
      %v679 = vsel %vm677, %v678, %v663
      %v680 = vshrl.u32 %v679, 3
      %v681 = vand.u32 %v679, 7
      %v682 = vsub.s32 0, %v681
      %v683 = vsel %vm677, %v682, %v681
      %vm684 = vcmp.lt.s32.totalorder %v664, 0
      %v685 = vsub.s32 0, %v664
      %v686 = vsel %vm684, %v685, %v664
      %v687 = vshrl.u32 %v686, 3
      %v688 = vand.u32 %v686, 7
      %v689 = vsub.s32 0, %v688
      %v690 = vsel %vm684, %v689, %v688
      %vm691 = vcmp.lt.s32.totalorder %v665, 0
      %v692 = vsub.s32 0, %v665
      %v693 = vsel %vm691, %v692, %v665
      %v694 = vshrl.u32 %v693, 3
      %v695 = vand.u32 %v693, 7
      %v696 = vsub.s32 0, %v695
      %v697 = vsel %vm691, %v696, %v695
      %vm698 = vcmp.lt.s32.totalorder %v666, 0
      %v699 = vsub.s32 0, %v666
      %v700 = vsel %vm698, %v699, %v666
      %v701 = vshrl.u32 %v700, 3
      %v702 = vand.u32 %v700, 7
      %v703 = vsub.s32 0, %v702
      %v704 = vsel %vm698, %v703, %v702
      %vm705 = vcmp.lt.s32.totalorder %v667, 0
      %v706 = vsub.s32 0, %v667
      %v707 = vsel %vm705, %v706, %v667
      %v708 = vshrl.u32 %v707, 3
      %v709 = vand.u32 %v707, 7
      %v710 = vsub.s32 0, %v709
      %v711 = vsel %vm705, %v710, %v709
      %vm712 = vcmp.lt.s32.totalorder %v668, 0
      %v713 = vsub.s32 0, %v668
      %v714 = vsel %vm712, %v713, %v668
      %v715 = vshrl.u32 %v714, 3
      %v716 = vand.u32 %v714, 7
      %v717 = vsub.s32 0, %v716
      %v718 = vsel %vm712, %v717, %v716
      %vm719 = vcmp.lt.s32.totalorder %v669, 0
      %v720 = vsub.s32 0, %v669
      %v721 = vsel %vm719, %v720, %v669
      %v722 = vshrl.u32 %v721, 3
      %v723 = vand.u32 %v721, 7
      %v724 = vsub.s32 0, %v723
      %v725 = vsel %vm719, %v724, %v723
      %vm726 = vcmp.ne.s32.totalorder %v676, 0
      %vm727 = vcmp.ne.s32.totalorder %v683, 0
      %vm728 = vcmp.ne.s32.totalorder %v690, 0
      %vm729 = vcmp.ne.s32.totalorder %v697, 0
      %vm730 = vcmp.ne.s32.totalorder %v704, 0
      %vm731 = vcmp.ne.s32.totalorder %v711, 0
      %vm732 = vcmp.ne.s32.totalorder %v718, 0
      %vm733 = vcmp.ne.s32.totalorder %v725, 0
      %vm734 = vcmp.lt.s32.totalorder %v676, 0
      %vm735 = vcmp.lt.s32.totalorder %v683, 0
      %vm736 = vcmp.lt.s32.totalorder %v690, 0
      %vm737 = vcmp.lt.s32.totalorder %v697, 0
      %vm738 = vcmp.lt.s32.totalorder %v704, 0
      %vm739 = vcmp.lt.s32.totalorder %v711, 0
      %vm740 = vcmp.lt.s32.totalorder %v718, 0
      %vm741 = vcmp.lt.s32.totalorder %v725, 0
      %vm742 = vmand %vm734, %vm726
      %vm743 = vmand %vm735, %vm727
      %vm744 = vmand %vm736, %vm728
      %vm745 = vmand %vm737, %vm729
      %vm746 = vmand %vm738, %vm730
      %vm747 = vmand %vm739, %vm731
      %vm748 = vmand %vm740, %vm732
      %vm749 = vmand %vm741, %vm733
      %v750 = vadd.s32 %v676, 8
      %v751 = vadd.s32 %v683, 8
      %v752 = vadd.s32 %v690, 8
      %v753 = vadd.s32 %v697, 8
      %v754 = vadd.s32 %v704, 8
      %v755 = vadd.s32 %v711, 8
      %v756 = vadd.s32 %v718, 8
      %v757 = vadd.s32 %v725, 8
      %v758 = vsel %vm742, %v750, %v676
      %v759 = vsel %vm743, %v751, %v683
      %v760 = vsel %vm744, %v752, %v690
      %v761 = vsel %vm745, %v753, %v697
      %v762 = vsel %vm746, %v754, %v704
      %v763 = vsel %vm747, %v755, %v711
      %v764 = vsel %vm748, %v756, %v718
      %v765 = vsel %vm749, %v757, %v725
      %vm766 = vcmp.ne.s32.totalorder %v758, 0
      %vm767 = vcmp.ne.s32.totalorder %v759, 0
      %vm768 = vcmp.ne.s32.totalorder %v760, 0
      %vm769 = vcmp.ne.s32.totalorder %v761, 0
      %vm770 = vcmp.ne.s32.totalorder %v762, 0
      %vm771 = vcmp.ne.s32.totalorder %v763, 0
      %vm772 = vcmp.ne.s32.totalorder %v764, 0
      %vm773 = vcmp.ne.s32.totalorder %v765, 0
      %vm774 = vcmp.ne.s32.totalorder %v758, 7
      %vm775 = vcmp.ne.s32.totalorder %v759, 7
      %vm776 = vcmp.ne.s32.totalorder %v760, 7
      %vm777 = vcmp.ne.s32.totalorder %v761, 7
      %vm778 = vcmp.ne.s32.totalorder %v762, 7
      %vm779 = vcmp.ne.s32.totalorder %v763, 7
      %vm780 = vcmp.ne.s32.totalorder %v764, 7
      %vm781 = vcmp.ne.s32.totalorder %v765, 7
      %v782 = vsel %vm766, 1, 0
      %v783 = vsel %vm767, 1, 0
      %v784 = vsel %vm768, 1, 0
      %v785 = vsel %vm769, 1, 0
      %v786 = vsel %vm770, 1, 0
      %v787 = vsel %vm771, 1, 0
      %v788 = vsel %vm772, 1, 0
      %v789 = vsel %vm773, 1, 0
      %vm790 = vcmp.eq.s32.totalorder %v782, 1
      %vm791 = vcmp.eq.s32.totalorder %v783, 1
      %vm792 = vcmp.eq.s32.totalorder %v784, 1
      %vm793 = vcmp.eq.s32.totalorder %v785, 1
      %vm794 = vcmp.eq.s32.totalorder %v786, 1
      %vm795 = vcmp.eq.s32.totalorder %v787, 1
      %vm796 = vcmp.eq.s32.totalorder %v788, 1
      %vm797 = vcmp.eq.s32.totalorder %v789, 1
      %vm798 = vmpackc.low %vm790, %vm790
      %vm799 = vmpackc.low %vm791, %vm791
      %vm800 = vmpackc.low %vm792, %vm792
      %vm801 = vmpackc.low %vm793, %vm793
      %vm802 = vmpackc.low %vm794, %vm794
      %vm803 = vmpackc.low %vm795, %vm795
      %vm804 = vmpackc.low %vm796, %vm796
      %vm805 = vmpackc.low %vm797, %vm797
      %v806 = vsel %vm798, 65537, 0
      %v807 = vsel %vm799, 65537, 0
      %v808 = vsel %vm800, 65537, 0
      %v809 = vsel %vm801, 65537, 0
      %v810 = vsel %vm802, 65537, 0
      %v811 = vsel %vm803, 65537, 0
      %v812 = vsel %vm804, 65537, 0
      %v813 = vsel %vm805, 65537, 0
      %v814 = vunpack.c.l.b16 %v806
      %v815 = vunpack.c.l.b16 %v807
      %v816 = vunpack.c.l.b16 %v808
      %v817 = vunpack.c.l.b16 %v809
      %v818 = vunpack.c.l.b16 %v810
      %v819 = vunpack.c.l.b16 %v811
      %v820 = vunpack.c.l.b16 %v812
      %v821 = vunpack.c.l.b16 %v813
      %v822 = vpack.c.b16 %v815, %v814
      %v823 = vpack.c.b16 %v817, %v816
      %v824 = vpack.c.b16 %v819, %v818
      %v825 = vpack.c.b16 %v821, %v820
      %vm826 = vsmask.f32 3328
      %v828 = vshrl.u32 %v822, 16
      %v830 = vrot.slane %v828, 4
      %v831 = vshll.u32 %v822, 16
      %v833 = vrot.slane %v831, 5
      %v834 = vor.u32 %v830, %v833
      %v836 = vshrl.u32 %v823, 16
      %v838 = vrot.slane %v836, 4
      %v839 = vshll.u32 %v823, 16
      %v841 = vrot.slane %v839, 5
      %v842 = vor.u32 %v838, %v841
      %v843 = vsel %vm826, %v834, %v842
      %v845 = vshrl.u32 %v824, 16
      %v847 = vrot.slane %v845, 4
      %v848 = vshll.u32 %v824, 16
      %v850 = vrot.slane %v848, 5
      %v851 = vor.u32 %v847, %v850
      %v852 = vsel %vm826, %v842, %v851
      %v854 = vshrl.u32 %v825, 16
      %v856 = vrot.slane %v854, 4
      %v857 = vshll.u32 %v825, 16
      %v859 = vrot.slane %v857, 5
      %v860 = vor.u32 %v856, %v859
      %v861 = vsel %vm826, %v851, %v860
      %v862 = vunpack.c.l.b16 %v843
      %v863 = vunpack.c.h.b16 %v843
      %v864 = vunpack.c.l.b16 0
      %v865 = vunpack.c.h.b16 0
      %vm866 = vcmp.ne.s32.totalorder %v862, %v864
      %vm867 = vcmp.ne.s32.totalorder %v863, %v865
      %vm868 = vmpackc.low %vm867, %vm866
      %v869 = vunpack.c.l.b16 %v852
      %v870 = vunpack.c.h.b16 %v852
      %v871 = vunpack.c.l.b16 0
      %v872 = vunpack.c.h.b16 0
      %vm873 = vcmp.ne.s32.totalorder %v869, %v871
      %vm874 = vcmp.ne.s32.totalorder %v870, %v872
      %vm875 = vmpackc.low %vm874, %vm873
      %v876 = vunpack.c.l.b16 %v861
      %v877 = vunpack.c.h.b16 %v861
      %v878 = vunpack.c.l.b16 0
      %v879 = vunpack.c.h.b16 0
      %vm880 = vcmp.ne.s32.totalorder %v876, %v878
      %vm881 = vcmp.ne.s32.totalorder %v877, %v879
      %vm882 = vmpackc.low %vm881, %vm880
      %v883 = vunpack.c.l.b16 %v860
      %v884 = vunpack.c.h.b16 %v860
      %v885 = vunpack.c.l.b16 0
      %v886 = vunpack.c.h.b16 0
      %vm887 = vcmp.ne.s32.totalorder %v883, %v885
      %vm888 = vcmp.ne.s32.totalorder %v884, %v886
      %vm889 = vmpackc.low %vm888, %vm887
      %v890 = vsel %vm868, %v653, 0
      %v891 = vsel %vm875, %v654, 0
      %v892 = vsel %vm882, %v655, 0
      %v893 = vsel %vm889, %v656, 0
      %v894 = vsel %vm774, 1, 0
      %v895 = vsel %vm775, 1, 0
      %v896 = vsel %vm776, 1, 0
      %v897 = vsel %vm777, 1, 0
      %v898 = vsel %vm778, 1, 0
      %v899 = vsel %vm779, 1, 0
      %v900 = vsel %vm780, 1, 0
      %v901 = vsel %vm781, 1, 0
      %vm902 = vcmp.eq.s32.totalorder %v894, 1
      %vm903 = vcmp.eq.s32.totalorder %v895, 1
      %vm904 = vcmp.eq.s32.totalorder %v896, 1
      %vm905 = vcmp.eq.s32.totalorder %v897, 1
      %vm906 = vcmp.eq.s32.totalorder %v898, 1
      %vm907 = vcmp.eq.s32.totalorder %v899, 1
      %vm908 = vcmp.eq.s32.totalorder %v900, 1
      %vm909 = vcmp.eq.s32.totalorder %v901, 1
      %vm910 = vmpackc.low %vm902, %vm902
      %vm911 = vmpackc.low %vm903, %vm903
      %vm912 = vmpackc.low %vm904, %vm904
      %vm913 = vmpackc.low %vm905, %vm905
      %vm914 = vmpackc.low %vm906, %vm906
      %vm915 = vmpackc.low %vm907, %vm907
      %vm916 = vmpackc.low %vm908, %vm908
      %vm917 = vmpackc.low %vm909, %vm909
      %v918 = vsel %vm910, 65537, 0
      %v919 = vsel %vm911, 65537, 0
      %v920 = vsel %vm912, 65537, 0
      %v921 = vsel %vm913, 65537, 0
      %v922 = vsel %vm914, 65537, 0
      %v923 = vsel %vm915, 65537, 0
      %v924 = vsel %vm916, 65537, 0
      %v925 = vsel %vm917, 65537, 0
      %v926 = vunpack.c.l.b16 %v918
      %v927 = vunpack.c.l.b16 %v919
      %v928 = vunpack.c.l.b16 %v920
      %v929 = vunpack.c.l.b16 %v921
      %v930 = vunpack.c.l.b16 %v922
      %v931 = vunpack.c.l.b16 %v923
      %v932 = vunpack.c.l.b16 %v924
      %v933 = vunpack.c.l.b16 %v925
      %v934 = vpack.c.b16 %v927, %v926
      %v935 = vpack.c.b16 %v929, %v928
      %v936 = vpack.c.b16 %v931, %v930
      %v937 = vpack.c.b16 %v933, %v932
      %vm938 = vsmask.f32 4352
      %v940 = vshrl.u32 %v934, 16
      %v942 = vrot.slane %v940, 3
      %v943 = vshll.u32 %v934, 16
      %v945 = vrot.slane %v943, 4
      %v946 = vor.u32 %v942, %v945
      %v948 = vshrl.u32 %v935, 16
      %v950 = vrot.slane %v948, 3
      %v951 = vshll.u32 %v935, 16
      %v953 = vrot.slane %v951, 4
      %v954 = vor.u32 %v950, %v953
      %v955 = vsel %vm938, %v946, %v954
      %v957 = vshrl.u32 %v936, 16
      %v959 = vrot.slane %v957, 3
      %v960 = vshll.u32 %v936, 16
      %v962 = vrot.slane %v960, 4
      %v963 = vor.u32 %v959, %v962
      %v964 = vsel %vm938, %v954, %v963
      %v966 = vshrl.u32 %v937, 16
      %v968 = vrot.slane %v966, 3
      %v969 = vshll.u32 %v937, 16
      %v971 = vrot.slane %v969, 4
      %v972 = vor.u32 %v968, %v971
      %v973 = vsel %vm938, %v963, %v972
      %v974 = vunpack.c.l.b16 %v955
      %v975 = vunpack.c.h.b16 %v955
      %v976 = vunpack.c.l.b16 0
      %v977 = vunpack.c.h.b16 0
      %vm978 = vcmp.ne.s32.totalorder %v974, %v976
      %vm979 = vcmp.ne.s32.totalorder %v975, %v977
      %vm980 = vmpackc.low %vm979, %vm978
      %v981 = vunpack.c.l.b16 %v964
      %v982 = vunpack.c.h.b16 %v964
      %v983 = vunpack.c.l.b16 0
      %v984 = vunpack.c.h.b16 0
      %vm985 = vcmp.ne.s32.totalorder %v981, %v983
      %vm986 = vcmp.ne.s32.totalorder %v982, %v984
      %vm987 = vmpackc.low %vm986, %vm985
      %v988 = vunpack.c.l.b16 %v973
      %v989 = vunpack.c.h.b16 %v973
      %v990 = vunpack.c.l.b16 0
      %v991 = vunpack.c.h.b16 0
      %vm992 = vcmp.ne.s32.totalorder %v988, %v990
      %vm993 = vcmp.ne.s32.totalorder %v989, %v991
      %vm994 = vmpackc.low %vm993, %vm992
      %v995 = vunpack.c.l.b16 %v972
      %v996 = vunpack.c.h.b16 %v972
      %v997 = vunpack.c.l.b16 0
      %v998 = vunpack.c.h.b16 0
      %vm999 = vcmp.ne.s32.totalorder %v995, %v997
      %vm1000 = vcmp.ne.s32.totalorder %v996, %v998
      %vm1001 = vmpackc.low %vm1000, %vm999
      %v1002 = vsel %vm980, %v653, 0
      %v1003 = vsel %vm987, %v654, 0
      %v1004 = vsel %vm994, %v655, 0
      %v1005 = vsel %vm1001, %v656, 0
      %vm1006 = vsmask.f32 7424
      %v1007 = vrot.slane %v831, 1
      %v1008 = vor.u32 %v828, %v1007
      %v1009 = vrot.slane %v839, 1
      %v1010 = vsel %vm1006, %v1008, %v1009
      %v1011 = vor.u32 %v836, %v1009
      %v1012 = vrot.slane %v848, 1
      %v1013 = vsel %vm1006, %v1011, %v1012
      %v1014 = vor.u32 %v845, %v1012
      %v1015 = vrot.slane %v857, 1
      %v1016 = vsel %vm1006, %v1014, %v1015
      %v1017 = vor.u32 %v854, %v1015
      %v1018 = vunpack.c.l.b16 %v1010
      %v1019 = vunpack.c.h.b16 %v1010
      %v1020 = vunpack.c.l.b16 0
      %v1021 = vunpack.c.h.b16 0
      %vm1022 = vcmp.ne.s32.totalorder %v1018, %v1020
      %vm1023 = vcmp.ne.s32.totalorder %v1019, %v1021
      %vm1024 = vmpackc.low %vm1023, %vm1022
      %v1025 = vunpack.c.l.b16 %v1013
      %v1026 = vunpack.c.h.b16 %v1013
      %v1027 = vunpack.c.l.b16 0
      %v1028 = vunpack.c.h.b16 0
      %vm1029 = vcmp.ne.s32.totalorder %v1025, %v1027
      %vm1030 = vcmp.ne.s32.totalorder %v1026, %v1028
      %vm1031 = vmpackc.low %vm1030, %vm1029
      %v1032 = vunpack.c.l.b16 %v1016
      %v1033 = vunpack.c.h.b16 %v1016
      %v1034 = vunpack.c.l.b16 0
      %v1035 = vunpack.c.h.b16 0
      %vm1036 = vcmp.ne.s32.totalorder %v1032, %v1034
      %vm1037 = vcmp.ne.s32.totalorder %v1033, %v1035
      %vm1038 = vmpackc.low %vm1037, %vm1036
      %v1039 = vunpack.c.l.b16 %v1017
      %v1040 = vunpack.c.h.b16 %v1017
      %v1041 = vunpack.c.l.b16 0
      %v1042 = vunpack.c.h.b16 0
      %vm1043 = vcmp.ne.s32.totalorder %v1039, %v1041
      %vm1044 = vcmp.ne.s32.totalorder %v1040, %v1042
      %vm1045 = vmpackc.low %vm1044, %vm1043
      %v1046 = vsel %vm1024, %v653, 0
      %v1047 = vsel %vm1031, %v654, 0
      %v1048 = vsel %vm1038, %v655, 0
      %v1049 = vsel %vm1045, %v656, 0
      %vm1050 = vsmask.f32 256
      %v1051 = vrot.slane %v940, 7
      %v1052 = vor.u32 %v1051, %v943
      %v1053 = vrot.slane %v948, 7
      %v1054 = vor.u32 %v1053, %v951
      %v1055 = vsel %vm1050, %v1051, %v1054
      %v1056 = vrot.slane %v957, 7
      %v1057 = vor.u32 %v1056, %v960
      %v1058 = vsel %vm1050, %v1053, %v1057
      %v1059 = vrot.slane %v966, 7
      %v1060 = vor.u32 %v1059, %v969
      %v1061 = vsel %vm1050, %v1056, %v1060
      %v1062 = vunpack.c.l.b16 %v1052
      %v1063 = vunpack.c.h.b16 %v1052
      %v1064 = vunpack.c.l.b16 0
      %v1065 = vunpack.c.h.b16 0
      %vm1066 = vcmp.ne.s32.totalorder %v1062, %v1064
      %vm1067 = vcmp.ne.s32.totalorder %v1063, %v1065
      %vm1068 = vmpackc.low %vm1067, %vm1066
      %v1069 = vunpack.c.l.b16 %v1055
      %v1070 = vunpack.c.h.b16 %v1055
      %v1071 = vunpack.c.l.b16 0
      %v1072 = vunpack.c.h.b16 0
      %vm1073 = vcmp.ne.s32.totalorder %v1069, %v1071
      %vm1074 = vcmp.ne.s32.totalorder %v1070, %v1072
      %vm1075 = vmpackc.low %vm1074, %vm1073
      %v1076 = vunpack.c.l.b16 %v1058
      %v1077 = vunpack.c.h.b16 %v1058
      %v1078 = vunpack.c.l.b16 0
      %v1079 = vunpack.c.h.b16 0
      %vm1080 = vcmp.ne.s32.totalorder %v1076, %v1078
      %vm1081 = vcmp.ne.s32.totalorder %v1077, %v1079
      %vm1082 = vmpackc.low %vm1081, %vm1080
      %v1083 = vunpack.c.l.b16 %v1061
      %v1084 = vunpack.c.h.b16 %v1061
      %v1085 = vunpack.c.l.b16 0
      %v1086 = vunpack.c.h.b16 0
      %vm1087 = vcmp.ne.s32.totalorder %v1083, %v1085
      %vm1088 = vcmp.ne.s32.totalorder %v1084, %v1086
      %vm1089 = vmpackc.low %vm1088, %vm1087
      %v1090 = vsel %vm1068, %v653, 0
      %v1091 = vsel %vm1075, %v654, 0
      %v1092 = vsel %vm1082, %v655, 0
      %v1093 = vsel %vm1089, %v656, 0
      %v1094 = vunpack.c.l.b16 %v834
      %v1095 = vunpack.c.h.b16 %v834
      %v1096 = vunpack.c.l.b16 0
      %v1097 = vunpack.c.h.b16 0
      %vm1098 = vcmp.ne.s32.totalorder %v1094, %v1096
      %vm1099 = vcmp.ne.s32.totalorder %v1095, %v1097
      %vm1100 = vmpackc.low %vm1099, %vm1098
      %v1101 = vsel %vm1100, %v653, 0
      %v1102 = vsel %vm868, %v654, 0
      %v1103 = vsel %vm875, %v655, 0
      %v1104 = vsel %vm882, %v656, 0
      %v1105 = vunpack.c.l.b16 %v946
      %v1106 = vunpack.c.h.b16 %v946
      %v1107 = vunpack.c.l.b16 0
      %v1108 = vunpack.c.h.b16 0
      %vm1109 = vcmp.ne.s32.totalorder %v1105, %v1107
      %vm1110 = vcmp.ne.s32.totalorder %v1106, %v1108
      %vm1111 = vmpackc.low %vm1110, %vm1109
      %v1112 = vsel %vm1111, %v653, 0
      %v1113 = vsel %vm980, %v654, 0
      %v1114 = vsel %vm987, %v655, 0
      %v1115 = vsel %vm994, %v656, 0
      %v1117 = vshrl.u32 0, 16
      %v1119 = vshll.u32 0, 16
      %v1121 = vrot.slane %v1119, 1
      %v1122 = vor.u32 %v1117, %v1121
      %v1124 = vshll.u32 %v653, 16
      %v1126 = vrot.slane %v1124, 1
      %v1127 = vsel %vm1006, %v1122, %v1126
      %v1128 = vshrl.u32 %v653, 16
      %v1130 = vor.u32 %v1128, %v1126
      %v1132 = vshll.u32 %v654, 16
      %v1134 = vrot.slane %v1132, 1
      %v1135 = vsel %vm1006, %v1130, %v1134
      %v1136 = vshrl.u32 %v654, 16
      %v1138 = vor.u32 %v1136, %v1134
      %v1140 = vshll.u32 %v655, 16
      %v1142 = vrot.slane %v1140, 1
      %v1143 = vsel %vm1006, %v1138, %v1142
      %v1144 = vshrl.u32 %v655, 16
      %v1146 = vor.u32 %v1144, %v1142
      %v1148 = vshll.u32 %v656, 16
      %v1150 = vrot.slane %v1148, 1
      %v1151 = vsel %vm1006, %v1146, %v1150
      %v1152 = vshrl.u32 %v656, 16
      %v1154 = vor.u32 %v1152, %v1150
      %1155 = vrot.lane.b32.xlu0 %v1127, 64
      %v1156 = vpop.permute.xlu0 %1155
      %1157 = vrot.lane.b32.xlu0 %v1135, 64
      %v1158 = vpop.permute.xlu0 %1157
      %1159 = vrot.lane.b32.xlu0 %v1143, 64
      %v1160 = vpop.permute.xlu0 %1159
      %1161 = vrot.lane.b32.xlu0 %v1151, 64
      %v1162 = vpop.permute.xlu0 %1161
      %1163 = vrot.lane.b32.xlu0 %v1154, 64
      %v1164 = vpop.permute.xlu0 %1163
      %vm1170 = vcmask 1046528
      %v1171 = vrot.slane 0, 1
      %v1172 = vrot.slane %v1002, 1
      %v1173 = vsel %vm1170, %v1171, %v1172
      %v1174 = vrot.slane %v1003, 1
      %v1175 = vsel %vm1170, %v1172, %v1174
      %v1176 = vrot.slane %v1004, 1
      %v1177 = vsel %vm1170, %v1174, %v1176
      %v1178 = vrot.slane %v1005, 1
      %v1179 = vsel %vm1170, %v1176, %v1178
      %vm1184 = vcmask 1043456
      %v1185 = vrot.slane 0, 4
      %v1186 = vrot.slane %v1046, 4
      %v1187 = vsel %vm1184, %v1185, %v1186
      %v1188 = vrot.slane %v1047, 4
      %v1189 = vsel %vm1184, %v1186, %v1188
      %v1190 = vrot.slane %v1048, 4
      %v1191 = vsel %vm1184, %v1188, %v1190
      %v1192 = vrot.slane %v1049, 4
      %v1193 = vsel %vm1184, %v1190, %v1192
      %1194 = vrot.lane.b32.xlu0 %v1187, 64
      %v1195 = vpop.permute.xlu0 %1194
      %1196 = vrot.lane.b32.xlu0 %v1189, 64
      %v1197 = vpop.permute.xlu0 %1196
      %1198 = vrot.lane.b32.xlu0 %v1191, 64
      %v1199 = vpop.permute.xlu0 %1198
      %1200 = vrot.lane.b32.xlu0 %v1193, 64
      %v1201 = vpop.permute.xlu0 %1200
      %1202 = vrot.lane.b32.xlu0 %v1192, 64
      %v1203 = vpop.permute.xlu0 %1202
      %v1204 = vrot.slane %v1128, 4
      %v1205 = vrot.slane %v1124, 5
      %v1206 = vor.u32 %v1204, %v1205
      %v1207 = vrot.slane %v1136, 4
      %v1208 = vrot.slane %v1132, 5
      %v1209 = vor.u32 %v1207, %v1208
      %v1210 = vsel %vm826, %v1206, %v1209
      %v1211 = vrot.slane %v1144, 4
      %v1212 = vrot.slane %v1140, 5
      %v1213 = vor.u32 %v1211, %v1212
      %v1214 = vsel %vm826, %v1209, %v1213
      %v1215 = vrot.slane %v1152, 4
      %v1216 = vrot.slane %v1148, 5
      %v1217 = vor.u32 %v1215, %v1216
      %v1218 = vsel %vm826, %v1213, %v1217
      %vm1223 = vcmask 1042432
      %v1224 = vrot.slane %v1090, 5
      %v1225 = vrot.slane %v1091, 5
      %v1226 = vsel %vm1223, %v1224, %v1225
      %v1227 = vrot.slane %v1092, 5
      %v1228 = vsel %vm1223, %v1225, %v1227
      %v1229 = vrot.slane %v1093, 5
      %v1230 = vsel %vm1223, %v1227, %v1229
      %v1231 = vrot.slane 0, 5
      %v1232 = vsel %vm1223, %v1229, %v1231
      %1233 = vrot.lane.b32.xlu0 %v1224, 64
      %v1234 = vpop.permute.xlu0 %1233
      %1235 = vrot.lane.b32.xlu0 %v1226, 64
      %v1236 = vpop.permute.xlu0 %1235
      %1237 = vrot.lane.b32.xlu0 %v1228, 64
      %v1238 = vpop.permute.xlu0 %1237
      %1239 = vrot.lane.b32.xlu0 %v1230, 64
      %v1240 = vpop.permute.xlu0 %1239
      %1241 = vrot.lane.b32.xlu0 %v1232, 64
      %v1242 = vpop.permute.xlu0 %1241
      %v1243 = vsel %vm1006, %v1154, %v1121
      %1244 = vrot.lane.b32.xlu0 %v1243, 64
      %v1245 = vpop.permute.xlu0 %1244
      %1246 = vrot.lane.b32.xlu0 %v1122, 64
      %v1247 = vpop.permute.xlu0 %1246
      %v1252 = vrot.slane %v1112, 1
      %v1253 = vrot.slane %v1113, 1
      %v1254 = vsel %vm1170, %v1252, %v1253
      %v1255 = vrot.slane %v1114, 1
      %v1256 = vsel %vm1170, %v1253, %v1255
      %v1257 = vrot.slane %v1115, 1
      %v1258 = vsel %vm1170, %v1255, %v1257
      %v1259 = vsel %vm1170, %v1257, %v1171
      %vm1260 = vcmask 523264
      %v1262 = vsel %vm1260, 0, %v1156
      %v1265 = vsel %vm1260, %v890, %v1158
      %v1268 = vsel %vm1260, %v891, %v1160
      %v1271 = vsel %vm1260, %v892, %v1162
      %v1274 = vsel %vm1260, %v893, %v1164
      %v1277 = vsel %vm1260, %v1173, %v1195
      %v1280 = vsel %vm1260, %v1175, %v1197
      %v1283 = vsel %vm1260, %v1177, %v1199
      %v1286 = vsel %vm1260, %v1179, %v1201
      %v1289 = vsel %vm1260, %v1178, %v1203
      %v1292 = vsel %vm1260, %v1206, %v1234
      %v1295 = vsel %vm1260, %v1210, %v1236
      %v1298 = vsel %vm1260, %v1214, %v1238
      %v1301 = vsel %vm1260, %v1218, %v1240
      %v1304 = vsel %vm1260, %v1217, %v1242
      %v1306 = vsel %vm1260, %v1101, %v1158
      %v1308 = vsel %vm1260, %v1102, %v1160
      %v1310 = vsel %vm1260, %v1103, %v1162
      %v1313 = vsel %vm1260, %v1104, %v1245
      %v1315 = vsel %vm1260, 0, %v1247
      %v1316 = vld [vmem:[%s4] sm:$0xf]
      %v1317 = vld [vmem:[%s4 + $0x4] sm:$0xf]
      %v1318 = vld [vmem:[%s4 + $0x8] sm:$0xf]
      %v1319 = vld [vmem:[%s4 + $0xc] sm:$0xf]
      %v1320 = vld [vmem:[%s4 + $0x10] sm:$0xf]
      %v1321 = vld [vmem:[%s4 + $0x14] sm:$0xf]
      %v1322 = vld [vmem:[%s4 + $0x18] sm:$0xf]
      %v1323 = vld [vmem:[%s4 + $0x1c] sm:$0xf]
      %v1324 = vld [vmem:[%s4 + $0x20] sm:$0xf]
      %v1325 = vld [vmem:[%s4 + $0x24] sm:$0xf]
      %v1326 = vld [vmem:[%s4 + $0x28] sm:$0xf]
      %v1327 = vld [vmem:[%s4 + $0x2c] sm:$0xf]
      %v1328 = vld [vmem:[%s4 + $0x30] sm:$0xf]
      %v1329 = vld [vmem:[%s4 + $0x34] sm:$0xf]
      %v1330 = vld [vmem:[%s4 + $0x38] sm:$0xf]
      %v1331 = vld [vmem:[%s4 + $0x3c] sm:$0xf]
      %v1332 = vld [vmem:[%s4 + $0x40] sm:$0xf]
      %v1333 = vld [vmem:[%s4 + $0x44] sm:$0xf]
      %v1334 = vld [vmem:[%s4 + $0x48] sm:$0xf]
      %v1335 = vld [vmem:[%s4 + $0x4c] sm:$0xf]
      %v1336 = vld [vmem:[%s4 + $0x50] sm:$0xf]
      %v1337 = vld [vmem:[%s4 + $0x54] sm:$0xf]
      %v1338 = vld [vmem:[%s4 + $0x58] sm:$0xf]
      %v1339 = vld [vmem:[%s4 + $0x5c] sm:$0xf]
      %v1340 = vld [vmem:[%s4 + $0x60] sm:$0xf]
      %v1341 = vld [vmem:[%s4 + $0x64] sm:$0xf]
      %v1342 = vld [vmem:[%s4 + $0x68] sm:$0xf]
      %v1343 = vld [vmem:[%s4 + $0x6c] sm:$0xf]
      %v1344 = vld [vmem:[%s4 + $0x70] sm:$0xf]
      %v1345 = vld [vmem:[%s4 + $0x74] sm:$0xf]
      %v1346 = vld [vmem:[%s4 + $0x78] sm:$0xf]
      %v1347 = vld [vmem:[%s4 + $0x7c] sm:$0xf]
      %v1348 = vld [vmem:[%s4 + $0x80] sm:$0xf]
      %v1349 = vld [vmem:[%s4 + $0x84] sm:$0xf]
      %v1350 = vld [vmem:[%s4 + $0x88] sm:$0xf]
      %v1351 = vld [vmem:[%s4 + $0x8c] sm:$0xf]
      %v1352 = vld [vmem:[%s4 + $0x90] sm:$0xf]
      %v1353 = vld [vmem:[%s4 + $0x94] sm:$0xf]
      %v1354 = vld [vmem:[%s4 + $0x98] sm:$0xf]
      %v1355 = vld [vmem:[%s4 + $0x9c] sm:$0xf]
      %v1356 = vld [vmem:[%s4 + $0xa0] sm:$0xf]
      %v1357 = vld [vmem:[%s4 + $0xa4] sm:$0xf]
      %v1358 = vld [vmem:[%s4 + $0xa8] sm:$0xf]
      %v1359 = vld [vmem:[%s4 + $0xac] sm:$0xf]
      %v1360 = vld [vmem:[%s4 + $0xb0] sm:$0xf]
      %v1361 = vld [vmem:[%s4 + $0xb4] sm:$0xf]
      %v1362 = vld [vmem:[%s4 + $0xb8] sm:$0xf]
      %v1363 = vld [vmem:[%s4 + $0xbc] sm:$0xf]
      %v1364 = vld [vmem:[%s4 + $0xc0] sm:$0xf]
      %v1365 = vld [vmem:[%s4 + $0xc4] sm:$0xf]
      %v1366 = vld [vmem:[%s4 + $0xc8] sm:$0xf]
      %v1367 = vld [vmem:[%s4 + $0xcc] sm:$0xf]
      %v1368 = vld [vmem:[%s4 + $0xd0] sm:$0xf]
      %v1369 = vld [vmem:[%s4 + $0xd4] sm:$0xf]
      %v1370 = vld [vmem:[%s4 + $0xd8] sm:$0xf]
      %v1371 = vld [vmem:[%s4 + $0xdc] sm:$0xf]
      %v1372 = vld [vmem:[%s4 + $0xe0] sm:$0xf]
      %v1373 = vld [vmem:[%s4 + $0xe4] sm:$0xf]
      %v1374 = vld [vmem:[%s4 + $0xe8] sm:$0xf]
      %v1375 = vld [vmem:[%s4 + $0xec] sm:$0xf]
      %v1376 = vld [vmem:[%s4 + $0xf0] sm:$0xf]
      %v1377 = vld [vmem:[%s4 + $0xf4] sm:$0xf]
      %v1378 = vld [vmem:[%s4 + $0xf8] sm:$0xf]
      %v1379 = vld [vmem:[%s4 + $0xfc] sm:$0xf]
      %v1380 = vld [vmem:[%s4 + $0x100] sm:$0xf]
      %v1381 = vld [vmem:[%s4 + $0x104] sm:$0xf]
      %v1382 = vld [vmem:[%s4 + $0x108] sm:$0xf]
      %v1383 = vld [vmem:[%s4 + $0x10c] sm:$0xf]
      %v1384 = vld [vmem:[%s4 + $0x110] sm:$0xf]
      %v1385 = vld [vmem:[%s4 + $0x114] sm:$0xf]
      %v1386 = vld [vmem:[%s4 + $0x118] sm:$0xf]
      %v1387 = vld [vmem:[%s4 + $0x11c] sm:$0xf]
      %v1388 = vshrl.u32 %v1262, 16
      %v1390 = vrot.slane %v1388, 3
      %v1391 = vshll.u32 %v1262, 16
      %v1393 = vrot.slane %v1391, 4
      %v1394 = vor.u32 %v1390, %v1393
      %v1395 = vshrl.u32 %v1265, 16
      %v1397 = vrot.slane %v1395, 3
      %v1398 = vshll.u32 %v1265, 16
      %v1400 = vrot.slane %v1398, 4
      %v1401 = vor.u32 %v1397, %v1400
      %v1402 = vsel %vm938, %v1394, %v1401
      %v1403 = vshrl.u32 %v1277, 16
      %v1405 = vrot.slane %v1403, 3
      %v1406 = vshll.u32 %v1277, 16
      %v1408 = vrot.slane %v1406, 4
      %v1409 = vor.u32 %v1405, %v1408
      %v1410 = vshrl.u32 %v1280, 16
      %v1412 = vrot.slane %v1410, 3
      %v1413 = vshll.u32 %v1280, 16
      %v1415 = vrot.slane %v1413, 4
      %v1416 = vor.u32 %v1412, %v1415
      %v1417 = vsel %vm938, %v1409, %v1416
      %v1418 = vshrl.u32 %v1292, 16
      %v1420 = vrot.slane %v1418, 3
      %v1421 = vshll.u32 %v1292, 16
      %v1423 = vrot.slane %v1421, 4
      %v1424 = vor.u32 %v1420, %v1423
      %v1425 = vshrl.u32 %v1295, 16
      %v1427 = vrot.slane %v1425, 3
      %v1428 = vshll.u32 %v1295, 16
      %v1430 = vrot.slane %v1428, 4
      %v1431 = vor.u32 %v1427, %v1430
      %v1432 = vsel %vm938, %v1424, %v1431
      %v1433 = vshrl.u32 %v1306, 16
      %v1435 = vrot.slane %v1433, 3
      %v1436 = vshll.u32 %v1306, 16
      %v1438 = vrot.slane %v1436, 4
      %v1439 = vor.u32 %v1435, %v1438
      %v1440 = vshrl.u32 %v1308, 16
      %v1442 = vrot.slane %v1440, 3
      %v1443 = vshll.u32 %v1308, 16
      %v1445 = vrot.slane %v1443, 4
      %v1446 = vor.u32 %v1442, %v1445
      %v1447 = vsel %vm938, %v1439, %v1446
      %v1449 = vshrl.u32 %v1254, 16
      %v1451 = vrot.slane %v1449, 3
      %v1452 = vshll.u32 %v1254, 16
      %v1454 = vrot.slane %v1452, 4
      %v1455 = vor.u32 %v1451, %v1454
      %v1457 = vshrl.u32 %v1256, 16
      %v1459 = vrot.slane %v1457, 3
      %v1460 = vshll.u32 %v1256, 16
      %v1462 = vrot.slane %v1460, 4
      %v1463 = vor.u32 %v1459, %v1462
      %v1464 = vsel %vm938, %v1455, %v1463
      %v1465 = vshrl.u32 %v1268, 16
      %v1467 = vrot.slane %v1465, 3
      %v1468 = vshll.u32 %v1268, 16
      %v1470 = vrot.slane %v1468, 4
      %v1471 = vor.u32 %v1467, %v1470
      %v1472 = vsel %vm938, %v1401, %v1471
      %v1473 = vshrl.u32 %v1283, 16
      %v1475 = vrot.slane %v1473, 3
      %v1476 = vshll.u32 %v1283, 16
      %v1478 = vrot.slane %v1476, 4
      %v1479 = vor.u32 %v1475, %v1478
      %v1480 = vsel %vm938, %v1416, %v1479
      %v1481 = vshrl.u32 %v1298, 16
      %v1483 = vrot.slane %v1481, 3
      %v1484 = vshll.u32 %v1298, 16
      %v1486 = vrot.slane %v1484, 4
      %v1487 = vor.u32 %v1483, %v1486
      %v1488 = vsel %vm938, %v1431, %v1487
      %v1489 = vshrl.u32 %v1310, 16
      %v1491 = vrot.slane %v1489, 3
      %v1492 = vshll.u32 %v1310, 16
      %v1494 = vrot.slane %v1492, 4
      %v1495 = vor.u32 %v1491, %v1494
      %v1496 = vsel %vm938, %v1446, %v1495
      %v1498 = vshrl.u32 %v1258, 16
      %v1500 = vrot.slane %v1498, 3
      %v1501 = vshll.u32 %v1258, 16
      %v1503 = vrot.slane %v1501, 4
      %v1504 = vor.u32 %v1500, %v1503
      %v1505 = vsel %vm938, %v1463, %v1504
      %v1506 = vshrl.u32 %v1271, 16
      %v1508 = vrot.slane %v1506, 3
      %v1509 = vshll.u32 %v1271, 16
      %v1511 = vrot.slane %v1509, 4
      %v1512 = vor.u32 %v1508, %v1511
      %v1513 = vsel %vm938, %v1471, %v1512
      %v1514 = vshrl.u32 %v1286, 16
      %v1516 = vrot.slane %v1514, 3
      %v1517 = vshll.u32 %v1286, 16
      %v1519 = vrot.slane %v1517, 4
      %v1520 = vor.u32 %v1516, %v1519
      %v1521 = vsel %vm938, %v1479, %v1520
      %v1522 = vshrl.u32 %v1301, 16
      %v1524 = vrot.slane %v1522, 3
      %v1525 = vshll.u32 %v1301, 16
      %v1527 = vrot.slane %v1525, 4
      %v1528 = vor.u32 %v1524, %v1527
      %v1529 = vsel %vm938, %v1487, %v1528
      %v1530 = vshrl.u32 %v1313, 16
      %v1532 = vrot.slane %v1530, 3
      %v1533 = vshll.u32 %v1313, 16
      %v1535 = vrot.slane %v1533, 4
      %v1536 = vor.u32 %v1532, %v1535
      %v1537 = vsel %vm938, %v1495, %v1536
      %v1539 = vshrl.u32 %v1259, 16
      %v1541 = vrot.slane %v1539, 3
      %v1542 = vshll.u32 %v1259, 16
      %v1544 = vrot.slane %v1542, 4
      %v1545 = vor.u32 %v1541, %v1544
      %v1546 = vsel %vm938, %v1504, %v1545
      %v1547 = vshrl.u32 %v1274, 16
      %v1549 = vrot.slane %v1547, 3
      %v1550 = vshll.u32 %v1274, 16
      %v1552 = vrot.slane %v1550, 4
      %v1553 = vor.u32 %v1549, %v1552
      %v1554 = vsel %vm938, %v1512, %v1553
      %v1555 = vshrl.u32 %v1289, 16
      %v1557 = vrot.slane %v1555, 3
      %v1558 = vshll.u32 %v1289, 16
      %v1560 = vrot.slane %v1558, 4
      %v1561 = vor.u32 %v1557, %v1560
      %v1562 = vsel %vm938, %v1520, %v1561
      %v1563 = vshrl.u32 %v1304, 16
      %v1565 = vrot.slane %v1563, 3
      %v1566 = vshll.u32 %v1304, 16
      %v1568 = vrot.slane %v1566, 4
      %v1569 = vor.u32 %v1565, %v1568
      %v1570 = vsel %vm938, %v1528, %v1569
      %v1571 = vshrl.u32 %v1315, 16
      %v1573 = vrot.slane %v1571, 3
      %v1574 = vshll.u32 %v1315, 16
      %v1576 = vrot.slane %v1574, 4
      %v1577 = vor.u32 %v1573, %v1576
      %v1578 = vsel %vm938, %v1536, %v1577
      %v1580 = vshrl.u32 %v1171, 16
      %v1582 = vrot.slane %v1580, 3
      %v1583 = vshll.u32 %v1171, 16
      %v1585 = vrot.slane %v1583, 4
      %v1586 = vor.u32 %v1582, %v1585
      %v1587 = vsel %vm938, %v1545, %v1586
      %v1676 = vunpack.c.l.b16 %v1316
      %v1677 = vunpack.c.l.b16 %v1317
      %v1678 = vunpack.c.l.b16 %v1318
      %v1679 = vunpack.c.l.b16 %v1319
      %v1680 = vunpack.c.l.b16 %v1320
      %v1681 = vunpack.c.l.b16 %v1321
      %v1682 = vunpack.c.l.b16 %v1322
      %v1683 = vunpack.c.l.b16 %v1323
      %v1684 = vunpack.c.l.b16 %v1324
      %v1685 = vunpack.c.l.b16 %v1325
      %v1686 = vunpack.c.l.b16 %v1326
      %v1687 = vunpack.c.l.b16 %v1327
      %v1688 = vunpack.c.l.b16 %v1328
      %v1689 = vunpack.c.l.b16 %v1329
      %v1690 = vunpack.c.l.b16 %v1330
      %v1691 = vunpack.c.l.b16 %v1331
      %v1692 = vunpack.c.l.b16 %v1332
      %v1693 = vunpack.c.l.b16 %v1333
      %v1694 = vunpack.c.l.b16 %v1334
      %v1695 = vunpack.c.l.b16 %v1335
      %v1696 = vunpack.c.l.b16 %v1336
      %v1697 = vunpack.c.l.b16 %v1337
      %v1698 = vunpack.c.l.b16 %v1338
      %v1699 = vunpack.c.l.b16 %v1339
      %v1700 = vunpack.c.l.b16 %v1340
      %v1701 = vunpack.c.l.b16 %v1341
      %v1702 = vunpack.c.l.b16 %v1342
      %v1703 = vunpack.c.l.b16 %v1343
      %v1704 = vunpack.c.l.b16 %v1344
      %v1705 = vunpack.c.l.b16 %v1345
      %v1706 = vunpack.c.l.b16 %v1346
      %v1707 = vunpack.c.l.b16 %v1347
      %v1708 = vunpack.c.l.b16 %v1348
      %v1709 = vunpack.c.l.b16 %v1349
      %v1710 = vunpack.c.l.b16 %v1350
      %v1711 = vunpack.c.l.b16 %v1351
      %v1712 = vunpack.c.l.b16 %v1352
      %v1713 = vunpack.c.l.b16 %v1353
      %v1714 = vunpack.c.l.b16 %v1354
      %v1715 = vunpack.c.l.b16 %v1355
      %v1716 = vunpack.c.l.b16 %v1356
      %v1717 = vunpack.c.l.b16 %v1357
      %v1718 = vunpack.c.l.b16 %v1358
      %v1719 = vunpack.c.l.b16 %v1359
      %v1720 = vunpack.c.l.b16 %v1360
      %v1721 = vunpack.c.l.b16 %v1361
      %v1722 = vunpack.c.l.b16 %v1362
      %v1723 = vunpack.c.l.b16 %v1363
      %v1724 = vunpack.c.l.b16 %v1364
      %v1725 = vunpack.c.l.b16 %v1365
      %v1726 = vunpack.c.l.b16 %v1366
      %v1727 = vunpack.c.l.b16 %v1367
      %v1728 = vunpack.c.l.b16 %v1368
      %v1729 = vunpack.c.l.b16 %v1369
      %v1730 = vunpack.c.l.b16 %v1370
      %v1731 = vunpack.c.l.b16 %v1371
      %v1732 = vunpack.c.l.b16 %v1372
      %v1733 = vunpack.c.l.b16 %v1373
      %v1734 = vunpack.c.l.b16 %v1374
      %v1735 = vunpack.c.l.b16 %v1375
      %v1736 = vunpack.c.l.b16 %v1376
      %v1737 = vunpack.c.l.b16 %v1377
      %v1738 = vunpack.c.l.b16 %v1378
      %v1739 = vunpack.c.l.b16 %v1379
      %v1740 = vunpack.c.l.b16 %v1380
      %v1741 = vunpack.c.l.b16 %v1381
      %v1742 = vunpack.c.l.b16 %v1382
      %v1743 = vunpack.c.l.b16 %v1383
      %v1744 = vunpack.c.l.b16 %v1384
      %v1745 = vunpack.c.l.b16 %v1385
      %v1746 = vunpack.c.l.b16 %v1386
      %v1747 = vunpack.c.l.b16 %v1387
      %v1748 = vpack.c.b16 %v1677, %v1676
      %v1749 = vpack.c.b16 %v1679, %v1678
      %v1750 = vpack.c.b16 %v1681, %v1680
      %v1751 = vpack.c.b16 %v1683, %v1682
      %v1752 = vpack.c.b16 %v1685, %v1684
      %v1753 = vpack.c.b16 %v1687, %v1686
      %v1754 = vpack.c.b16 %v1689, %v1688
      %v1755 = vpack.c.b16 %v1691, %v1690
      %v1756 = vpack.c.b16 %v1693, %v1692
      %v1757 = vpack.c.b16 %v1695, %v1694
      %v1758 = vpack.c.b16 %v1697, %v1696
      %v1759 = vpack.c.b16 %v1699, %v1698
      %v1760 = vpack.c.b16 %v1701, %v1700
      %v1761 = vpack.c.b16 %v1703, %v1702
      %v1762 = vpack.c.b16 %v1705, %v1704
      %v1763 = vpack.c.b16 %v1707, %v1706
      %v1764 = vpack.c.b16 %v1709, %v1708
      %v1765 = vpack.c.b16 %v1711, %v1710
      %v1766 = vpack.c.b16 %v1713, %v1712
      %v1767 = vpack.c.b16 %v1715, %v1714
      %v1768 = vpack.c.b16 %v1717, %v1716
      %v1769 = vpack.c.b16 %v1719, %v1718
      %v1770 = vpack.c.b16 %v1721, %v1720
      %v1771 = vpack.c.b16 %v1723, %v1722
      %v1772 = vpack.c.b16 %v1725, %v1724
      %v1773 = vpack.c.b16 %v1727, %v1726
      %v1774 = vpack.c.b16 %v1729, %v1728
      %v1775 = vpack.c.b16 %v1731, %v1730
      %v1776 = vpack.c.b16 %v1733, %v1732
      %v1777 = vpack.c.b16 %v1735, %v1734
      %v1778 = vpack.c.b16 %v1737, %v1736
      %v1779 = vpack.c.b16 %v1739, %v1738
      %v1780 = vpack.c.b16 %v1741, %v1740
      %v1781 = vpack.c.b16 %v1743, %v1742
      %v1782 = vpack.c.b16 %v1745, %v1744
      %v1783 = vpack.c.b16 %v1747, %v1746
      %v1821 = vsel %vm1260, %v1464, 0
      %v1824 = vsel %vm1260, %v1505, 0
      %v1827 = vsel %vm1260, %v1546, 0
      %v1830 = vsel %vm1260, %v1587, 0
      %1832 = vmatpush.bf16.msra.mxu0 %v1755
      %1833 = vmatpush.bf16.msra.mxu0 %v1754
      %1834 = vmatpush.bf16.msra.mxu0 %v1753
      %1835 = vmatpush.bf16.msra.mxu0 %v1752
      %1836 = vmatpush.bf16.msra.mxu0 %v1751
      %1837 = vmatpush.bf16.msra.mxu0 %v1750
      %1838 = vmatpush.bf16.msra.mxu0 %v1749
      %1839 = vmatpush.bf16.msra.mxu0 %v1748
      %1840 = vmatmul.bf16.gmra.mxu0 %v1402
      %v1841 = vpop.f32.mrf.mxu0
      %v1842 = vadd.f32 0.0, %v1841
      %v1843 = vpop.f32.mrf.mxu0
      %v1844 = vadd.f32 0.0, %v1843
      %1845 = vmatmul.bf16.gmra.mxu0 %v1472
      %v1846 = vpop.f32.mrf.mxu0
      %v1847 = vadd.f32 0.0, %v1846
      %v1848 = vpop.f32.mrf.mxu0
      %v1849 = vadd.f32 0.0, %v1848
      %1850 = vmatmul.bf16.gmra.mxu0 %v1513
      %v1851 = vpop.f32.mrf.mxu0
      %v1852 = vadd.f32 0.0, %v1851
      %v1853 = vpop.f32.mrf.mxu0
      %v1854 = vadd.f32 0.0, %v1853
      %1855 = vmatmul.bf16.gmra.mxu0 %v1554
      %v1856 = vpop.f32.mrf.mxu0
      %v1857 = vadd.f32 0.0, %v1856
      %v1858 = vpop.f32.mrf.mxu0
      %v1859 = vadd.f32 0.0, %v1858
      %1860 = vdwg.mxu0
      %1861 = vmatpush.bf16.msra.mxu0 %v1763
      %1862 = vmatpush.bf16.msra.mxu0 %v1762
      %1863 = vmatpush.bf16.msra.mxu0 %v1761
      %1864 = vmatpush.bf16.msra.mxu0 %v1760
      %1865 = vmatpush.bf16.msra.mxu0 %v1759
      %1866 = vmatpush.bf16.msra.mxu0 %v1758
      %1867 = vmatpush.bf16.msra.mxu0 %v1757
      %1868 = vmatpush.bf16.msra.mxu0 %v1756
      %1869 = vmatmul.bf16.gmra.mxu0 %v1417
      %v1870 = vpop.f32.mrf.mxu0
      %v1871 = vadd.f32 %v1842, %v1870
      %v1872 = vpop.f32.mrf.mxu0
      %v1873 = vadd.f32 %v1844, %v1872
      %1874 = vmatmul.bf16.gmra.mxu0 %v1480
      %v1875 = vpop.f32.mrf.mxu0
      %v1876 = vadd.f32 %v1847, %v1875
      %v1877 = vpop.f32.mrf.mxu0
      %v1878 = vadd.f32 %v1849, %v1877
      %1879 = vmatmul.bf16.gmra.mxu0 %v1521
      %v1880 = vpop.f32.mrf.mxu0
      %v1881 = vadd.f32 %v1852, %v1880
      %v1882 = vpop.f32.mrf.mxu0
      %v1883 = vadd.f32 %v1854, %v1882
      %1884 = vmatmul.bf16.gmra.mxu0 %v1562
      %v1885 = vpop.f32.mrf.mxu0
      %v1886 = vadd.f32 %v1857, %v1885
      %v1887 = vpop.f32.mrf.mxu0
      %v1888 = vadd.f32 %v1859, %v1887
      %1889 = vdwg.mxu0
      %1890 = vmatpush.bf16.msra.mxu0 %v1771
      %1891 = vmatpush.bf16.msra.mxu0 %v1770
      %1892 = vmatpush.bf16.msra.mxu0 %v1769
      %1893 = vmatpush.bf16.msra.mxu0 %v1768
      %1894 = vmatpush.bf16.msra.mxu0 %v1767
      %1895 = vmatpush.bf16.msra.mxu0 %v1766
      %1896 = vmatpush.bf16.msra.mxu0 %v1765
      %1897 = vmatpush.bf16.msra.mxu0 %v1764
      %1898 = vmatmul.bf16.gmra.mxu0 %v1432
      %v1899 = vpop.f32.mrf.mxu0
      %v1900 = vadd.f32 %v1871, %v1899
      %v1901 = vpop.f32.mrf.mxu0
      %v1902 = vadd.f32 %v1873, %v1901
      %1903 = vmatmul.bf16.gmra.mxu0 %v1488
      %v1904 = vpop.f32.mrf.mxu0
      %v1905 = vadd.f32 %v1876, %v1904
      %v1906 = vpop.f32.mrf.mxu0
      %v1907 = vadd.f32 %v1878, %v1906
      %1908 = vmatmul.bf16.gmra.mxu0 %v1529
      %v1909 = vpop.f32.mrf.mxu0
      %v1910 = vadd.f32 %v1881, %v1909
      %v1911 = vpop.f32.mrf.mxu0
      %v1912 = vadd.f32 %v1883, %v1911
      %1913 = vmatmul.bf16.gmra.mxu0 %v1570
      %v1914 = vpop.f32.mrf.mxu0
      %v1915 = vadd.f32 %v1886, %v1914
      %v1916 = vpop.f32.mrf.mxu0
      %v1917 = vadd.f32 %v1888, %v1916
      %1918 = vdwg.mxu0
      %1919 = vmatpush.bf16.msra.mxu0 %v1779
      %1920 = vmatpush.bf16.msra.mxu0 %v1778
      %1921 = vmatpush.bf16.msra.mxu0 %v1777
      %1922 = vmatpush.bf16.msra.mxu0 %v1776
      %1923 = vmatpush.bf16.msra.mxu0 %v1775
      %1924 = vmatpush.bf16.msra.mxu0 %v1774
      %1925 = vmatpush.bf16.msra.mxu0 %v1773
      %1926 = vmatpush.bf16.msra.mxu0 %v1772
      %1927 = vmatmul.bf16.gmra.mxu0 %v1447
      %v1928 = vpop.f32.mrf.mxu0
      %v1929 = vadd.f32 %v1900, %v1928
      %v1930 = vpop.f32.mrf.mxu0
      %v1931 = vadd.f32 %v1902, %v1930
      %1932 = vmatmul.bf16.gmra.mxu0 %v1496
      %v1933 = vpop.f32.mrf.mxu0
      %v1934 = vadd.f32 %v1905, %v1933
      %v1935 = vpop.f32.mrf.mxu0
      %v1936 = vadd.f32 %v1907, %v1935
      %1937 = vmatmul.bf16.gmra.mxu0 %v1537
      %v1938 = vpop.f32.mrf.mxu0
      %v1939 = vadd.f32 %v1910, %v1938
      %v1940 = vpop.f32.mrf.mxu0
      %v1941 = vadd.f32 %v1912, %v1940
      %1942 = vmatmul.bf16.gmra.mxu0 %v1578
      %v1943 = vpop.f32.mrf.mxu0
      %v1944 = vadd.f32 %v1915, %v1943
      %v1945 = vpop.f32.mrf.mxu0
      %v1946 = vadd.f32 %v1917, %v1945
      %1947 = vdwg.mxu0
      %1948 = vmatpush.bf16.msra.mxu0 0
      %1949 = vmatpush.bf16.msra.mxu0 0
      %1950 = vmatpush.bf16.msra.mxu0 0
      %1951 = vmatpush.bf16.msra.mxu0 0
      %1952 = vmatpush.bf16.msra.mxu0 %v1783
      %1953 = vmatpush.bf16.msra.mxu0 %v1782
      %1954 = vmatpush.bf16.msra.mxu0 %v1781
      %1955 = vmatpush.bf16.msra.mxu0 %v1780
      %1956 = vmatmul.bf16.gmra.mxu0 %v1821
      %v1957 = vpop.f32.mrf.mxu0
      %v1958 = vadd.f32 %v1929, %v1957
      %v1959 = vpop.f32.mrf.mxu0
      %v1960 = vadd.f32 %v1931, %v1959
      %1961 = vmatmul.bf16.gmra.mxu0 %v1824
      %v1962 = vpop.f32.mrf.mxu0
      %v1963 = vadd.f32 %v1934, %v1962
      %v1964 = vpop.f32.mrf.mxu0
      %v1965 = vadd.f32 %v1936, %v1964
      %1966 = vmatmul.bf16.gmra.mxu0 %v1827
      %v1967 = vpop.f32.mrf.mxu0
      %v1968 = vadd.f32 %v1939, %v1967
      %v1969 = vpop.f32.mrf.mxu0
      %v1970 = vadd.f32 %v1941, %v1969
      %1971 = vmatmul.bf16.gmra.mxu0 %v1830
      %v1972 = vpop.f32.mrf.mxu0
      %v1973 = vadd.f32 %v1944, %v1972
      %v1974 = vpop.f32.mrf.mxu0
      %v1975 = vadd.f32 %v1946, %v1974
      %1976 = vdwg.mxu0
      %v1977 = vld [vmem:[%s5] sm:$0x1]
      %v1979 = vperm.slane %v1977, 0
      %v1981 = vmul.f32 %v1958, %v1979
      %v1982 = vmul.f32 %v1960, %v1979
      %v1983 = vmul.f32 %v1963, %v1979
      %v1984 = vmul.f32 %v1965, %v1979
      %v1985 = vmul.f32 %v1968, %v1979
      %v1986 = vmul.f32 %v1970, %v1979
      %v1987 = vmul.f32 %v1973, %v1979
      %v1988 = vmul.f32 %v1975, %v1979
      %v1989 = vld [vmem:[%s6] sm:$0x1]
      %v1991 = vperm.slane %v1989, 0
      %v1993 = vadd.f32 %v1981, %v1991
      %v1994 = vadd.f32 %v1982, %v1991
      %v1995 = vadd.f32 %v1983, %v1991
      %v1996 = vadd.f32 %v1984, %v1991
      %v1997 = vadd.f32 %v1985, %v1991
      %v1998 = vadd.f32 %v1986, %v1991
      %v1999 = vadd.f32 %v1987, %v1991
      %v2000 = vadd.f32 %v1988, %v1991
      %v2001 = vmax.f32 %v1993, 0.0
      %v2002 = vmax.f32 %v1994, 0.0
      %v2003 = vmax.f32 %v1995, 0.0
      %v2004 = vmax.f32 %v1996, 0.0
      %v2005 = vmax.f32 %v1997, 0.0
      %v2006 = vmax.f32 %v1998, 0.0
      %v2007 = vmax.f32 %v1999, 0.0
      %v2008 = vmax.f32 %v2000, 0.0
      %v2009 = vpack.c.bf16 %v2002, %v2001
      %v2010 = vpack.c.bf16 %v2004, %v2003
      %v2011 = vpack.c.bf16 %v2006, %v2005
      %v2012 = vpack.c.bf16 %v2008, %v2007
      %v2013 = vld [vmem:[%s7] sm:$0xff]
      %v2014 = vld [vmem:[%s7 + $0x8] sm:$0xff]
      %v2015 = vld [vmem:[%s7 + $0x10] sm:$0xff]
      %v2016 = vld [vmem:[%s7 + $0x18] sm:$0xff]
      %v2017 = vld [vmem:[%s7 + $0x20] sm:$0xff]
      %v2018 = vld [vmem:[%s7 + $0x28] sm:$0xff]
      %v2019 = vld [vmem:[%s7 + $0x30] sm:$0xff]
      %v2020 = vld [vmem:[%s7 + $0x38] sm:$0xff]
      %v2029 = vunpack.c.l.b16 %v2013
      %v2030 = vunpack.c.h.b16 %v2013
      %v2031 = vunpack.c.l.b16 %v2014
      %v2032 = vunpack.c.h.b16 %v2014
      %v2033 = vunpack.c.l.b16 %v2015
      %v2034 = vunpack.c.h.b16 %v2015
      %v2035 = vunpack.c.l.b16 %v2016
      %v2036 = vunpack.c.h.b16 %v2016
      %v2037 = vunpack.c.l.b16 %v2017
      %v2038 = vunpack.c.h.b16 %v2017
      %v2039 = vunpack.c.l.b16 %v2018
      %v2040 = vunpack.c.h.b16 %v2018
      %v2041 = vunpack.c.l.b16 %v2019
      %v2042 = vunpack.c.h.b16 %v2019
      %v2043 = vunpack.c.l.b16 %v2020
      %v2044 = vunpack.c.h.b16 %v2020
      %v2045 = vpack.c.b16 %v2031, %v2029
      %v2046 = vpack.c.b16 %v2032, %v2030
      %v2047 = vpack.c.b16 %v2035, %v2033
      %v2048 = vpack.c.b16 %v2036, %v2034
      %v2049 = vpack.c.b16 %v2039, %v2037
      %v2050 = vpack.c.b16 %v2040, %v2038
      %v2051 = vpack.c.b16 %v2043, %v2041
      %v2052 = vpack.c.b16 %v2044, %v2042
      %v2062 = vsel %vm1260, %v2009, 0
      %v2065 = vsel %vm1260, %v2010, 0
      %v2068 = vsel %vm1260, %v2011, 0
      %v2071 = vsel %vm1260, %v2012, 0
      %2073 = vmatpush.bf16.msra.mxu0 0
      %2074 = vmatpush.bf16.msra.mxu0 0
      %2075 = vmatpush.bf16.msra.mxu0 0
      %2076 = vmatpush.bf16.msra.mxu0 0
      %2077 = vmatpush.bf16.msra.mxu0 %v2051
      %2078 = vmatpush.bf16.msra.mxu0 %v2049
      %2079 = vmatpush.bf16.msra.mxu0 %v2047
      %2080 = vmatpush.bf16.msra.mxu0 %v2045
      %2081 = vmatmul.bf16.gmra.mxu0 %v2062
      %v2082 = vpop.f32.mrf.mxu0
      %v2083 = vadd.f32 0.0, %v2082
      %v2084 = vpop.f32.mrf.mxu0
      %v2085 = vadd.f32 0.0, %v2084
      %2086 = vmatmul.bf16.gmra.mxu0 %v2065
      %v2087 = vpop.f32.mrf.mxu0
      %v2088 = vadd.f32 0.0, %v2087
      %v2089 = vpop.f32.mrf.mxu0
      %v2090 = vadd.f32 0.0, %v2089
      %2091 = vmatmul.bf16.gmra.mxu0 %v2068
      %v2092 = vpop.f32.mrf.mxu0
      %v2093 = vadd.f32 0.0, %v2092
      %v2094 = vpop.f32.mrf.mxu0
      %v2095 = vadd.f32 0.0, %v2094
      %2096 = vmatmul.bf16.gmra.mxu0 %v2071
      %v2097 = vpop.f32.mrf.mxu0
      %v2098 = vadd.f32 0.0, %v2097
      %v2099 = vpop.f32.mrf.mxu0
      %v2100 = vadd.f32 0.0, %v2099
      %2101 = vdwg.mxu0
      %2102 = vmatpush.bf16.msra.mxu0 0
      %2103 = vmatpush.bf16.msra.mxu0 0
      %2104 = vmatpush.bf16.msra.mxu0 0
      %2105 = vmatpush.bf16.msra.mxu0 0
      %2106 = vmatpush.bf16.msra.mxu0 %v2052
      %2107 = vmatpush.bf16.msra.mxu0 %v2050
      %2108 = vmatpush.bf16.msra.mxu0 %v2048
      %2109 = vmatpush.bf16.msra.mxu0 %v2046
      %2110 = vmatmul.bf16.gmra.mxu0 %v2062
      %v2111 = vpop.f32.mrf.mxu0
      %v2112 = vadd.f32 0.0, %v2111
      %v2113 = vpop.f32.mrf.mxu0
      %v2114 = vadd.f32 0.0, %v2113
      %2115 = vmatmul.bf16.gmra.mxu0 %v2065
      %v2116 = vpop.f32.mrf.mxu0
      %v2117 = vadd.f32 0.0, %v2116
      %v2118 = vpop.f32.mrf.mxu0
      %v2119 = vadd.f32 0.0, %v2118
      %2120 = vmatmul.bf16.gmra.mxu0 %v2068
      %v2121 = vpop.f32.mrf.mxu0
      %v2122 = vadd.f32 0.0, %v2121
      %v2123 = vpop.f32.mrf.mxu0
      %v2124 = vadd.f32 0.0, %v2123
      %2125 = vmatmul.bf16.gmra.mxu0 %v2071
      %v2126 = vpop.f32.mrf.mxu0
      %v2127 = vadd.f32 0.0, %v2126
      %v2128 = vpop.f32.mrf.mxu0
      %v2129 = vadd.f32 0.0, %v2128
      %2130 = vdwg.mxu0
      %v2131 = vld [vmem:[%s8] sm:$0x3]
      %v2133 = vperm.slane %v2131, 0
      %v2134 = vperm.slane %v2131, 1
      %v2137 = vmul.f32 %v2083, %v2133
      %v2138 = vmul.f32 %v2112, %v2134
      %v2139 = vmul.f32 %v2085, %v2133
      %v2140 = vmul.f32 %v2114, %v2134
      %v2141 = vmul.f32 %v2088, %v2133
      %v2142 = vmul.f32 %v2117, %v2134
      %v2143 = vmul.f32 %v2090, %v2133
      %v2144 = vmul.f32 %v2119, %v2134
      %v2145 = vmul.f32 %v2093, %v2133
      %v2146 = vmul.f32 %v2122, %v2134
      %v2147 = vmul.f32 %v2095, %v2133
      %v2148 = vmul.f32 %v2124, %v2134
      %v2149 = vmul.f32 %v2098, %v2133
      %v2150 = vmul.f32 %v2127, %v2134
      %v2151 = vmul.f32 %v2100, %v2133
      %v2152 = vmul.f32 %v2129, %v2134
      %v2153 = vld [vmem:[%s9] sm:$0x3]
      %v2155 = vperm.slane %v2153, 0
      %v2156 = vperm.slane %v2153, 1
      %v2159 = vadd.f32 %v2137, %v2155
      %v2160 = vadd.f32 %v2138, %v2156
      %v2161 = vadd.f32 %v2139, %v2155
      %v2162 = vadd.f32 %v2140, %v2156
      %v2163 = vadd.f32 %v2141, %v2155
      %v2164 = vadd.f32 %v2142, %v2156
      %v2165 = vadd.f32 %v2143, %v2155
      %v2166 = vadd.f32 %v2144, %v2156
      %v2167 = vadd.f32 %v2145, %v2155
      %v2168 = vadd.f32 %v2146, %v2156
      %v2169 = vadd.f32 %v2147, %v2155
      %v2170 = vadd.f32 %v2148, %v2156
      %v2171 = vadd.f32 %v2149, %v2155
      %v2172 = vadd.f32 %v2150, %v2156
      %v2173 = vadd.f32 %v2151, %v2155
      %v2174 = vadd.f32 %v2152, %v2156
      %v2175 = vunpack.c.l.bf16 %v363
      %v2176 = vunpack.c.h.bf16 %v363
      %v2177 = vunpack.c.l.bf16 %v364
      %v2178 = vunpack.c.h.bf16 %v364
      %v2179 = vunpack.c.l.bf16 %v365
      %v2180 = vunpack.c.h.bf16 %v365
      %v2181 = vunpack.c.l.bf16 %v366
      %v2182 = vunpack.c.h.bf16 %v366
      %v2183 = vunpack.c.l.bf16 %v367
      %v2184 = vunpack.c.h.bf16 %v367
      %v2185 = vunpack.c.l.bf16 %v368
      %v2186 = vunpack.c.h.bf16 %v368
      %v2187 = vunpack.c.l.bf16 %v369
      %v2188 = vunpack.c.h.bf16 %v369
      %v2189 = vunpack.c.l.bf16 %v370
      %v2190 = vunpack.c.h.bf16 %v370
      %v2191 = vadd.f32 %v2159, %v2175
      %v2192 = vadd.f32 %v2160, %v2176
      %v2193 = vadd.f32 %v2161, %v2177
      %v2194 = vadd.f32 %v2162, %v2178
      %v2195 = vadd.f32 %v2163, %v2179
      %v2196 = vadd.f32 %v2164, %v2180
      %v2197 = vadd.f32 %v2165, %v2181
      %v2198 = vadd.f32 %v2166, %v2182
      %v2199 = vadd.f32 %v2167, %v2183
      %v2200 = vadd.f32 %v2168, %v2184
      %v2201 = vadd.f32 %v2169, %v2185
      %v2202 = vadd.f32 %v2170, %v2186
      %v2203 = vadd.f32 %v2171, %v2187
      %v2204 = vadd.f32 %v2172, %v2188
      %v2205 = vadd.f32 %v2173, %v2189
      %v2206 = vadd.f32 %v2174, %v2190
      %v2207 = vmax.f32 %v2191, 0.0
      %v2208 = vmax.f32 %v2192, 0.0
      %v2209 = vmax.f32 %v2193, 0.0
      %v2210 = vmax.f32 %v2194, 0.0
      %v2211 = vmax.f32 %v2195, 0.0
      %v2212 = vmax.f32 %v2196, 0.0
      %v2213 = vmax.f32 %v2197, 0.0
      %v2214 = vmax.f32 %v2198, 0.0
      %v2215 = vmax.f32 %v2199, 0.0
      %v2216 = vmax.f32 %v2200, 0.0
      %v2217 = vmax.f32 %v2201, 0.0
      %v2218 = vmax.f32 %v2202, 0.0
      %v2219 = vmax.f32 %v2203, 0.0
      %v2220 = vmax.f32 %v2204, 0.0
      %v2221 = vmax.f32 %v2205, 0.0
      %v2222 = vmax.f32 %v2206, 0.0
      %v2223 = vpack.c.bf16 %v2208, %v2207
      %v2224 = vpack.c.bf16 %v2210, %v2209
      %v2225 = vpack.c.bf16 %v2212, %v2211
      %v2226 = vpack.c.bf16 %v2214, %v2213
      %v2227 = vpack.c.bf16 %v2216, %v2215
      %v2228 = vpack.c.bf16 %v2218, %v2217
      %v2229 = vpack.c.bf16 %v2220, %v2219
      %v2230 = vpack.c.bf16 %v2222, %v2221
      %2231 = vst [vmem:[%s359] sm:$0xff] %v2223
      %2232 = vst [vmem:[%s359 + $0x8] sm:$0xff] %v2224
      %2233 = vst [vmem:[%s359 + $0x10] sm:$0xff] %v2225
      %2234 = vst [vmem:[%s359 + $0x18] sm:$0xff] %v2226
      %2235 = vst [vmem:[%s359 + $0x20] sm:$0xff] %v2227
      %2236 = vst [vmem:[%s359 + $0x28] sm:$0xff] %v2228
      %2237 = vst [vmem:[%s359 + $0x30] sm:$0xff] %v2229
      %2238 = vst [vmem:[%s359 + $0x38] sm:$0xff] %v2230
      %p2239 = scmp.lt.s32.totalorder %s21, 1
      %s2240 = scalar_select %p2239, %s21, 1
      %s2241 = smul.addr %s2240, 16
      %s2242 = smul.addr %s2241, 4
      %s2243 = scalar_lea.vmem %s10, %s2242
      // Predicated region
      $region61: #{visible_module_forward.8} parent=59 // pred_check
        %p2244 = pneg %p254
      $region62: #{visible_module_forward.8} parent=59 // pred_check_branch
        %2246 = sbr.rel (%p2244) target = $region64
      $region63: #{visible_module_forward.8} parent=59 // pred_region
        _
      $region64: #{visible_module_forward.8} parent=59 // pred_fallthru
        _
    $region60: #{visible_module_forward.8} parent=5 // pred_fallthru
      _
    %p2247 = scmp.le.s32.totalorder 2, %s16
    // Predicated region
    $region65: #{visible_module_forward.8} parent=5 // pred_check
      %p2248 = pneg %p2247
    $region66: #{visible_module_forward.8} parent=5 // pred_check_branch
      %2250 = sbr.rel (%p2248) target = $region68
    $region67: #{visible_module_forward.8} parent=5 // pred_region
      %s2251 = ssub.s32 %s16, 2
      // Predicated region
      $region69: #{visible_module_forward.8} parent=67 // pred_check
        %p2252 = pneg %p260
      $region70: #{visible_module_forward.8} parent=67 // pred_check_branch
        %2254 = sbr.rel (%p2252) target = $region72
      $region71: #{visible_module_forward.8} parent=67 // pred_region
        %p2255 = scmp.lt.s32.totalorder %s22, 1
        %s2256 = scalar_select %p2255, %s22, 1
        %s2257 = smul.addr %s2256, 16
        %s2258 = smul.addr %s2257, 4
        %s2259 = scalar_lea.vmem %s10, %s2258
      $region72: #{visible_module_forward.8} parent=67 // pred_fallthru
        _
    $region68: #{visible_module_forward.8} parent=5 // pred_fallthru
      _
  $region6: #{visible_module_forward.8} parent=0 // loop_footer
    %s20 = sadd.s32 1, %s16
  $region7: #{visible_module_forward.8} parent=0 // loop_footer_branch
    %15 = sbr.rel target = $region3
  $region8: #{visible_module_forward.8} parent=0 // loop_exit
    _

</llo_original>
